<compile_context>
chip_gen: v6e
topology: v6e:2x2x1
jax: 0.10.0
libtpu: 0.0.40
codegen_flags: <defaults>
</compile_context>

<pallas_src>
import functools

import jax
import jax.numpy as jnp
from jax.experimental import pallas as pl
from jax.experimental.pallas import tpu as pltpu


# -----------------------------------------------------------------------------
# Single fused kernel: all layers + folded fc head.
# -----------------------------------------------------------------------------
def _fused_bilstm_kernel(*refs, hidden, T, B, num_layers, unroll):
    H = hidden
    L = num_layers

    x_ref = refs[0]
    layer_refs = [(refs[1 + 3 * l], refs[2 + 3 * l], refs[3 + 3 * l]) for l in range(L)]
    w_head_ref = refs[1 + 3 * L]
    b_head_ref = refs[2 + 3 * L]
    out_ref = refs[3 + 3 * L]
    xg_sc = refs[4 + 3 * L]    # (T*B, 8H) per-layer precomputed input gates
    seq_sc = refs[5 + 3 * L]   # (T*B, 2H) inter-layer hidden sequence (VMEM only)

    def project_inputs(in_ref, wih_ref, b_ref):
        # Hoisted input projection: whole sequence, both directions, one MXU matmul.
        # Column layout: [fwd i,f,o,g | bwd i,f,o,g], each gate block H lanes wide.
        xg_sc[...] = (
            jnp.dot(in_ref[...], wih_ref[...], preferred_element_type=jnp.float32)
            + b_ref[...]
        )

    def lstm_cell(g, c_prev):
        # g: (B, 4H) pre-activations in [i, f, o, g] order; c_prev: (B, H).
        s = jax.nn.sigmoid(g[:, 0:3 * H])       # one EUP push covers i, f, o
        gg = jnp.tanh(g[:, 3 * H:4 * H])        # one EUP push for g
        c = s[:, H:2 * H] * c_prev + s[:, 0:H] * gg
        h = s[:, 2 * H:3 * H] * jnp.tanh(c)
        return h, c

    def run_fused_layer(in_ref, wih_ref, whh_ref, b_ref):
        # Intermediate layer: fwd handles time t, bwd handles time T-1-t in the same
        # step; the full (T*B, 2H) hidden sequence is written into seq_sc.
        project_inputs(in_ref, wih_ref, b_ref)
        whh = whh_ref[...]              # (2H, 4H): rows [0:H]=W_hh_f^T, [H:2H]=W_hh_b^T
        whh_f = whh[0:H]
        whh_b = whh[H:2 * H]

        def step(t, carry):
            h_f, h_b, c_f, c_b = carry  # each (B, H), loop-carried (no VMEM round-trip)
            tb = T - 1 - t
            rec_f = jnp.dot(h_f, whh_f, preferred_element_type=jnp.float32)
            rec_b = jnp.dot(h_b, whh_b, preferred_element_type=jnp.float32)
            xg_t = xg_sc[pl.ds(t * B, B), :]
            xg_tb = xg_sc[pl.ds(tb * B, B), :]
            h_f, c_f = lstm_cell(xg_t[:, 0:4 * H] + rec_f, c_f)
            h_b, c_b = lstm_cell(xg_tb[:, 4 * H:8 * H] + rec_b, c_b)
            seq_sc[pl.ds(t * B, B), 0:H] = h_f           # fwd hidden at time t
            seq_sc[pl.ds(tb * B, B), H:2 * H] = h_b      # bwd hidden at time T-1-t
            return h_f, h_b, c_f, c_b

        z = jnp.zeros((B, H), jnp.float32)
        jax.lax.fori_loop(0, T, step, (z, z, z, z), unroll=unroll)

    # ---- intermediate layers (all but the last) ----
    cur = x_ref
    for l in range(L - 1):
        run_fused_layer(cur, *layer_refs[l])
        cur = seq_sc

    # ---- last layer: only out[:, -1, :] is needed ----
    wih_ref, whh_ref, b_ref = layer_refs[L - 1]
    project_inputs(cur, wih_ref, b_ref)
    whh_f = whh_ref[...][0:H]           # backward recurrence of the last layer unused

    def fwd_step(t, carry):
        h, c = carry
        rec = jnp.dot(h, whh_f, preferred_element_type=jnp.float32)
        xg_t = xg_sc[pl.ds(t * B, B), :]
        return lstm_cell(xg_t[:, 0:4 * H] + rec, c)

    z = jnp.zeros((B, H), jnp.float32)
    h_fwd, _ = jax.lax.fori_loop(0, T, fwd_step, (z, z), unroll=unroll)

    # Backward hidden at output time T-1 is the bwd direction's FIRST step from the
    # zero state -> a single cell with no recurrent matmul.
    xg_last = xg_sc[pl.ds((T - 1) * B, B), :]
    h_bwd, _ = lstm_cell(xg_last[:, 4 * H:8 * H], z)

    # Folded (activation-free) fc -> fc2 -> fc3 head: one (B, 2H) @ (2H, C) matmul.
    last = jnp.concatenate([h_fwd, h_bwd], axis=-1)      # == out[:, -1, :]
    out_ref[...] = (
        jnp.dot(last, w_head_ref[...], preferred_element_type=jnp.float32)
        + b_head_ref[...]
    )


# -----------------------------------------------------------------------------
# One-time weight preparation (pure JAX, hoisted out of the forward path).
# -----------------------------------------------------------------------------
def _reorder_ifog(w, H):
    # PyTorch gate order along axis 0 is [i, f, g, o]; kernel uses [i, f, o, g].
    return jnp.concatenate([w[0:H], w[H:2 * H], w[3 * H:4 * H], w[2 * H:3 * H]], axis=0)


def prepare_params(params, hidden, num_layers):
    H = hidden
    hi = jax.lax.Precision.HIGHEST
    layers = []
    for l in range(num_layers):
        p = params["lstm"][l]
        wih_f = _reorder_ifog(p["w_ih_f"], H)                       # (4H, D)
        wih_b = _reorder_ifog(p["w_ih_b"], H)
        whh_f = _reorder_ifog(p["w_hh_f"], H)                       # (4H, H)
        whh_b = _reorder_ifog(p["w_hh_b"], H)
        b_f = _reorder_ifog(p["b_ih_f"] + p["b_hh_f"], H)           # (4H,)
        b_b = _reorder_ifog(p["b_ih_b"] + p["b_hh_b"], H)
        wih = jnp.concatenate([wih_f.T, wih_b.T], axis=1)           # (D, 8H)
        whh = jnp.concatenate([whh_f.T, whh_b.T], axis=0)           # (2H, 4H)
        bias = jnp.concatenate([b_f, b_b]).reshape(1, 8 * H)        # (1, 8H)
        layers.append((wih, whh, bias))

    # Fold fc -> fc2 -> fc3 (no nonlinearity between them) into one weight + bias.
    (w1, b1), (w2, b2), (w3, b3) = params["fc1"], params["fc2"], params["fc3"]
    w_head = jnp.dot(jnp.dot(w1.T, w2.T, precision=hi), w3.T, precision=hi)  # (2H, C)
    b_head = (jnp.dot(jnp.dot(b1, w2.T, precision=hi), w3.T, precision=hi)
              + jnp.dot(b2, w3.T, precision=hi) + b3).reshape(1, -1)         # (1, C)
    return {"layers": layers, "head": (w_head, b_head)}


# -----------------------------------------------------------------------------
# Forward: exactly ONE pallas_call.
# -----------------------------------------------------------------------------
def bi_lstm_forward(x_btd, prepped, hidden, num_layers, num_classes):
    B, T, D = x_btd.shape
    # batch_first -> time-major, flattened to (T*B, D): row t*B + b = (time t, batch b)
    x2d = jnp.transpose(x_btd, (1, 0, 2)).reshape(T * B, D)

    args = [x2d]
    for wih, whh, bias in prepped["layers"]:
        args += [wih, whh, bias]
    args += list(prepped["head"])

    kernel = functools.partial(
        _fused_bilstm_kernel, hidden=hidden, T=T, B=B, num_layers=num_layers,
        unroll=(True if T <= 16 else 8))

    return pl.pallas_call(
        kernel,
        out_shape=jax.ShapeDtypeStruct((B, num_classes), jnp.float32),
        scratch_shapes=[
            pltpu.VMEM((T * B, 8 * hidden), jnp.float32),   # per-layer input gates
            pltpu.VMEM((T * B, 2 * hidden), jnp.float32),   # inter-layer hidden seq
        ],
    )(*args)


# -----------------------------------------------------------------------------
# Pure-JAX reference (correctness check only).
# -----------------------------------------------------------------------------
def _ref_lstm_dir(x_tbd, w_ih, w_hh, b_ih, b_hh, hidden):
    B = x_tbd.shape[1]

    def step(carry, x_t):
        h, c = carry
        gates = x_t @ w_ih.T + h @ w_hh.T + b_ih + b_hh
        i, f, g, o = jnp.split(gates, 4, axis=-1)
        i, f, o = jax.nn.sigmoid(i), jax.nn.sigmoid(f), jax.nn.sigmoid(o)
        g = jnp.tanh(g)
        c = f * c + i * g
        h = o * jnp.tanh(c)
        return (h, c), h

    init = (jnp.zeros((B, hidden), jnp.float32), jnp.zeros((B, hidden), jnp.float32))
    _, hs = jax.lax.scan(step, init, x_tbd)
    return hs


def bi_lstm_reference(x_btd, params, hidden, num_layers):
    x = jnp.transpose(x_btd, (1, 0, 2))
    for layer in range(num_layers):
        p = params["lstm"][layer]
        h_fwd = _ref_lstm_dir(x, p["w_ih_f"], p["w_hh_f"], p["b_ih_f"], p["b_hh_f"], hidden)
        h_bwd = _ref_lstm_dir(x[::-1], p["w_ih_b"], p["w_hh_b"], p["b_ih_b"], p["b_hh_b"],
                              hidden)[::-1]
        x = jnp.concatenate([h_fwd, h_bwd], axis=-1)
    out = x[-1]
    (w1, b1), (w2, b2), (w3, b3) = params["fc1"], params["fc2"], params["fc3"]
    out = out @ w1.T + b1
    out = out @ w2.T + b2
    out = out @ w3.T + b3
    return out


# -----------------------------------------------------------------------------
# Deterministic parameter init (PyTorch-style uniform, synthetic weights).
# -----------------------------------------------------------------------------
def init_params(key, input_size, hidden, num_layers, num_classes, fully1=150, fully2=12):
    params = {"lstm": []}
    k = 1.0 / jnp.sqrt(hidden)

    def uni(key, shape, bound):
        return jax.random.uniform(key, shape, jnp.float32, -bound, bound)

    for layer in range(num_layers):
        d_in = input_size if layer == 0 else 2 * hidden
        keys = jax.random.split(key, 9)
        key = keys[0]
        params["lstm"].append({
            "w_ih_f": uni(keys[1], (4 * hidden, d_in), k),
            "w_hh_f": uni(keys[2], (4 * hidden, hidden), k),
            "b_ih_f": uni(keys[3], (4 * hidden,), k),
            "b_hh_f": uni(keys[4], (4 * hidden,), k),
            "w_ih_b": uni(keys[5], (4 * hidden, d_in), k),
            "w_hh_b": uni(keys[6], (4 * hidden, hidden), k),
            "b_ih_b": uni(keys[7], (4 * hidden,), k),
            "b_hh_b": uni(keys[8], (4 * hidden,), k),
        })

    keys = jax.random.split(key, 7)
    params["fc1"] = (uni(keys[1], (fully1, 2 * hidden), 1.0 / jnp.sqrt(2 * hidden)),
                     uni(keys[2], (fully1,), 1.0 / jnp.sqrt(2 * hidden)))
    params["fc2"] = (uni(keys[3], (fully2, fully1), 1.0 / jnp.sqrt(fully1)),
                     uni(keys[4], (fully2,), 1.0 / jnp.sqrt(fully1)))
    params["fc3"] = (uni(keys[5], (num_classes, fully2), 1.0 / jnp.sqrt(fully2)),
                     uni(keys[6], (num_classes,), 1.0 / jnp.sqrt(fully2)))
    return params


if __name__ == "__main__":
    input_size = 16
    hidden_size = 32
    num_layers = 2
    num_classes = 5
    batch = 2
    seq_len = 8

    key = jax.random.PRNGKey(0)
    k_x, k_p = jax.random.split(key)
    x = jax.random.normal(k_x, (batch, seq_len, input_size), jnp.float32)
    params = init_params(k_p, input_size, hidden_size, num_layers, num_classes)

    # One-time weight fusion / gate permutation / head folding (hoisted out of forward).
    prepped = prepare_params(params, hidden_size, num_layers)

    out = bi_lstm_forward(x, prepped, hidden_size, num_layers, num_classes)
    out = jax.block_until_ready(out)

    ref = jax.block_until_ready(bi_lstm_reference(x, params, hidden_size, num_layers))
    assert out.shape == (batch, num_classes)
    assert jnp.allclose(out, ref, atol=1e-4, rtol=1e-4), (out, ref)

    print("KERNEL_OK")
</pallas_src>

<mosaic_0001>
module attributes {stable_mosaic.version = 11 : i64} {
  func.func @_fused_bilstm_kernel(%arg0: memref<16x16xf32, #tpu.memory_space<vmem>>, %arg1: memref<16x256xf32, #tpu.memory_space<vmem>>, %arg2: memref<64x128xf32, #tpu.memory_space<vmem>>, %arg3: memref<1x256xf32, #tpu.memory_space<vmem>>, %arg4: memref<64x256xf32, #tpu.memory_space<vmem>>, %arg5: memref<64x128xf32, #tpu.memory_space<vmem>>, %arg6: memref<1x256xf32, #tpu.memory_space<vmem>>, %arg7: memref<64x5xf32, #tpu.memory_space<vmem>>, %arg8: memref<1x5xf32, #tpu.memory_space<vmem>>, %arg9: memref<2x5xf32, #tpu.memory_space<vmem>>, %arg10: memref<16x256xf32, #tpu.memory_space<vmem>>, %arg11: memref<16x64xf32, #tpu.memory_space<vmem>>) attributes {dimension_semantics = [], scalar_prefetch = 0 : i64, scratch_operands = 2 : i64, tpu.core_type = #tpu.core_type<tc>} {
    %c0 = arith.constant 0 : index
    %c0_0 = arith.constant 0 : index
    %0 = vector.load %arg0[%c0, %c0_0] : memref<16x16xf32, #tpu.memory_space<vmem>>, vector<16x16xf32>
    %c0_1 = arith.constant 0 : index
    %c0_2 = arith.constant 0 : index
    %1 = vector.load %arg1[%c0_1, %c0_2] : memref<16x256xf32, #tpu.memory_space<vmem>>, vector<16x256xf32>
    %cst = arith.constant dense<0.000000e+00> : vector<16x256xf32>
    %2 = tpu.matmul %0, %1, %cst {dimension_numbers = #tpu.dot_dimension_numbers<[1], [0], [0], [1], [0, 0, 1, 1], [], []>} : vector<16x16xf32>, vector<16x256xf32>, vector<16x256xf32> -> vector<16x256xf32>
    %c0_3 = arith.constant 0 : index
    %c0_4 = arith.constant 0 : index
    %3 = vector.load %arg3[%c0_3, %c0_4] : memref<1x256xf32, #tpu.memory_space<vmem>>, vector<1x256xf32>
    %4 = vector.broadcast %3 : vector<1x256xf32> to vector<16x256xf32>
    %5 = arith.addf %2, %4 : vector<16x256xf32>
    %c0_5 = arith.constant 0 : index
    %c0_6 = arith.constant 0 : index
    %6 = vector.load %arg10[%c0_5, %c0_6] : memref<16x256xf32, #tpu.memory_space<vmem>>, vector<16x256xf32>
    tpu.vector_store %arg10[%c0_5, %c0_6], %5 {strides = array<i32>} : memref<16x256xf32, #tpu.memory_space<vmem>>, vector<16x256xf32>,
    %c0_7 = arith.constant 0 : index
    %c0_8 = arith.constant 0 : index
    %7 = vector.load %arg2[%c0_7, %c0_8] : memref<64x128xf32, #tpu.memory_space<vmem>>, vector<64x128xf32>
    %8 = vector.extract_strided_slice %7 {offsets = [0, 0], sizes = [32, 128], strides = [1, 1]} : vector<64x128xf32> to vector<32x128xf32>
    %9 = vector.extract_strided_slice %7 {offsets = [32, 0], sizes = [32, 128], strides = [1, 1]} : vector<64x128xf32> to vector<32x128xf32>
    %cst_9 = arith.constant 0.000000e+00 : f32
    %10 = vector.broadcast %cst_9 : f32 to vector<2x32xf32>
    %c0_i32 = arith.constant 0 : i32
    %c7_i32 = arith.constant 7 : i32
    %11 = arith.subi %c7_i32, %c0_i32 : i32
    %cst_10 = arith.constant dense<0.000000e+00> : vector<2x128xf32>
    %12 = tpu.matmul %10, %8, %cst_10 {dimension_numbers = #tpu.dot_dimension_numbers<[1], [0], [0], [1], [0, 0, 1, 1], [], []>} : vector<2x32xf32>, vector<32x128xf32>, vector<2x128xf32> -> vector<2x128xf32>
    %cst_11 = arith.constant dense<0.000000e+00> : vector<2x128xf32>
    %13 = tpu.matmul %10, %9, %cst_11 {dimension_numbers = #tpu.dot_dimension_numbers<[1], [0], [0], [1], [0, 0, 1, 1], [], []>} : vector<2x32xf32>, vector<32x128xf32>, vector<2x128xf32> -> vector<2x128xf32>
    %c2_i32 = arith.constant 2 : i32
    %14 = arith.muli %c0_i32, %c2_i32 : i32
    %15 = arith.index_cast %14 : i32 to index
    %c0_12 = arith.constant 0 : index
    %16 = vector.load %arg10[%15, %c0_12] : memref<16x256xf32, #tpu.memory_space<vmem>>, vector<2x256xf32>
    %c2_i32_13 = arith.constant 2 : i32
    %17 = arith.muli %11, %c2_i32_13 : i32
    %18 = arith.index_cast %17 : i32 to index
    %c0_14 = arith.constant 0 : index
    %19 = vector.load %arg10[%18, %c0_14] : memref<16x256xf32, #tpu.memory_space<vmem>>, vector<2x256xf32>
    %20 = vector.extract_strided_slice %16 {offsets = [0, 0], sizes = [2, 128], strides = [1, 1]} : vector<2x256xf32> to vector<2x128xf32>
    %21 = arith.addf %20, %12 : vector<2x128xf32>
    %22 = vector.extract_strided_slice %21 {offsets = [0, 0], sizes = [2, 96], strides = [1, 1]} : vector<2x128xf32> to vector<2x96xf32>
    %23 = arith.negf %22 : vector<2x96xf32>
    %24 = math.exp %23 : vector<2x96xf32>
    %cst_15 = arith.constant 1.000000e+00 : f32
    %25 = vector.broadcast %cst_15 : f32 to vector<2x96xf32>
    %26 = arith.addf %25, %24 : vector<2x96xf32>
    %27 = arith.divf %25, %26 : vector<2x96xf32>
    %28 = vector.extract_strided_slice %21 {offsets = [0, 96], sizes = [2, 32], strides = [1, 1]} : vector<2x128xf32> to vector<2x32xf32>
    %29 = math.tanh %28 : vector<2x32xf32>
    %30 = vector.extract_strided_slice %27 {offsets = [0, 32], sizes = [2, 32], strides = [1, 1]} : vector<2x96xf32> to vector<2x32xf32>
    %31 = arith.mulf %30, %10 : vector<2x32xf32>
    %32 = vector.extract_strided_slice %27 {offsets = [0, 0], sizes = [2, 32], strides = [1, 1]} : vector<2x96xf32> to vector<2x32xf32>
    %33 = arith.mulf %32, %29 : vector<2x32xf32>
    %34 = arith.addf %31, %33 : vector<2x32xf32>
    %35 = vector.extract_strided_slice %27 {offsets = [0, 64], sizes = [2, 32], strides = [1, 1]} : vector<2x96xf32> to vector<2x32xf32>
    %36 = math.tanh %34 : vector<2x32xf32>
    %37 = arith.mulf %35, %36 : vector<2x32xf32>
    %38 = vector.extract_strided_slice %19 {offsets = [0, 128], sizes = [2, 128], strides = [1, 1]} : vector<2x256xf32> to vector<2x128xf32>
    %39 = arith.addf %38, %13 : vector<2x128xf32>
    %40 = vector.extract_strided_slice %39 {offsets = [0, 0], sizes = [2, 96], strides = [1, 1]} : vector<2x128xf32> to vector<2x96xf32>
    %41 = arith.negf %40 : vector<2x96xf32>
    %42 = math.exp %41 : vector<2x96xf32>
    %cst_16 = arith.constant 1.000000e+00 : f32
    %43 = vector.broadcast %cst_16 : f32 to vector<2x96xf32>
    %44 = arith.addf %43, %42 : vector<2x96xf32>
    %45 = arith.divf %43, %44 : vector<2x96xf32>
    %46 = vector.extract_strided_slice %39 {offsets = [0, 96], sizes = [2, 32], strides = [1, 1]} : vector<2x128xf32> to vector<2x32xf32>
    %47 = math.tanh %46 : vector<2x32xf32>
    %48 = vector.extract_strided_slice %45 {offsets = [0, 32], sizes = [2, 32], strides = [1, 1]} : vector<2x96xf32> to vector<2x32xf32>
    %49 = arith.mulf %48, %10 : vector<2x32xf32>
    %50 = vector.extract_strided_slice %45 {offsets = [0, 0], sizes = [2, 32], strides = [1, 1]} : vector<2x96xf32> to vector<2x32xf32>
    %51 = arith.mulf %50, %47 : vector<2x32xf32>
    %52 = arith.addf %49, %51 : vector<2x32xf32>
    %53 = vector.extract_strided_slice %45 {offsets = [0, 64], sizes = [2, 32], strides = [1, 1]} : vector<2x96xf32> to vector<2x32xf32>
    %54 = math.tanh %52 : vector<2x32xf32>
    %55 = arith.mulf %53, %54 : vector<2x32xf32>
    %c2_i32_17 = arith.constant 2 : i32
    %56 = arith.muli %c0_i32, %c2_i32_17 : i32
    %57 = arith.index_cast %56 : i32 to index
    %c0_18 = arith.constant 0 : index
    %58 = vector.load %arg11[%57, %c0_18] : memref<16x64xf32, #tpu.memory_space<vmem>>, vector<2x32xf32>
    tpu.vector_store %arg11[%57, %c0_18], %37 {strides = array<i32>} : memref<16x64xf32, #tpu.memory_space<vmem>>, vector<2x32xf32>,
    %c2_i32_19 = arith.constant 2 : i32
    %59 = arith.muli %11, %c2_i32_19 : i32
    %60 = arith.index_cast %59 : i32 to index
    %c32 = arith.constant 32 : index
    %61 = vector.load %arg11[%60, %c32] : memref<16x64xf32, #tpu.memory_space<vmem>>, vector<2x32xf32>
    tpu.vector_store %arg11[%60, %c32], %55 {strides = array<i32>} : memref<16x64xf32, #tpu.memory_space<vmem>>, vector<2x32xf32>,
    %c1_i32 = arith.constant 1 : i32
    %c7_i32_20 = arith.constant 7 : i32
    %62 = arith.subi %c7_i32_20, %c1_i32 : i32
    %cst_21 = arith.constant dense<0.000000e+00> : vector<2x128xf32>
    %63 = tpu.matmul %37, %8, %cst_21 {dimension_numbers = #tpu.dot_dimension_numbers<[1], [0], [0], [1], [0, 0, 1, 1], [], []>} : vector<2x32xf32>, vector<32x128xf32>, vector<2x128xf32> -> vector<2x128xf32>
    %cst_22 = arith.constant dense<0.000000e+00> : vector<2x128xf32>
    %64 = tpu.matmul %55, %9, %cst_22 {dimension_numbers = #tpu.dot_dimension_numbers<[1], [0], [0], [1], [0, 0, 1, 1], [], []>} : vector<2x32xf32>, vector<32x128xf32>, vector<2x128xf32> -> vector<2x128xf32>
    %c2_i32_23 = arith.constant 2 : i32
    %65 = arith.muli %c1_i32, %c2_i32_23 : i32
    %66 = arith.index_cast %65 : i32 to index
    %c0_24 = arith.constant 0 : index
    %67 = vector.load %arg10[%66, %c0_24] : memref<16x256xf32, #tpu.memory_space<vmem>>, vector<2x256xf32>
    %c2_i32_25 = arith.constant 2 : i32
    %68 = arith.muli %62, %c2_i32_25 : i32
    %69 = arith.index_cast %68 : i32 to index
    %c0_26 = arith.constant 0 : index
    %70 = vector.load %arg10[%69, %c0_26] : memref<16x256xf32, #tpu.memory_space<vmem>>, vector<2x256xf32>
    %71 = vector.extract_strided_slice %67 {offsets = [0, 0], sizes = [2, 128], strides = [1, 1]} : vector<2x256xf32> to vector<2x128xf32>
    %72 = arith.addf %71, %63 : vector<2x128xf32>
    %73 = vector.extract_strided_slice %72 {offsets = [0, 0], sizes = [2, 96], strides = [1, 1]} : vector<2x128xf32> to vector<2x96xf32>
    %74 = arith.negf %73 : vector<2x96xf32>
    %75 = math.exp %74 : vector<2x96xf32>
    %cst_27 = arith.constant 1.000000e+00 : f32
    %76 = vector.broadcast %cst_27 : f32 to vector<2x96xf32>
    %77 = arith.addf %76, %75 : vector<2x96xf32>
    %78 = arith.divf %76, %77 : vector<2x96xf32>
    %79 = vector.extract_strided_slice %72 {offsets = [0, 96], sizes = [2, 32], strides = [1, 1]} : vector<2x128xf32> to vector<2x32xf32>
    %80 = math.tanh %79 : vector<2x32xf32>
    %81 = vector.extract_strided_slice %78 {offsets = [0, 32], sizes = [2, 32], strides = [1, 1]} : vector<2x96xf32> to vector<2x32xf32>
    %82 = arith.mulf %81, %34 : vector<2x32xf32>
    %83 = vector.extract_strided_slice %78 {offsets = [0, 0], sizes = [2, 32], strides = [1, 1]} : vector<2x96xf32> to vector<2x32xf32>
    %84 = arith.mulf %83, %80 : vector<2x32xf32>
    %85 = arith.addf %82, %84 : vector<2x32xf32>
    %86 = vector.extract_strided_slice %78 {offsets = [0, 64], sizes = [2, 32], strides = [1, 1]} : vector<2x96xf32> to vector<2x32xf32>
    %87 = math.tanh %85 : vector<2x32xf32>
    %88 = arith.mulf %86, %87 : vector<2x32xf32>
    %89 = vector.extract_strided_slice %70 {offsets = [0, 128], sizes = [2, 128], strides = [1, 1]} : vector<2x256xf32> to vector<2x128xf32>
    %90 = arith.addf %89, %64 : vector<2x128xf32>
    %91 = vector.extract_strided_slice %90 {offsets = [0, 0], sizes = [2, 96], strides = [1, 1]} : vector<2x128xf32> to vector<2x96xf32>
    %92 = arith.negf %91 : vector<2x96xf32>
    %93 = math.exp %92 : vector<2x96xf32>
    %cst_28 = arith.constant 1.000000e+00 : f32
    %94 = vector.broadcast %cst_28 : f32 to vector<2x96xf32>
    %95 = arith.addf %94, %93 : vector<2x96xf32>
    %96 = arith.divf %94, %95 : vector<2x96xf32>
    %97 = vector.extract_strided_slice %90 {offsets = [0, 96], sizes = [2, 32], strides = [1, 1]} : vector<2x128xf32> to vector<2x32xf32>
    %98 = math.tanh %97 : vector<2x32xf32>
    %99 = vector.extract_strided_slice %96 {offsets = [0, 32], sizes = [2, 32], strides = [1, 1]} : vector<2x96xf32> to vector<2x32xf32>
    %100 = arith.mulf %99, %52 : vector<2x32xf32>
    %101 = vector.extract_strided_slice %96 {offsets = [0, 0], sizes = [2, 32], strides = [1, 1]} : vector<2x96xf32> to vector<2x32xf32>
    %102 = arith.mulf %101, %98 : vector<2x32xf32>
    %103 = arith.addf %100, %102 : vector<2x32xf32>
    %104 = vector.extract_strided_slice %96 {offsets = [0, 64], sizes = [2, 32], strides = [1, 1]} : vector<2x96xf32> to vector<2x32xf32>
    %105 = math.tanh %103 : vector<2x32xf32>
    %106 = arith.mulf %104, %105 : vector<2x32xf32>
    %c2_i32_29 = arith.constant 2 : i32
    %107 = arith.muli %c1_i32, %c2_i32_29 : i32
    %108 = arith.index_cast %107 : i32 to index
    %c0_30 = arith.constant 0 : index
    %109 = vector.load %arg11[%108, %c0_30] : memref<16x64xf32, #tpu.memory_space<vmem>>, vector<2x32xf32>
    tpu.vector_store %arg11[%108, %c0_30], %88 {strides = array<i32>} : memref<16x64xf32, #tpu.memory_space<vmem>>, vector<2x32xf32>,
    %c2_i32_31 = arith.constant 2 : i32
    %110 = arith.muli %62, %c2_i32_31 : i32
    %111 = arith.index_cast %110 : i32 to index
    %c32_32 = arith.constant 32 : index
    %112 = vector.load %arg11[%111, %c32_32] : memref<16x64xf32, #tpu.memory_space<vmem>>, vector<2x32xf32>
    tpu.vector_store %arg11[%111, %c32_32], %106 {strides = array<i32>} : memref<16x64xf32, #tpu.memory_space<vmem>>, vector<2x32xf32>,
    %c2_i32_33 = arith.constant 2 : i32
    %c7_i32_34 = arith.constant 7 : i32
    %113 = arith.subi %c7_i32_34, %c2_i32_33 : i32
    %cst_35 = arith.constant dense<0.000000e+00> : vector<2x128xf32>
    %114 = tpu.matmul %88, %8, %cst_35 {dimension_numbers = #tpu.dot_dimension_numbers<[1], [0], [0], [1], [0, 0, 1, 1], [], []>} : vector<2x32xf32>, vector<32x128xf32>, vector<2x128xf32> -> vector<2x128xf32>
    %cst_36 = arith.constant dense<0.000000e+00> : vector<2x128xf32>
    %115 = tpu.matmul %106, %9, %cst_36 {dimension_numbers = #tpu.dot_dimension_numbers<[1], [0], [0], [1], [0, 0, 1, 1], [], []>} : vector<2x32xf32>, vector<32x128xf32>, vector<2x128xf32> -> vector<2x128xf32>
    %c2_i32_37 = arith.constant 2 : i32
    %116 = arith.muli %c2_i32_33, %c2_i32_37 : i32
    %117 = arith.index_cast %116 : i32 to index
    %c0_38 = arith.constant 0 : index
    %118 = vector.load %arg10[%117, %c0_38] : memref<16x256xf32, #tpu.memory_space<vmem>>, vector<2x256xf32>
    %c2_i32_39 = arith.constant 2 : i32
    %119 = arith.muli %113, %c2_i32_39 : i32
    %120 = arith.index_cast %119 : i32 to index
    %c0_40 = arith.constant 0 : index
    %121 = vector.load %arg10[%120, %c0_40] : memref<16x256xf32, #tpu.memory_space<vmem>>, vector<2x256xf32>
    %122 = vector.extract_strided_slice %118 {offsets = [0, 0], sizes = [2, 128], strides = [1, 1]} : vector<2x256xf32> to vector<2x128xf32>
    %123 = arith.addf %122, %114 : vector<2x128xf32>
    %124 = vector.extract_strided_slice %123 {offsets = [0, 0], sizes = [2, 96], strides = [1, 1]} : vector<2x128xf32> to vector<2x96xf32>
    %125 = arith.negf %124 : vector<2x96xf32>
    %126 = math.exp %125 : vector<2x96xf32>
    %cst_41 = arith.constant 1.000000e+00 : f32
    %127 = vector.broadcast %cst_41 : f32 to vector<2x96xf32>
    %128 = arith.addf %127, %126 : vector<2x96xf32>
    %129 = arith.divf %127, %128 : vector<2x96xf32>
    %130 = vector.extract_strided_slice %123 {offsets = [0, 96], sizes = [2, 32], strides = [1, 1]} : vector<2x128xf32> to vector<2x32xf32>
    %131 = math.tanh %130 : vector<2x32xf32>
    %132 = vector.extract_strided_slice %129 {offsets = [0, 32], sizes = [2, 32], strides = [1, 1]} : vector<2x96xf32> to vector<2x32xf32>
    %133 = arith.mulf %132, %85 : vector<2x32xf32>
    %134 = vector.extract_strided_slice %129 {offsets = [0, 0], sizes = [2, 32], strides = [1, 1]} : vector<2x96xf32> to vector<2x32xf32>
    %135 = arith.mulf %134, %131 : vector<2x32xf32>
    %136 = arith.addf %133, %135 : vector<2x32xf32>
    %137 = vector.extract_strided_slice %129 {offsets = [0, 64], sizes = [2, 32], strides = [1, 1]} : vector<2x96xf32> to vector<2x32xf32>
    %138 = math.tanh %136 : vector<2x32xf32>
    %139 = arith.mulf %137, %138 : vector<2x32xf32>
    %140 = vector.extract_strided_slice %121 {offsets = [0, 128], sizes = [2, 128], strides = [1, 1]} : vector<2x256xf32> to vector<2x128xf32>
    %141 = arith.addf %140, %115 : vector<2x128xf32>
    %142 = vector.extract_strided_slice %141 {offsets = [0, 0], sizes = [2, 96], strides = [1, 1]} : vector<2x128xf32> to vector<2x96xf32>
    %143 = arith.negf %142 : vector<2x96xf32>
    %144 = math.exp %143 : vector<2x96xf32>
    %cst_42 = arith.constant 1.000000e+00 : f32
    %145 = vector.broadcast %cst_42 : f32 to vector<2x96xf32>
    %146 = arith.addf %145, %144 : vector<2x96xf32>
    %147 = arith.divf %145, %146 : vector<2x96xf32>
    %148 = vector.extract_strided_slice %141 {offsets = [0, 96], sizes = [2, 32], strides = [1, 1]} : vector<2x128xf32> to vector<2x32xf32>
    %149 = math.tanh %148 : vector<2x32xf32>
    %150 = vector.extract_strided_slice %147 {offsets = [0, 32], sizes = [2, 32], strides = [1, 1]} : vector<2x96xf32> to vector<2x32xf32>
    %151 = arith.mulf %150, %103 : vector<2x32xf32>
    %152 = vector.extract_strided_slice %147 {offsets = [0, 0], sizes = [2, 32], strides = [1, 1]} : vector<2x96xf32> to vector<2x32xf32>
    %153 = arith.mulf %152, %149 : vector<2x32xf32>
    %154 = arith.addf %151, %153 : vector<2x32xf32>
    %155 = vector.extract_strided_slice %147 {offsets = [0, 64], sizes = [2, 32], strides = [1, 1]} : vector<2x96xf32> to vector<2x32xf32>
    %156 = math.tanh %154 : vector<2x32xf32>
    %157 = arith.mulf %155, %156 : vector<2x32xf32>
    %c2_i32_43 = arith.constant 2 : i32
    %158 = arith.muli %c2_i32_33, %c2_i32_43 : i32
    %159 = arith.index_cast %158 : i32 to index
    %c0_44 = arith.constant 0 : index
    %160 = vector.load %arg11[%159, %c0_44] : memref<16x64xf32, #tpu.memory_space<vmem>>, vector<2x32xf32>
    tpu.vector_store %arg11[%159, %c0_44], %139 {strides = array<i32>} : memref<16x64xf32, #tpu.memory_space<vmem>>, vector<2x32xf32>,
    %c2_i32_45 = arith.constant 2 : i32
    %161 = arith.muli %113, %c2_i32_45 : i32
    %162 = arith.index_cast %161 : i32 to index
    %c32_46 = arith.constant 32 : index
    %163 = vector.load %arg11[%162, %c32_46] : memref<16x64xf32, #tpu.memory_space<vmem>>, vector<2x32xf32>
    tpu.vector_store %arg11[%162, %c32_46], %157 {strides = array<i32>} : memref<16x64xf32, #tpu.memory_space<vmem>>, vector<2x32xf32>,
    %c3_i32 = arith.constant 3 : i32
    %c7_i32_47 = arith.constant 7 : i32
    %164 = arith.subi %c7_i32_47, %c3_i32 : i32
    %cst_48 = arith.constant dense<0.000000e+00> : vector<2x128xf32>
    %165 = tpu.matmul %139, %8, %cst_48 {dimension_numbers = #tpu.dot_dimension_numbers<[1], [0], [0], [1], [0, 0, 1, 1], [], []>} : vector<2x32xf32>, vector<32x128xf32>, vector<2x128xf32> -> vector<2x128xf32>
    %cst_49 = arith.constant dense<0.000000e+00> : vector<2x128xf32>
    %166 = tpu.matmul %157, %9, %cst_49 {dimension_numbers = #tpu.dot_dimension_numbers<[1], [0], [0], [1], [0, 0, 1, 1], [], []>} : vector<2x32xf32>, vector<32x128xf32>, vector<2x128xf32> -> vector<2x128xf32>
    %c2_i32_50 = arith.constant 2 : i32
    %167 = arith.muli %c3_i32, %c2_i32_50 : i32
    %168 = arith.index_cast %167 : i32 to index
    %c0_51 = arith.constant 0 : index
    %169 = vector.load %arg10[%168, %c0_51] : memref<16x256xf32, #tpu.memory_space<vmem>>, vector<2x256xf32>
    %c2_i32_52 = arith.constant 2 : i32
    %170 = arith.muli %164, %c2_i32_52 : i32
    %171 = arith.index_cast %170 : i32 to index
    %c0_53 = arith.constant 0 : index
    %172 = vector.load %arg10[%171, %c0_53] : memref<16x256xf32, #tpu.memory_space<vmem>>, vector<2x256xf32>
    %173 = vector.extract_strided_slice %169 {offsets = [0, 0], sizes = [2, 128], strides = [1, 1]} : vector<2x256xf32> to vector<2x128xf32>
    %174 = arith.addf %173, %165 : vector<2x128xf32>
    %175 = vector.extract_strided_slice %174 {offsets = [0, 0], sizes = [2, 96], strides = [1, 1]} : vector<2x128xf32> to vector<2x96xf32>
    %176 = arith.negf %175 : vector<2x96xf32>
    %177 = math.exp %176 : vector<2x96xf32>
    %cst_54 = arith.constant 1.000000e+00 : f32
    %178 = vector.broadcast %cst_54 : f32 to vector<2x96xf32>
    %179 = arith.addf %178, %177 : vector<2x96xf32>
    %180 = arith.divf %178, %179 : vector<2x96xf32>
    %181 = vector.extract_strided_slice %174 {offsets = [0, 96], sizes = [2, 32], strides = [1, 1]} : vector<2x128xf32> to vector<2x32xf32>
    %182 = math.tanh %181 : vector<2x32xf32>
    %183 = vector.extract_strided_slice %180 {offsets = [0, 32], sizes = [2, 32], strides = [1, 1]} : vector<2x96xf32> to vector<2x32xf32>
    %184 = arith.mulf %183, %136 : vector<2x32xf32>
    %185 = vector.extract_strided_slice %180 {offsets = [0, 0], sizes = [2, 32], strides = [1, 1]} : vector<2x96xf32> to vector<2x32xf32>
    %186 = arith.mulf %185, %182 : vector<2x32xf32>
    %187 = arith.addf %184, %186 : vector<2x32xf32>
    %188 = vector.extract_strided_slice %180 {offsets = [0, 64], sizes = [2, 32], strides = [1, 1]} : vector<2x96xf32> to vector<2x32xf32>
    %189 = math.tanh %187 : vector<2x32xf32>
    %190 = arith.mulf %188, %189 : vector<2x32xf32>
    %191 = vector.extract_strided_slice %172 {offsets = [0, 128], sizes = [2, 128], strides = [1, 1]} : vector<2x256xf32> to vector<2x128xf32>
    %192 = arith.addf %191, %166 : vector<2x128xf32>
    %193 = vector.extract_strided_slice %192 {offsets = [0, 0], sizes = [2, 96], strides = [1, 1]} : vector<2x128xf32> to vector<2x96xf32>
    %194 = arith.negf %193 : vector<2x96xf32>
    %195 = math.exp %194 : vector<2x96xf32>
    %cst_55 = arith.constant 1.000000e+00 : f32
    %196 = vector.broadcast %cst_55 : f32 to vector<2x96xf32>
    %197 = arith.addf %196, %195 : vector<2x96xf32>
    %198 = arith.divf %196, %197 : vector<2x96xf32>
    %199 = vector.extract_strided_slice %192 {offsets = [0, 96], sizes = [2, 32], strides = [1, 1]} : vector<2x128xf32> to vector<2x32xf32>
    %200 = math.tanh %199 : vector<2x32xf32>
    %201 = vector.extract_strided_slice %198 {offsets = [0, 32], sizes = [2, 32], strides = [1, 1]} : vector<2x96xf32> to vector<2x32xf32>
    %202 = arith.mulf %201, %154 : vector<2x32xf32>
    %203 = vector.extract_strided_slice %198 {offsets = [0, 0], sizes = [2, 32], strides = [1, 1]} : vector<2x96xf32> to vector<2x32xf32>
    %204 = arith.mulf %203, %200 : vector<2x32xf32>
    %205 = arith.addf %202, %204 : vector<2x32xf32>
    %206 = vector.extract_strided_slice %198 {offsets = [0, 64], sizes = [2, 32], strides = [1, 1]} : vector<2x96xf32> to vector<2x32xf32>
    %207 = math.tanh %205 : vector<2x32xf32>
    %208 = arith.mulf %206, %207 : vector<2x32xf32>
    %c2_i32_56 = arith.constant 2 : i32
    %209 = arith.muli %c3_i32, %c2_i32_56 : i32
    %210 = arith.index_cast %209 : i32 to index
    %c0_57 = arith.constant 0 : index
    %211 = vector.load %arg11[%210, %c0_57] : memref<16x64xf32, #tpu.memory_space<vmem>>, vector<2x32xf32>
    tpu.vector_store %arg11[%210, %c0_57], %190 {strides = array<i32>} : memref<16x64xf32, #tpu.memory_space<vmem>>, vector<2x32xf32>,
    %c2_i32_58 = arith.constant 2 : i32
    %212 = arith.muli %164, %c2_i32_58 : i32
    %213 = arith.index_cast %212 : i32 to index
    %c32_59 = arith.constant 32 : index
    %214 = vector.load %arg11[%213, %c32_59] : memref<16x64xf32, #tpu.memory_space<vmem>>, vector<2x32xf32>
    tpu.vector_store %arg11[%213, %c32_59], %208 {strides = array<i32>} : memref<16x64xf32, #tpu.memory_space<vmem>>, vector<2x32xf32>,
    %c4_i32 = arith.constant 4 : i32
    %c7_i32_60 = arith.constant 7 : i32
    %215 = arith.subi %c7_i32_60, %c4_i32 : i32
    %cst_61 = arith.constant dense<0.000000e+00> : vector<2x128xf32>
    %216 = tpu.matmul %190, %8, %cst_61 {dimension_numbers = #tpu.dot_dimension_numbers<[1], [0], [0], [1], [0, 0, 1, 1], [], []>} : vector<2x32xf32>, vector<32x128xf32>, vector<2x128xf32> -> vector<2x128xf32>
    %cst_62 = arith.constant dense<0.000000e+00> : vector<2x128xf32>
    %217 = tpu.matmul %208, %9, %cst_62 {dimension_numbers = #tpu.dot_dimension_numbers<[1], [0], [0], [1], [0, 0, 1, 1], [], []>} : vector<2x32xf32>, vector<32x128xf32>, vector<2x128xf32> -> vector<2x128xf32>
    %c2_i32_63 = arith.constant 2 : i32
    %218 = arith.muli %c4_i32, %c2_i32_63 : i32
    %219 = arith.index_cast %218 : i32 to index
    %c0_64 = arith.constant 0 : index
    %220 = vector.load %arg10[%219, %c0_64] : memref<16x256xf32, #tpu.memory_space<vmem>>, vector<2x256xf32>
    %c2_i32_65 = arith.constant 2 : i32
    %221 = arith.muli %215, %c2_i32_65 : i32
    %222 = arith.index_cast %221 : i32 to index
    %c0_66 = arith.constant 0 : index
    %223 = vector.load %arg10[%222, %c0_66] : memref<16x256xf32, #tpu.memory_space<vmem>>, vector<2x256xf32>
    %224 = vector.extract_strided_slice %220 {offsets = [0, 0], sizes = [2, 128], strides = [1, 1]} : vector<2x256xf32> to vector<2x128xf32>
    %225 = arith.addf %224, %216 : vector<2x128xf32>
    %226 = vector.extract_strided_slice %225 {offsets = [0, 0], sizes = [2, 96], strides = [1, 1]} : vector<2x128xf32> to vector<2x96xf32>
    %227 = arith.negf %226 : vector<2x96xf32>
    %228 = math.exp %227 : vector<2x96xf32>
    %cst_67 = arith.constant 1.000000e+00 : f32
    %229 = vector.broadcast %cst_67 : f32 to vector<2x96xf32>
    %230 = arith.addf %229, %228 : vector<2x96xf32>
    %231 = arith.divf %229, %230 : vector<2x96xf32>
    %232 = vector.extract_strided_slice %225 {offsets = [0, 96], sizes = [2, 32], strides = [1, 1]} : vector<2x128xf32> to vector<2x32xf32>
    %233 = math.tanh %232 : vector<2x32xf32>
    %234 = vector.extract_strided_slice %231 {offsets = [0, 32], sizes = [2, 32], strides = [1, 1]} : vector<2x96xf32> to vector<2x32xf32>
    %235 = arith.mulf %234, %187 : vector<2x32xf32>
    %236 = vector.extract_strided_slice %231 {offsets = [0, 0], sizes = [2, 32], strides = [1, 1]} : vector<2x96xf32> to vector<2x32xf32>
    %237 = arith.mulf %236, %233 : vector<2x32xf32>
    %238 = arith.addf %235, %237 : vector<2x32xf32>
    %239 = vector.extract_strided_slice %231 {offsets = [0, 64], sizes = [2, 32], strides = [1, 1]} : vector<2x96xf32> to vector<2x32xf32>
    %240 = math.tanh %238 : vector<2x32xf32>
    %241 = arith.mulf %239, %240 : vector<2x32xf32>
    %242 = vector.extract_strided_slice %223 {offsets = [0, 128], sizes = [2, 128], strides = [1, 1]} : vector<2x256xf32> to vector<2x128xf32>
    %243 = arith.addf %242, %217 : vector<2x128xf32>
    %244 = vector.extract_strided_slice %243 {offsets = [0, 0], sizes = [2, 96], strides = [1, 1]} : vector<2x128xf32> to vector<2x96xf32>
    %245 = arith.negf %244 : vector<2x96xf32>
    %246 = math.exp %245 : vector<2x96xf32>
    %cst_68 = arith.constant 1.000000e+00 : f32
    %247 = vector.broadcast %cst_68 : f32 to vector<2x96xf32>
    %248 = arith.addf %247, %246 : vector<2x96xf32>
    %249 = arith.divf %247, %248 : vector<2x96xf32>
    %250 = vector.extract_strided_slice %243 {offsets = [0, 96], sizes = [2, 32], strides = [1, 1]} : vector<2x128xf32> to vector<2x32xf32>
    %251 = math.tanh %250 : vector<2x32xf32>
    %252 = vector.extract_strided_slice %249 {offsets = [0, 32], sizes = [2, 32], strides = [1, 1]} : vector<2x96xf32> to vector<2x32xf32>
    %253 = arith.mulf %252, %205 : vector<2x32xf32>
    %254 = vector.extract_strided_slice %249 {offsets = [0, 0], sizes = [2, 32], strides = [1, 1]} : vector<2x96xf32> to vector<2x32xf32>
    %255 = arith.mulf %254, %251 : vector<2x32xf32>
    %256 = arith.addf %253, %255 : vector<2x32xf32>
    %257 = vector.extract_strided_slice %249 {offsets = [0, 64], sizes = [2, 32], strides = [1, 1]} : vector<2x96xf32> to vector<2x32xf32>
    %258 = math.tanh %256 : vector<2x32xf32>
    %259 = arith.mulf %257, %258 : vector<2x32xf32>
    %c2_i32_69 = arith.constant 2 : i32
    %260 = arith.muli %c4_i32, %c2_i32_69 : i32
    %261 = arith.index_cast %260 : i32 to index
    %c0_70 = arith.constant 0 : index
    %262 = vector.load %arg11[%261, %c0_70] : memref<16x64xf32, #tpu.memory_space<vmem>>, vector<2x32xf32>
    tpu.vector_store %arg11[%261, %c0_70], %241 {strides = array<i32>} : memref<16x64xf32, #tpu.memory_space<vmem>>, vector<2x32xf32>,
    %c2_i32_71 = arith.constant 2 : i32
    %263 = arith.muli %215, %c2_i32_71 : i32
    %264 = arith.index_cast %263 : i32 to index
    %c32_72 = arith.constant 32 : index
    %265 = vector.load %arg11[%264, %c32_72] : memref<16x64xf32, #tpu.memory_space<vmem>>, vector<2x32xf32>
    tpu.vector_store %arg11[%264, %c32_72], %259 {strides = array<i32>} : memref<16x64xf32, #tpu.memory_space<vmem>>, vector<2x32xf32>,
    %c5_i32 = arith.constant 5 : i32
    %c7_i32_73 = arith.constant 7 : i32
    %266 = arith.subi %c7_i32_73, %c5_i32 : i32
    %cst_74 = arith.constant dense<0.000000e+00> : vector<2x128xf32>
    %267 = tpu.matmul %241, %8, %cst_74 {dimension_numbers = #tpu.dot_dimension_numbers<[1], [0], [0], [1], [0, 0, 1, 1], [], []>} : vector<2x32xf32>, vector<32x128xf32>, vector<2x128xf32> -> vector<2x128xf32>
    %cst_75 = arith.constant dense<0.000000e+00> : vector<2x128xf32>
    %268 = tpu.matmul %259, %9, %cst_75 {dimension_numbers = #tpu.dot_dimension_numbers<[1], [0], [0], [1], [0, 0, 1, 1], [], []>} : vector<2x32xf32>, vector<32x128xf32>, vector<2x128xf32> -> vector<2x128xf32>
    %c2_i32_76 = arith.constant 2 : i32
    %269 = arith.muli %c5_i32, %c2_i32_76 : i32
    %270 = arith.index_cast %269 : i32 to index
    %c0_77 = arith.constant 0 : index
    %271 = vector.load %arg10[%270, %c0_77] : memref<16x256xf32, #tpu.memory_space<vmem>>, vector<2x256xf32>
    %c2_i32_78 = arith.constant 2 : i32
    %272 = arith.muli %266, %c2_i32_78 : i32
    %273 = arith.index_cast %272 : i32 to index
    %c0_79 = arith.constant 0 : index
    %274 = vector.load %arg10[%273, %c0_79] : memref<16x256xf32, #tpu.memory_space<vmem>>, vector<2x256xf32>
    %275 = vector.extract_strided_slice %271 {offsets = [0, 0], sizes = [2, 128], strides = [1, 1]} : vector<2x256xf32> to vector<2x128xf32>
    %276 = arith.addf %275, %267 : vector<2x128xf32>
    %277 = vector.extract_strided_slice %276 {offsets = [0, 0], sizes = [2, 96], strides = [1, 1]} : vector<2x128xf32> to vector<2x96xf32>
    %278 = arith.negf %277 : vector<2x96xf32>
    %279 = math.exp %278 : vector<2x96xf32>
    %cst_80 = arith.constant 1.000000e+00 : f32
    %280 = vector.broadcast %cst_80 : f32 to vector<2x96xf32>
    %281 = arith.addf %280, %279 : vector<2x96xf32>
    %282 = arith.divf %280, %281 : vector<2x96xf32>
    %283 = vector.extract_strided_slice %276 {offsets = [0, 96], sizes = [2, 32], strides = [1, 1]} : vector<2x128xf32> to vector<2x32xf32>
    %284 = math.tanh %283 : vector<2x32xf32>
    %285 = vector.extract_strided_slice %282 {offsets = [0, 32], sizes = [2, 32], strides = [1, 1]} : vector<2x96xf32> to vector<2x32xf32>
    %286 = arith.mulf %285, %238 : vector<2x32xf32>
    %287 = vector.extract_strided_slice %282 {offsets = [0, 0], sizes = [2, 32], strides = [1, 1]} : vector<2x96xf32> to vector<2x32xf32>
    %288 = arith.mulf %287, %284 : vector<2x32xf32>
    %289 = arith.addf %286, %288 : vector<2x32xf32>
    %290 = vector.extract_strided_slice %282 {offsets = [0, 64], sizes = [2, 32], strides = [1, 1]} : vector<2x96xf32> to vector<2x32xf32>
    %291 = math.tanh %289 : vector<2x32xf32>
    %292 = arith.mulf %290, %291 : vector<2x32xf32>
    %293 = vector.extract_strided_slice %274 {offsets = [0, 128], sizes = [2, 128], strides = [1, 1]} : vector<2x256xf32> to vector<2x128xf32>
    %294 = arith.addf %293, %268 : vector<2x128xf32>
    %295 = vector.extract_strided_slice %294 {offsets = [0, 0], sizes = [2, 96], strides = [1, 1]} : vector<2x128xf32> to vector<2x96xf32>
    %296 = arith.negf %295 : vector<2x96xf32>
    %297 = math.exp %296 : vector<2x96xf32>
    %cst_81 = arith.constant 1.000000e+00 : f32
    %298 = vector.broadcast %cst_81 : f32 to vector<2x96xf32>
    %299 = arith.addf %298, %297 : vector<2x96xf32>
    %300 = arith.divf %298, %299 : vector<2x96xf32>
    %301 = vector.extract_strided_slice %294 {offsets = [0, 96], sizes = [2, 32], strides = [1, 1]} : vector<2x128xf32> to vector<2x32xf32>
    %302 = math.tanh %301 : vector<2x32xf32>
    %303 = vector.extract_strided_slice %300 {offsets = [0, 32], sizes = [2, 32], strides = [1, 1]} : vector<2x96xf32> to vector<2x32xf32>
    %304 = arith.mulf %303, %256 : vector<2x32xf32>
    %305 = vector.extract_strided_slice %300 {offsets = [0, 0], sizes = [2, 32], strides = [1, 1]} : vector<2x96xf32> to vector<2x32xf32>
    %306 = arith.mulf %305, %302 : vector<2x32xf32>
    %307 = arith.addf %304, %306 : vector<2x32xf32>
    %308 = vector.extract_strided_slice %300 {offsets = [0, 64], sizes = [2, 32], strides = [1, 1]} : vector<2x96xf32> to vector<2x32xf32>
    %309 = math.tanh %307 : vector<2x32xf32>
    %310 = arith.mulf %308, %309 : vector<2x32xf32>
    %c2_i32_82 = arith.constant 2 : i32
    %311 = arith.muli %c5_i32, %c2_i32_82 : i32
    %312 = arith.index_cast %311 : i32 to index
    %c0_83 = arith.constant 0 : index
    %313 = vector.load %arg11[%312, %c0_83] : memref<16x64xf32, #tpu.memory_space<vmem>>, vector<2x32xf32>
    tpu.vector_store %arg11[%312, %c0_83], %292 {strides = array<i32>} : memref<16x64xf32, #tpu.memory_space<vmem>>, vector<2x32xf32>,
    %c2_i32_84 = arith.constant 2 : i32
    %314 = arith.muli %266, %c2_i32_84 : i32
    %315 = arith.index_cast %314 : i32 to index
    %c32_85 = arith.constant 32 : index
    %316 = vector.load %arg11[%315, %c32_85] : memref<16x64xf32, #tpu.memory_space<vmem>>, vector<2x32xf32>
    tpu.vector_store %arg11[%315, %c32_85], %310 {strides = array<i32>} : memref<16x64xf32, #tpu.memory_space<vmem>>, vector<2x32xf32>,
    %c6_i32 = arith.constant 6 : i32
    %c7_i32_86 = arith.constant 7 : i32
    %317 = arith.subi %c7_i32_86, %c6_i32 : i32
    %cst_87 = arith.constant dense<0.000000e+00> : vector<2x128xf32>
    %318 = tpu.matmul %292, %8, %cst_87 {dimension_numbers = #tpu.dot_dimension_numbers<[1], [0], [0], [1], [0, 0, 1, 1], [], []>} : vector<2x32xf32>, vector<32x128xf32>, vector<2x128xf32> -> vector<2x128xf32>
    %cst_88 = arith.constant dense<0.000000e+00> : vector<2x128xf32>
    %319 = tpu.matmul %310, %9, %cst_88 {dimension_numbers = #tpu.dot_dimension_numbers<[1], [0], [0], [1], [0, 0, 1, 1], [], []>} : vector<2x32xf32>, vector<32x128xf32>, vector<2x128xf32> -> vector<2x128xf32>
    %c2_i32_89 = arith.constant 2 : i32
    %320 = arith.muli %c6_i32, %c2_i32_89 : i32
    %321 = arith.index_cast %320 : i32 to index
    %c0_90 = arith.constant 0 : index
    %322 = vector.load %arg10[%321, %c0_90] : memref<16x256xf32, #tpu.memory_space<vmem>>, vector<2x256xf32>
    %c2_i32_91 = arith.constant 2 : i32
    %323 = arith.muli %317, %c2_i32_91 : i32
    %324 = arith.index_cast %323 : i32 to index
    %c0_92 = arith.constant 0 : index
    %325 = vector.load %arg10[%324, %c0_92] : memref<16x256xf32, #tpu.memory_space<vmem>>, vector<2x256xf32>
    %326 = vector.extract_strided_slice %322 {offsets = [0, 0], sizes = [2, 128], strides = [1, 1]} : vector<2x256xf32> to vector<2x128xf32>
    %327 = arith.addf %326, %318 : vector<2x128xf32>
    %328 = vector.extract_strided_slice %327 {offsets = [0, 0], sizes = [2, 96], strides = [1, 1]} : vector<2x128xf32> to vector<2x96xf32>
    %329 = arith.negf %328 : vector<2x96xf32>
    %330 = math.exp %329 : vector<2x96xf32>
    %cst_93 = arith.constant 1.000000e+00 : f32
    %331 = vector.broadcast %cst_93 : f32 to vector<2x96xf32>
    %332 = arith.addf %331, %330 : vector<2x96xf32>
    %333 = arith.divf %331, %332 : vector<2x96xf32>
    %334 = vector.extract_strided_slice %327 {offsets = [0, 96], sizes = [2, 32], strides = [1, 1]} : vector<2x128xf32> to vector<2x32xf32>
    %335 = math.tanh %334 : vector<2x32xf32>
    %336 = vector.extract_strided_slice %333 {offsets = [0, 32], sizes = [2, 32], strides = [1, 1]} : vector<2x96xf32> to vector<2x32xf32>
    %337 = arith.mulf %336, %289 : vector<2x32xf32>
    %338 = vector.extract_strided_slice %333 {offsets = [0, 0], sizes = [2, 32], strides = [1, 1]} : vector<2x96xf32> to vector<2x32xf32>
    %339 = arith.mulf %338, %335 : vector<2x32xf32>
    %340 = arith.addf %337, %339 : vector<2x32xf32>
    %341 = vector.extract_strided_slice %333 {offsets = [0, 64], sizes = [2, 32], strides = [1, 1]} : vector<2x96xf32> to vector<2x32xf32>
    %342 = math.tanh %340 : vector<2x32xf32>
    %343 = arith.mulf %341, %342 : vector<2x32xf32>
    %344 = vector.extract_strided_slice %325 {offsets = [0, 128], sizes = [2, 128], strides = [1, 1]} : vector<2x256xf32> to vector<2x128xf32>
    %345 = arith.addf %344, %319 : vector<2x128xf32>
    %346 = vector.extract_strided_slice %345 {offsets = [0, 0], sizes = [2, 96], strides = [1, 1]} : vector<2x128xf32> to vector<2x96xf32>
    %347 = arith.negf %346 : vector<2x96xf32>
    %348 = math.exp %347 : vector<2x96xf32>
    %cst_94 = arith.constant 1.000000e+00 : f32
    %349 = vector.broadcast %cst_94 : f32 to vector<2x96xf32>
    %350 = arith.addf %349, %348 : vector<2x96xf32>
    %351 = arith.divf %349, %350 : vector<2x96xf32>
    %352 = vector.extract_strided_slice %345 {offsets = [0, 96], sizes = [2, 32], strides = [1, 1]} : vector<2x128xf32> to vector<2x32xf32>
    %353 = math.tanh %352 : vector<2x32xf32>
    %354 = vector.extract_strided_slice %351 {offsets = [0, 32], sizes = [2, 32], strides = [1, 1]} : vector<2x96xf32> to vector<2x32xf32>
    %355 = arith.mulf %354, %307 : vector<2x32xf32>
    %356 = vector.extract_strided_slice %351 {offsets = [0, 0], sizes = [2, 32], strides = [1, 1]} : vector<2x96xf32> to vector<2x32xf32>
    %357 = arith.mulf %356, %353 : vector<2x32xf32>
    %358 = arith.addf %355, %357 : vector<2x32xf32>
    %359 = vector.extract_strided_slice %351 {offsets = [0, 64], sizes = [2, 32], strides = [1, 1]} : vector<2x96xf32> to vector<2x32xf32>
    %360 = math.tanh %358 : vector<2x32xf32>
    %361 = arith.mulf %359, %360 : vector<2x32xf32>
    %c2_i32_95 = arith.constant 2 : i32
    %362 = arith.muli %c6_i32, %c2_i32_95 : i32
    %363 = arith.index_cast %362 : i32 to index
    %c0_96 = arith.constant 0 : index
    %364 = vector.load %arg11[%363, %c0_96] : memref<16x64xf32, #tpu.memory_space<vmem>>, vector<2x32xf32>
    tpu.vector_store %arg11[%363, %c0_96], %343 {strides = array<i32>} : memref<16x64xf32, #tpu.memory_space<vmem>>, vector<2x32xf32>,
    %c2_i32_97 = arith.constant 2 : i32
    %365 = arith.muli %317, %c2_i32_97 : i32
    %366 = arith.index_cast %365 : i32 to index
    %c32_98 = arith.constant 32 : index
    %367 = vector.load %arg11[%366, %c32_98] : memref<16x64xf32, #tpu.memory_space<vmem>>, vector<2x32xf32>
    tpu.vector_store %arg11[%366, %c32_98], %361 {strides = array<i32>} : memref<16x64xf32, #tpu.memory_space<vmem>>, vector<2x32xf32>,
    %c7_i32_99 = arith.constant 7 : i32
    %c7_i32_100 = arith.constant 7 : i32
    %368 = arith.subi %c7_i32_100, %c7_i32_99 : i32
    %cst_101 = arith.constant dense<0.000000e+00> : vector<2x128xf32>
    %369 = tpu.matmul %343, %8, %cst_101 {dimension_numbers = #tpu.dot_dimension_numbers<[1], [0], [0], [1], [0, 0, 1, 1], [], []>} : vector<2x32xf32>, vector<32x128xf32>, vector<2x128xf32> -> vector<2x128xf32>
    %cst_102 = arith.constant dense<0.000000e+00> : vector<2x128xf32>
    %370 = tpu.matmul %361, %9, %cst_102 {dimension_numbers = #tpu.dot_dimension_numbers<[1], [0], [0], [1], [0, 0, 1, 1], [], []>} : vector<2x32xf32>, vector<32x128xf32>, vector<2x128xf32> -> vector<2x128xf32>
    %c2_i32_103 = arith.constant 2 : i32
    %371 = arith.muli %c7_i32_99, %c2_i32_103 : i32
    %372 = arith.index_cast %371 : i32 to index
    %c0_104 = arith.constant 0 : index
    %373 = vector.load %arg10[%372, %c0_104] : memref<16x256xf32, #tpu.memory_space<vmem>>, vector<2x256xf32>
    %c2_i32_105 = arith.constant 2 : i32
    %374 = arith.muli %368, %c2_i32_105 : i32
    %375 = arith.index_cast %374 : i32 to index
    %c0_106 = arith.constant 0 : index
    %376 = vector.load %arg10[%375, %c0_106] : memref<16x256xf32, #tpu.memory_space<vmem>>, vector<2x256xf32>
    %377 = vector.extract_strided_slice %373 {offsets = [0, 0], sizes = [2, 128], strides = [1, 1]} : vector<2x256xf32> to vector<2x128xf32>
    %378 = arith.addf %377, %369 : vector<2x128xf32>
    %379 = vector.extract_strided_slice %378 {offsets = [0, 0], sizes = [2, 96], strides = [1, 1]} : vector<2x128xf32> to vector<2x96xf32>
    %380 = arith.negf %379 : vector<2x96xf32>
    %381 = math.exp %380 : vector<2x96xf32>
    %cst_107 = arith.constant 1.000000e+00 : f32
    %382 = vector.broadcast %cst_107 : f32 to vector<2x96xf32>
    %383 = arith.addf %382, %381 : vector<2x96xf32>
    %384 = arith.divf %382, %383 : vector<2x96xf32>
    %385 = vector.extract_strided_slice %378 {offsets = [0, 96], sizes = [2, 32], strides = [1, 1]} : vector<2x128xf32> to vector<2x32xf32>
    %386 = math.tanh %385 : vector<2x32xf32>
    %387 = vector.extract_strided_slice %384 {offsets = [0, 32], sizes = [2, 32], strides = [1, 1]} : vector<2x96xf32> to vector<2x32xf32>
    %388 = arith.mulf %387, %340 : vector<2x32xf32>
    %389 = vector.extract_strided_slice %384 {offsets = [0, 0], sizes = [2, 32], strides = [1, 1]} : vector<2x96xf32> to vector<2x32xf32>
    %390 = arith.mulf %389, %386 : vector<2x32xf32>
    %391 = arith.addf %388, %390 : vector<2x32xf32>
    %392 = vector.extract_strided_slice %384 {offsets = [0, 64], sizes = [2, 32], strides = [1, 1]} : vector<2x96xf32> to vector<2x32xf32>
    %393 = math.tanh %391 : vector<2x32xf32>
    %394 = arith.mulf %392, %393 : vector<2x32xf32>
    %395 = vector.extract_strided_slice %376 {offsets = [0, 128], sizes = [2, 128], strides = [1, 1]} : vector<2x256xf32> to vector<2x128xf32>
    %396 = arith.addf %395, %370 : vector<2x128xf32>
    %397 = vector.extract_strided_slice %396 {offsets = [0, 0], sizes = [2, 96], strides = [1, 1]} : vector<2x128xf32> to vector<2x96xf32>
    %398 = arith.negf %397 : vector<2x96xf32>
    %399 = math.exp %398 : vector<2x96xf32>
    %cst_108 = arith.constant 1.000000e+00 : f32
    %400 = vector.broadcast %cst_108 : f32 to vector<2x96xf32>
    %401 = arith.addf %400, %399 : vector<2x96xf32>
    %402 = arith.divf %400, %401 : vector<2x96xf32>
    %403 = vector.extract_strided_slice %396 {offsets = [0, 96], sizes = [2, 32], strides = [1, 1]} : vector<2x128xf32> to vector<2x32xf32>
    %404 = math.tanh %403 : vector<2x32xf32>
    %405 = vector.extract_strided_slice %402 {offsets = [0, 32], sizes = [2, 32], strides = [1, 1]} : vector<2x96xf32> to vector<2x32xf32>
    %406 = arith.mulf %405, %358 : vector<2x32xf32>
    %407 = vector.extract_strided_slice %402 {offsets = [0, 0], sizes = [2, 32], strides = [1, 1]} : vector<2x96xf32> to vector<2x32xf32>
    %408 = arith.mulf %407, %404 : vector<2x32xf32>
    %409 = arith.addf %406, %408 : vector<2x32xf32>
    %410 = vector.extract_strided_slice %402 {offsets = [0, 64], sizes = [2, 32], strides = [1, 1]} : vector<2x96xf32> to vector<2x32xf32>
    %411 = math.tanh %409 : vector<2x32xf32>
    %412 = arith.mulf %410, %411 : vector<2x32xf32>
    %c2_i32_109 = arith.constant 2 : i32
    %413 = arith.muli %c7_i32_99, %c2_i32_109 : i32
    %414 = arith.index_cast %413 : i32 to index
    %c0_110 = arith.constant 0 : index
    %415 = vector.load %arg11[%414, %c0_110] : memref<16x64xf32, #tpu.memory_space<vmem>>, vector<2x32xf32>
    tpu.vector_store %arg11[%414, %c0_110], %394 {strides = array<i32>} : memref<16x64xf32, #tpu.memory_space<vmem>>, vector<2x32xf32>,
    %c2_i32_111 = arith.constant 2 : i32
    %416 = arith.muli %368, %c2_i32_111 : i32
    %417 = arith.index_cast %416 : i32 to index
    %c32_112 = arith.constant 32 : index
    %418 = vector.load %arg11[%417, %c32_112] : memref<16x64xf32, #tpu.memory_space<vmem>>, vector<2x32xf32>
    tpu.vector_store %arg11[%417, %c32_112], %412 {strides = array<i32>} : memref<16x64xf32, #tpu.memory_space<vmem>>, vector<2x32xf32>,
    %c8_i32 = arith.constant 8 : i32
    %c0_113 = arith.constant 0 : index
    %c0_114 = arith.constant 0 : index
    %419 = vector.load %arg11[%c0_113, %c0_114] : memref<16x64xf32, #tpu.memory_space<vmem>>, vector<16x64xf32>
    %c0_115 = arith.constant 0 : index
    %c0_116 = arith.constant 0 : index
    %420 = vector.load %arg4[%c0_115, %c0_116] : memref<64x256xf32, #tpu.memory_space<vmem>>, vector<64x256xf32>
    %cst_117 = arith.constant dense<0.000000e+00> : vector<16x256xf32>
    %421 = tpu.matmul %419, %420, %cst_117 {dimension_numbers = #tpu.dot_dimension_numbers<[1], [0], [0], [1], [0, 0, 1, 1], [], []>} : vector<16x64xf32>, vector<64x256xf32>, vector<16x256xf32> -> vector<16x256xf32>
    %c0_118 = arith.constant 0 : index
    %c0_119 = arith.constant 0 : index
    %422 = vector.load %arg6[%c0_118, %c0_119] : memref<1x256xf32, #tpu.memory_space<vmem>>, vector<1x256xf32>
    %423 = vector.broadcast %422 : vector<1x256xf32> to vector<16x256xf32>
    %424 = arith.addf %421, %423 : vector<16x256xf32>
    %c0_120 = arith.constant 0 : index
    %c0_121 = arith.constant 0 : index
    %425 = vector.load %arg10[%c0_120, %c0_121] : memref<16x256xf32, #tpu.memory_space<vmem>>, vector<16x256xf32>
    tpu.vector_store %arg10[%c0_120, %c0_121], %424 {strides = array<i32>} : memref<16x256xf32, #tpu.memory_space<vmem>>, vector<16x256xf32>,
    %c0_122 = arith.constant 0 : index
    %c0_123 = arith.constant 0 : index
    %426 = vector.load %arg5[%c0_122, %c0_123] : memref<64x128xf32, #tpu.memory_space<vmem>>, vector<64x128xf32>
    %427 = vector.extract_strided_slice %426 {offsets = [0, 0], sizes = [32, 128], strides = [1, 1]} : vector<64x128xf32> to vector<32x128xf32>
    %cst_124 = arith.constant 0.000000e+00 : f32
    %428 = vector.broadcast %cst_124 : f32 to vector<2x32xf32>
    %c0_i32_125 = arith.constant 0 : i32
    %cst_126 = arith.constant dense<0.000000e+00> : vector<2x128xf32>
    %429 = tpu.matmul %428, %427, %cst_126 {dimension_numbers = #tpu.dot_dimension_numbers<[1], [0], [0], [1], [0, 0, 1, 1], [], []>} : vector<2x32xf32>, vector<32x128xf32>, vector<2x128xf32> -> vector<2x128xf32>
    %c2_i32_127 = arith.constant 2 : i32
    %430 = arith.muli %c0_i32_125, %c2_i32_127 : i32
    %431 = arith.index_cast %430 : i32 to index
    %c0_128 = arith.constant 0 : index
    %432 = vector.load %arg10[%431, %c0_128] : memref<16x256xf32, #tpu.memory_space<vmem>>, vector<2x256xf32>
    %433 = vector.extract_strided_slice %432 {offsets = [0, 0], sizes = [2, 128], strides = [1, 1]} : vector<2x256xf32> to vector<2x128xf32>
    %434 = arith.addf %433, %429 : vector<2x128xf32>
    %435 = vector.extract_strided_slice %434 {offsets = [0, 0], sizes = [2, 96], strides = [1, 1]} : vector<2x128xf32> to vector<2x96xf32>
    %436 = arith.negf %435 : vector<2x96xf32>
    %437 = math.exp %436 : vector<2x96xf32>
    %cst_129 = arith.constant 1.000000e+00 : f32
    %438 = vector.broadcast %cst_129 : f32 to vector<2x96xf32>
    %439 = arith.addf %438, %437 : vector<2x96xf32>
    %440 = arith.divf %438, %439 : vector<2x96xf32>
    %441 = vector.extract_strided_slice %434 {offsets = [0, 96], sizes = [2, 32], strides = [1, 1]} : vector<2x128xf32> to vector<2x32xf32>
    %442 = math.tanh %441 : vector<2x32xf32>
    %443 = vector.extract_strided_slice %440 {offsets = [0, 32], sizes = [2, 32], strides = [1, 1]} : vector<2x96xf32> to vector<2x32xf32>
    %444 = arith.mulf %443, %428 : vector<2x32xf32>
    %445 = vector.extract_strided_slice %440 {offsets = [0, 0], sizes = [2, 32], strides = [1, 1]} : vector<2x96xf32> to vector<2x32xf32>
    %446 = arith.mulf %445, %442 : vector<2x32xf32>
    %447 = arith.addf %444, %446 : vector<2x32xf32>
    %448 = vector.extract_strided_slice %440 {offsets = [0, 64], sizes = [2, 32], strides = [1, 1]} : vector<2x96xf32> to vector<2x32xf32>
    %449 = math.tanh %447 : vector<2x32xf32>
    %450 = arith.mulf %448, %449 : vector<2x32xf32>
    %c1_i32_130 = arith.constant 1 : i32
    %cst_131 = arith.constant dense<0.000000e+00> : vector<2x128xf32>
    %451 = tpu.matmul %450, %427, %cst_131 {dimension_numbers = #tpu.dot_dimension_numbers<[1], [0], [0], [1], [0, 0, 1, 1], [], []>} : vector<2x32xf32>, vector<32x128xf32>, vector<2x128xf32> -> vector<2x128xf32>
    %c2_i32_132 = arith.constant 2 : i32
    %452 = arith.muli %c1_i32_130, %c2_i32_132 : i32
    %453 = arith.index_cast %452 : i32 to index
    %c0_133 = arith.constant 0 : index
    %454 = vector.load %arg10[%453, %c0_133] : memref<16x256xf32, #tpu.memory_space<vmem>>, vector<2x256xf32>
    %455 = vector.extract_strided_slice %454 {offsets = [0, 0], sizes = [2, 128], strides = [1, 1]} : vector<2x256xf32> to vector<2x128xf32>
    %456 = arith.addf %455, %451 : vector<2x128xf32>
    %457 = vector.extract_strided_slice %456 {offsets = [0, 0], sizes = [2, 96], strides = [1, 1]} : vector<2x128xf32> to vector<2x96xf32>
    %458 = arith.negf %457 : vector<2x96xf32>
    %459 = math.exp %458 : vector<2x96xf32>
    %cst_134 = arith.constant 1.000000e+00 : f32
    %460 = vector.broadcast %cst_134 : f32 to vector<2x96xf32>
    %461 = arith.addf %460, %459 : vector<2x96xf32>
    %462 = arith.divf %460, %461 : vector<2x96xf32>
    %463 = vector.extract_strided_slice %456 {offsets = [0, 96], sizes = [2, 32], strides = [1, 1]} : vector<2x128xf32> to vector<2x32xf32>
    %464 = math.tanh %463 : vector<2x32xf32>
    %465 = vector.extract_strided_slice %462 {offsets = [0, 32], sizes = [2, 32], strides = [1, 1]} : vector<2x96xf32> to vector<2x32xf32>
    %466 = arith.mulf %465, %447 : vector<2x32xf32>
    %467 = vector.extract_strided_slice %462 {offsets = [0, 0], sizes = [2, 32], strides = [1, 1]} : vector<2x96xf32> to vector<2x32xf32>
    %468 = arith.mulf %467, %464 : vector<2x32xf32>
    %469 = arith.addf %466, %468 : vector<2x32xf32>
    %470 = vector.extract_strided_slice %462 {offsets = [0, 64], sizes = [2, 32], strides = [1, 1]} : vector<2x96xf32> to vector<2x32xf32>
    %471 = math.tanh %469 : vector<2x32xf32>
    %472 = arith.mulf %470, %471 : vector<2x32xf32>
    %c2_i32_135 = arith.constant 2 : i32
    %cst_136 = arith.constant dense<0.000000e+00> : vector<2x128xf32>
    %473 = tpu.matmul %472, %427, %cst_136 {dimension_numbers = #tpu.dot_dimension_numbers<[1], [0], [0], [1], [0, 0, 1, 1], [], []>} : vector<2x32xf32>, vector<32x128xf32>, vector<2x128xf32> -> vector<2x128xf32>
    %c2_i32_137 = arith.constant 2 : i32
    %474 = arith.muli %c2_i32_135, %c2_i32_137 : i32
    %475 = arith.index_cast %474 : i32 to index
    %c0_138 = arith.constant 0 : index
    %476 = vector.load %arg10[%475, %c0_138] : memref<16x256xf32, #tpu.memory_space<vmem>>, vector<2x256xf32>
    %477 = vector.extract_strided_slice %476 {offsets = [0, 0], sizes = [2, 128], strides = [1, 1]} : vector<2x256xf32> to vector<2x128xf32>
    %478 = arith.addf %477, %473 : vector<2x128xf32>
    %479 = vector.extract_strided_slice %478 {offsets = [0, 0], sizes = [2, 96], strides = [1, 1]} : vector<2x128xf32> to vector<2x96xf32>
    %480 = arith.negf %479 : vector<2x96xf32>
    %481 = math.exp %480 : vector<2x96xf32>
    %cst_139 = arith.constant 1.000000e+00 : f32
    %482 = vector.broadcast %cst_139 : f32 to vector<2x96xf32>
    %483 = arith.addf %482, %481 : vector<2x96xf32>
    %484 = arith.divf %482, %483 : vector<2x96xf32>
    %485 = vector.extract_strided_slice %478 {offsets = [0, 96], sizes = [2, 32], strides = [1, 1]} : vector<2x128xf32> to vector<2x32xf32>
    %486 = math.tanh %485 : vector<2x32xf32>
    %487 = vector.extract_strided_slice %484 {offsets = [0, 32], sizes = [2, 32], strides = [1, 1]} : vector<2x96xf32> to vector<2x32xf32>
    %488 = arith.mulf %487, %469 : vector<2x32xf32>
    %489 = vector.extract_strided_slice %484 {offsets = [0, 0], sizes = [2, 32], strides = [1, 1]} : vector<2x96xf32> to vector<2x32xf32>
    %490 = arith.mulf %489, %486 : vector<2x32xf32>
    %491 = arith.addf %488, %490 : vector<2x32xf32>
    %492 = vector.extract_strided_slice %484 {offsets = [0, 64], sizes = [2, 32], strides = [1, 1]} : vector<2x96xf32> to vector<2x32xf32>
    %493 = math.tanh %491 : vector<2x32xf32>
    %494 = arith.mulf %492, %493 : vector<2x32xf32>
    %c3_i32_140 = arith.constant 3 : i32
    %cst_141 = arith.constant dense<0.000000e+00> : vector<2x128xf32>
    %495 = tpu.matmul %494, %427, %cst_141 {dimension_numbers = #tpu.dot_dimension_numbers<[1], [0], [0], [1], [0, 0, 1, 1], [], []>} : vector<2x32xf32>, vector<32x128xf32>, vector<2x128xf32> -> vector<2x128xf32>
    %c2_i32_142 = arith.constant 2 : i32
    %496 = arith.muli %c3_i32_140, %c2_i32_142 : i32
    %497 = arith.index_cast %496 : i32 to index
    %c0_143 = arith.constant 0 : index
    %498 = vector.load %arg10[%497, %c0_143] : memref<16x256xf32, #tpu.memory_space<vmem>>, vector<2x256xf32>
    %499 = vector.extract_strided_slice %498 {offsets = [0, 0], sizes = [2, 128], strides = [1, 1]} : vector<2x256xf32> to vector<2x128xf32>
    %500 = arith.addf %499, %495 : vector<2x128xf32>
    %501 = vector.extract_strided_slice %500 {offsets = [0, 0], sizes = [2, 96], strides = [1, 1]} : vector<2x128xf32> to vector<2x96xf32>
    %502 = arith.negf %501 : vector<2x96xf32>
    %503 = math.exp %502 : vector<2x96xf32>
    %cst_144 = arith.constant 1.000000e+00 : f32
    %504 = vector.broadcast %cst_144 : f32 to vector<2x96xf32>
    %505 = arith.addf %504, %503 : vector<2x96xf32>
    %506 = arith.divf %504, %505 : vector<2x96xf32>
    %507 = vector.extract_strided_slice %500 {offsets = [0, 96], sizes = [2, 32], strides = [1, 1]} : vector<2x128xf32> to vector<2x32xf32>
    %508 = math.tanh %507 : vector<2x32xf32>
    %509 = vector.extract_strided_slice %506 {offsets = [0, 32], sizes = [2, 32], strides = [1, 1]} : vector<2x96xf32> to vector<2x32xf32>
    %510 = arith.mulf %509, %491 : vector<2x32xf32>
    %511 = vector.extract_strided_slice %506 {offsets = [0, 0], sizes = [2, 32], strides = [1, 1]} : vector<2x96xf32> to vector<2x32xf32>
    %512 = arith.mulf %511, %508 : vector<2x32xf32>
    %513 = arith.addf %510, %512 : vector<2x32xf32>
    %514 = vector.extract_strided_slice %506 {offsets = [0, 64], sizes = [2, 32], strides = [1, 1]} : vector<2x96xf32> to vector<2x32xf32>
    %515 = math.tanh %513 : vector<2x32xf32>
    %516 = arith.mulf %514, %515 : vector<2x32xf32>
    %c4_i32_145 = arith.constant 4 : i32
    %cst_146 = arith.constant dense<0.000000e+00> : vector<2x128xf32>
    %517 = tpu.matmul %516, %427, %cst_146 {dimension_numbers = #tpu.dot_dimension_numbers<[1], [0], [0], [1], [0, 0, 1, 1], [], []>} : vector<2x32xf32>, vector<32x128xf32>, vector<2x128xf32> -> vector<2x128xf32>
    %c2_i32_147 = arith.constant 2 : i32
    %518 = arith.muli %c4_i32_145, %c2_i32_147 : i32
    %519 = arith.index_cast %518 : i32 to index
    %c0_148 = arith.constant 0 : index
    %520 = vector.load %arg10[%519, %c0_148] : memref<16x256xf32, #tpu.memory_space<vmem>>, vector<2x256xf32>
    %521 = vector.extract_strided_slice %520 {offsets = [0, 0], sizes = [2, 128], strides = [1, 1]} : vector<2x256xf32> to vector<2x128xf32>
    %522 = arith.addf %521, %517 : vector<2x128xf32>
    %523 = vector.extract_strided_slice %522 {offsets = [0, 0], sizes = [2, 96], strides = [1, 1]} : vector<2x128xf32> to vector<2x96xf32>
    %524 = arith.negf %523 : vector<2x96xf32>
    %525 = math.exp %524 : vector<2x96xf32>
    %cst_149 = arith.constant 1.000000e+00 : f32
    %526 = vector.broadcast %cst_149 : f32 to vector<2x96xf32>
    %527 = arith.addf %526, %525 : vector<2x96xf32>
    %528 = arith.divf %526, %527 : vector<2x96xf32>
    %529 = vector.extract_strided_slice %522 {offsets = [0, 96], sizes = [2, 32], strides = [1, 1]} : vector<2x128xf32> to vector<2x32xf32>
    %530 = math.tanh %529 : vector<2x32xf32>
    %531 = vector.extract_strided_slice %528 {offsets = [0, 32], sizes = [2, 32], strides = [1, 1]} : vector<2x96xf32> to vector<2x32xf32>
    %532 = arith.mulf %531, %513 : vector<2x32xf32>
    %533 = vector.extract_strided_slice %528 {offsets = [0, 0], sizes = [2, 32], strides = [1, 1]} : vector<2x96xf32> to vector<2x32xf32>
    %534 = arith.mulf %533, %530 : vector<2x32xf32>
    %535 = arith.addf %532, %534 : vector<2x32xf32>
    %536 = vector.extract_strided_slice %528 {offsets = [0, 64], sizes = [2, 32], strides = [1, 1]} : vector<2x96xf32> to vector<2x32xf32>
    %537 = math.tanh %535 : vector<2x32xf32>
    %538 = arith.mulf %536, %537 : vector<2x32xf32>
    %c5_i32_150 = arith.constant 5 : i32
    %cst_151 = arith.constant dense<0.000000e+00> : vector<2x128xf32>
    %539 = tpu.matmul %538, %427, %cst_151 {dimension_numbers = #tpu.dot_dimension_numbers<[1], [0], [0], [1], [0, 0, 1, 1], [], []>} : vector<2x32xf32>, vector<32x128xf32>, vector<2x128xf32> -> vector<2x128xf32>
    %c2_i32_152 = arith.constant 2 : i32
    %540 = arith.muli %c5_i32_150, %c2_i32_152 : i32
    %541 = arith.index_cast %540 : i32 to index
    %c0_153 = arith.constant 0 : index
    %542 = vector.load %arg10[%541, %c0_153] : memref<16x256xf32, #tpu.memory_space<vmem>>, vector<2x256xf32>
    %543 = vector.extract_strided_slice %542 {offsets = [0, 0], sizes = [2, 128], strides = [1, 1]} : vector<2x256xf32> to vector<2x128xf32>
    %544 = arith.addf %543, %539 : vector<2x128xf32>
    %545 = vector.extract_strided_slice %544 {offsets = [0, 0], sizes = [2, 96], strides = [1, 1]} : vector<2x128xf32> to vector<2x96xf32>
    %546 = arith.negf %545 : vector<2x96xf32>
    %547 = math.exp %546 : vector<2x96xf32>
    %cst_154 = arith.constant 1.000000e+00 : f32
    %548 = vector.broadcast %cst_154 : f32 to vector<2x96xf32>
    %549 = arith.addf %548, %547 : vector<2x96xf32>
    %550 = arith.divf %548, %549 : vector<2x96xf32>
    %551 = vector.extract_strided_slice %544 {offsets = [0, 96], sizes = [2, 32], strides = [1, 1]} : vector<2x128xf32> to vector<2x32xf32>
    %552 = math.tanh %551 : vector<2x32xf32>
    %553 = vector.extract_strided_slice %550 {offsets = [0, 32], sizes = [2, 32], strides = [1, 1]} : vector<2x96xf32> to vector<2x32xf32>
    %554 = arith.mulf %553, %535 : vector<2x32xf32>
    %555 = vector.extract_strided_slice %550 {offsets = [0, 0], sizes = [2, 32], strides = [1, 1]} : vector<2x96xf32> to vector<2x32xf32>
    %556 = arith.mulf %555, %552 : vector<2x32xf32>
    %557 = arith.addf %554, %556 : vector<2x32xf32>
    %558 = vector.extract_strided_slice %550 {offsets = [0, 64], sizes = [2, 32], strides = [1, 1]} : vector<2x96xf32> to vector<2x32xf32>
    %559 = math.tanh %557 : vector<2x32xf32>
    %560 = arith.mulf %558, %559 : vector<2x32xf32>
    %c6_i32_155 = arith.constant 6 : i32
    %cst_156 = arith.constant dense<0.000000e+00> : vector<2x128xf32>
    %561 = tpu.matmul %560, %427, %cst_156 {dimension_numbers = #tpu.dot_dimension_numbers<[1], [0], [0], [1], [0, 0, 1, 1], [], []>} : vector<2x32xf32>, vector<32x128xf32>, vector<2x128xf32> -> vector<2x128xf32>
    %c2_i32_157 = arith.constant 2 : i32
    %562 = arith.muli %c6_i32_155, %c2_i32_157 : i32
    %563 = arith.index_cast %562 : i32 to index
    %c0_158 = arith.constant 0 : index
    %564 = vector.load %arg10[%563, %c0_158] : memref<16x256xf32, #tpu.memory_space<vmem>>, vector<2x256xf32>
    %565 = vector.extract_strided_slice %564 {offsets = [0, 0], sizes = [2, 128], strides = [1, 1]} : vector<2x256xf32> to vector<2x128xf32>
    %566 = arith.addf %565, %561 : vector<2x128xf32>
    %567 = vector.extract_strided_slice %566 {offsets = [0, 0], sizes = [2, 96], strides = [1, 1]} : vector<2x128xf32> to vector<2x96xf32>
    %568 = arith.negf %567 : vector<2x96xf32>
    %569 = math.exp %568 : vector<2x96xf32>
    %cst_159 = arith.constant 1.000000e+00 : f32
    %570 = vector.broadcast %cst_159 : f32 to vector<2x96xf32>
    %571 = arith.addf %570, %569 : vector<2x96xf32>
    %572 = arith.divf %570, %571 : vector<2x96xf32>
    %573 = vector.extract_strided_slice %566 {offsets = [0, 96], sizes = [2, 32], strides = [1, 1]} : vector<2x128xf32> to vector<2x32xf32>
    %574 = math.tanh %573 : vector<2x32xf32>
    %575 = vector.extract_strided_slice %572 {offsets = [0, 32], sizes = [2, 32], strides = [1, 1]} : vector<2x96xf32> to vector<2x32xf32>
    %576 = arith.mulf %575, %557 : vector<2x32xf32>
    %577 = vector.extract_strided_slice %572 {offsets = [0, 0], sizes = [2, 32], strides = [1, 1]} : vector<2x96xf32> to vector<2x32xf32>
    %578 = arith.mulf %577, %574 : vector<2x32xf32>
    %579 = arith.addf %576, %578 : vector<2x32xf32>
    %580 = vector.extract_strided_slice %572 {offsets = [0, 64], sizes = [2, 32], strides = [1, 1]} : vector<2x96xf32> to vector<2x32xf32>
    %581 = math.tanh %579 : vector<2x32xf32>
    %582 = arith.mulf %580, %581 : vector<2x32xf32>
    %c7_i32_160 = arith.constant 7 : i32
    %cst_161 = arith.constant dense<0.000000e+00> : vector<2x128xf32>
    %583 = tpu.matmul %582, %427, %cst_161 {dimension_numbers = #tpu.dot_dimension_numbers<[1], [0], [0], [1], [0, 0, 1, 1], [], []>} : vector<2x32xf32>, vector<32x128xf32>, vector<2x128xf32> -> vector<2x128xf32>
    %c2_i32_162 = arith.constant 2 : i32
    %584 = arith.muli %c7_i32_160, %c2_i32_162 : i32
    %585 = arith.index_cast %584 : i32 to index
    %c0_163 = arith.constant 0 : index
    %586 = vector.load %arg10[%585, %c0_163] : memref<16x256xf32, #tpu.memory_space<vmem>>, vector<2x256xf32>
    %587 = vector.extract_strided_slice %586 {offsets = [0, 0], sizes = [2, 128], strides = [1, 1]} : vector<2x256xf32> to vector<2x128xf32>
    %588 = arith.addf %587, %583 : vector<2x128xf32>
    %589 = vector.extract_strided_slice %588 {offsets = [0, 0], sizes = [2, 96], strides = [1, 1]} : vector<2x128xf32> to vector<2x96xf32>
    %590 = arith.negf %589 : vector<2x96xf32>
    %591 = math.exp %590 : vector<2x96xf32>
    %cst_164 = arith.constant 1.000000e+00 : f32
    %592 = vector.broadcast %cst_164 : f32 to vector<2x96xf32>
    %593 = arith.addf %592, %591 : vector<2x96xf32>
    %594 = arith.divf %592, %593 : vector<2x96xf32>
    %595 = vector.extract_strided_slice %588 {offsets = [0, 96], sizes = [2, 32], strides = [1, 1]} : vector<2x128xf32> to vector<2x32xf32>
    %596 = math.tanh %595 : vector<2x32xf32>
    %597 = vector.extract_strided_slice %594 {offsets = [0, 32], sizes = [2, 32], strides = [1, 1]} : vector<2x96xf32> to vector<2x32xf32>
    %598 = arith.mulf %597, %579 : vector<2x32xf32>
    %599 = vector.extract_strided_slice %594 {offsets = [0, 0], sizes = [2, 32], strides = [1, 1]} : vector<2x96xf32> to vector<2x32xf32>
    %600 = arith.mulf %599, %596 : vector<2x32xf32>
    %601 = arith.addf %598, %600 : vector<2x32xf32>
    %602 = vector.extract_strided_slice %594 {offsets = [0, 64], sizes = [2, 32], strides = [1, 1]} : vector<2x96xf32> to vector<2x32xf32>
    %603 = math.tanh %601 : vector<2x32xf32>
    %604 = arith.mulf %602, %603 : vector<2x32xf32>
    %c8_i32_165 = arith.constant 8 : i32
    %c14 = arith.constant 14 : index
    %c0_166 = arith.constant 0 : index
    %605 = vector.load %arg10[%c14, %c0_166] : memref<16x256xf32, #tpu.memory_space<vmem>>, vector<2x256xf32>
    %606 = vector.extract_strided_slice %605 {offsets = [0, 128], sizes = [2, 128], strides = [1, 1]} : vector<2x256xf32> to vector<2x128xf32>
    %607 = vector.extract_strided_slice %606 {offsets = [0, 0], sizes = [2, 96], strides = [1, 1]} : vector<2x128xf32> to vector<2x96xf32>
    %608 = arith.negf %607 : vector<2x96xf32>
    %609 = math.exp %608 : vector<2x96xf32>
    %cst_167 = arith.constant 1.000000e+00 : f32
    %610 = vector.broadcast %cst_167 : f32 to vector<2x96xf32>
    %611 = arith.addf %610, %609 : vector<2x96xf32>
    %612 = arith.divf %610, %611 : vector<2x96xf32>
    %613 = vector.extract_strided_slice %606 {offsets = [0, 96], sizes = [2, 32], strides = [1, 1]} : vector<2x128xf32> to vector<2x32xf32>
    %614 = math.tanh %613 : vector<2x32xf32>
    %615 = vector.extract_strided_slice %612 {offsets = [0, 32], sizes = [2, 32], strides = [1, 1]} : vector<2x96xf32> to vector<2x32xf32>
    %616 = arith.mulf %615, %428 : vector<2x32xf32>
    %617 = vector.extract_strided_slice %612 {offsets = [0, 0], sizes = [2, 32], strides = [1, 1]} : vector<2x96xf32> to vector<2x32xf32>
    %618 = arith.mulf %617, %614 : vector<2x32xf32>
    %619 = arith.addf %616, %618 : vector<2x32xf32>
    %620 = vector.extract_strided_slice %612 {offsets = [0, 64], sizes = [2, 32], strides = [1, 1]} : vector<2x96xf32> to vector<2x32xf32>
    %621 = math.tanh %619 : vector<2x32xf32>
    %622 = arith.mulf %620, %621 : vector<2x32xf32>
    %623 = tpu.concatenate %604, %622 in 1 : vector<2x32xf32>, vector<2x32xf32> -> vector<2x64xf32>
    %c0_168 = arith.constant 0 : index
    %c0_169 = arith.constant 0 : index
    %624 = vector.load %arg7[%c0_168, %c0_169] : memref<64x5xf32, #tpu.memory_space<vmem>>, vector<64x5xf32>
    %cst_170 = arith.constant dense<0.000000e+00> : vector<2x5xf32>
    %625 = tpu.matmul %623, %624, %cst_170 {dimension_numbers = #tpu.dot_dimension_numbers<[1], [0], [0], [1], [0, 0, 1, 1], [], []>} : vector<2x64xf32>, vector<64x5xf32>, vector<2x5xf32> -> vector<2x5xf32>
    %c0_171 = arith.constant 0 : index
    %c0_172 = arith.constant 0 : index
    %626 = vector.load %arg8[%c0_171, %c0_172] : memref<1x5xf32, #tpu.memory_space<vmem>>, vector<1x5xf32>
    %627 = vector.broadcast %626 : vector<1x5xf32> to vector<2x5xf32>
    %628 = arith.addf %625, %627 : vector<2x5xf32>
    %c0_173 = arith.constant 0 : index
    %c0_174 = arith.constant 0 : index
    %629 = vector.load %arg9[%c0_173, %c0_174] : memref<2x5xf32, #tpu.memory_space<vmem>>, vector<2x5xf32>
    tpu.vector_store %arg9[%c0_173, %c0_174], %628 {strides = array<i32>} : memref<2x5xf32, #tpu.memory_space<vmem>>, vector<2x5xf32>,
    return
  }
}

</mosaic_0001>

<llo_original>
// kernel: tpu_custom_call.1
$region0: #{tpu_custom_call.1}
  #allocation0 [shape = 'u32[]', space=smem, size = 0x4, offset = 0x4, fixed_abs, tag = 'smem constant byte address 0x4 - core index']
  #allocation1 [shape = 'u32[144,128]{1,0:T(1,128)}', space=vmem, size = 0x12000, scoped, tag = 'internal scratch']
  #allocation2 [shape = 'f32[16,256]{1,0:T(8,128)}', space=vmem, size = 0x4000, scoped, tag = 'scratch operand']
  #allocation3 [shape = 'f32[16,64]{1,0:T(8,128)}', space=vmem, size = 0x2000, scoped, tag = 'scratch operand']
  %s0 = inlined_call_operand.hbm [shape: f32[16,16], index: 0, kind: input, shape index: {}]
  %s1 = inlined_call_operand.hbm [shape: f32[16,256], index: 1, kind: input, shape index: {}]
  %s2 = inlined_call_operand.vmem [shape: f32[64,128], index: 2, kind: input, shape index: {}]
  %s3 = inlined_call_operand.vmem [shape: f32[1,256], index: 3, kind: input, shape index: {}]
  %s4 = inlined_call_operand.hbm [shape: f32[64,256], index: 4, kind: input, shape index: {}]
  %s5 = inlined_call_operand.hbm [shape: f32[64,128], index: 5, kind: input, shape index: {}]
  %s6 = inlined_call_operand.vmem [shape: f32[1,256], index: 6, kind: input, shape index: {}]
  %s7 = inlined_call_operand.vmem [shape: f32[64,5], index: 7, kind: input, shape index: {}]
  %s8 = inlined_call_operand.vmem [shape: f32[1,5], index: 8, kind: input, shape index: {}]
  %s9 = inlined_call_operand.hbm [shape: f32[2,5], index: 9, kind: output, shape index: {}]
  %s10 = sld [smem:[#allocation0]]
  $region62: #{tpu_custom_call.1} parent=0
    _
  %s12 = ssub.s32 1, %s10
  %s13 = scalar_select 0, %s12, %s10
  $region1: #{tpu_custom_call.1} parent=0
    #allocation4 [shape = 'u8[8192]{0}', space=vmem, size = 0x2000, scoped, tag = 'input window, operand 0, single buffered']
    #allocation5 [shape = 's32[1]{0}', space=sflag, size = 0x4, scoped, tag = 'scoped memory for tpu_custom_call.1']
    #allocation6 [shape = 's32[1]{0}', space=sflag, size = 0x4, scoped, tag = 'scoped memory for tpu_custom_call.1']
    #allocation7 [shape = 'u8[16384]{0}', space=vmem, size = 0x4000, scoped, tag = 'input window, operand 1, single buffered']
    #allocation8 [shape = 's32[1]{0}', space=sflag, size = 0x4, scoped, tag = 'scoped memory for tpu_custom_call.1']
    #allocation9 [shape = 'u8[65536]{0}', space=vmem, size = 0x10000, scoped, tag = 'input window, operand 4, single buffered']
    #allocation10 [shape = 'u8[32768]{0}', space=vmem, size = 0x8000, scoped, tag = 'input window, operand 5, single buffered']
    #allocation11 [shape = 's32[1]{0}', space=sflag, size = 0x4, scoped, tag = 'scoped memory for tpu_custom_call.1']
    #allocation12 [shape = 'u8[1024]{0}', space=vmem, size = 0x400, scoped, tag = 'output window, operand 0, single buffered']
    %14 = vsyncpa [#allocation5], 0
    %15 = vsyncpa [#allocation8], 0
    %16 = vsyncpa [#allocation11], 0
    %17 = vsyncpa [#allocation6], 0
    // Predicated region
    $region2: #{tpu_custom_call.1} parent=1 // pred_check
      _
    $region3: #{tpu_custom_call.1} parent=1 // pred_check_branch
      %19 = sbr.rel (0) target = $region5
    $region4: #{tpu_custom_call.1} parent=1 // pred_region
      %s21 = ssub.s32 256, 256
      %22 = vsyncadd [#allocation5], %s21
      %s23 = sshll.u32 [#allocation4], 4
      %s24 = int_to_ptr.vmem [resolvable:$true] %s23
      %29 = dma.hbm_to_vmem [thread:$0]  %s0, 256, %s24, [#allocation5], 128, 128, 8
    $region5: #{tpu_custom_call.1} parent=1 // pred_fallthru
      _
    // Predicated region
    $region6: #{tpu_custom_call.1} parent=1 // pred_check
      _
    $region7: #{tpu_custom_call.1} parent=1 // pred_check_branch
      %31 = sbr.rel (0) target = $region9
    $region8: #{tpu_custom_call.1} parent=1 // pred_region
      %s33 = ssub.s32 512, 512
      %34 = vsyncadd [#allocation8], %s33
      %s35 = sshll.u32 [#allocation7], 4
      %s36 = int_to_ptr.vmem [resolvable:$true] %s35
      %41 = dma.hbm_to_vmem [thread:$0]  %s1, 512, %s36, [#allocation8], 256, 256, 16
    $region9: #{tpu_custom_call.1} parent=1 // pred_fallthru
      _
    // Predicated region
    $region10: #{tpu_custom_call.1} parent=1 // pred_check
      _
    $region11: #{tpu_custom_call.1} parent=1 // pred_check_branch
      %43 = sbr.rel (0) target = $region13
    $region12: #{tpu_custom_call.1} parent=1 // pred_region
      _
    $region13: #{tpu_custom_call.1} parent=1 // pred_fallthru
      _
    // Predicated region
    $region14: #{tpu_custom_call.1} parent=1 // pred_check
      _
    $region15: #{tpu_custom_call.1} parent=1 // pred_check_branch
      %45 = sbr.rel (0) target = $region17
    $region16: #{tpu_custom_call.1} parent=1 // pred_region
      _
    $region17: #{tpu_custom_call.1} parent=1 // pred_fallthru
      _
    // Predicated region
    $region18: #{tpu_custom_call.1} parent=1 // pred_check
      _
    $region19: #{tpu_custom_call.1} parent=1 // pred_check_branch
      %47 = sbr.rel (0) target = $region21
    $region20: #{tpu_custom_call.1} parent=1 // pred_region
      %s49 = ssub.s32 2048, 2048
      %50 = vsyncadd [#allocation8], %s49
      %s51 = sshll.u32 [#allocation9], 4
      %s52 = int_to_ptr.vmem [resolvable:$true] %s51
      %57 = dma.hbm_to_vmem [thread:$0]  %s4, 2048, %s52, [#allocation8], 256, 256, 16
    $region21: #{tpu_custom_call.1} parent=1 // pred_fallthru
      _
    // Predicated region
    $region22: #{tpu_custom_call.1} parent=1 // pred_check
      _
    $region23: #{tpu_custom_call.1} parent=1 // pred_check_branch
      %59 = sbr.rel (0) target = $region25
    $region24: #{tpu_custom_call.1} parent=1 // pred_region
      %s61 = ssub.s32 1024, 1024
      %62 = vsyncadd [#allocation11], %s61
      %s63 = sshll.u32 [#allocation10], 4
      %s64 = int_to_ptr.vmem [resolvable:$true] %s63
      %69 = dma.hbm_to_vmem [thread:$0]  %s5, 1024, %s64, [#allocation11], 128, 128, 8
    $region25: #{tpu_custom_call.1} parent=1 // pred_fallthru
      _
    // Predicated region
    $region26: #{tpu_custom_call.1} parent=1 // pred_check
      _
    $region27: #{tpu_custom_call.1} parent=1 // pred_check_branch
      %71 = sbr.rel (0) target = $region29
    $region28: #{tpu_custom_call.1} parent=1 // pred_region
      _
    $region29: #{tpu_custom_call.1} parent=1 // pred_fallthru
      _
    // Predicated region
    $region30: #{tpu_custom_call.1} parent=1 // pred_check
      _
    $region31: #{tpu_custom_call.1} parent=1 // pred_check_branch
      %73 = sbr.rel (0) target = $region33
    $region32: #{tpu_custom_call.1} parent=1 // pred_region
      _
    $region33: #{tpu_custom_call.1} parent=1 // pred_fallthru
      _
    // Predicated region
    $region34: #{tpu_custom_call.1} parent=1 // pred_check
      _
    $region35: #{tpu_custom_call.1} parent=1 // pred_check_branch
      %75 = sbr.rel (0) target = $region37
    $region36: #{tpu_custom_call.1} parent=1 // pred_region
      _
    $region37: #{tpu_custom_call.1} parent=1 // pred_fallthru
      _
    // Predicated region
    $region38: #{tpu_custom_call.1} parent=1 // pred_check
      _
    $region39: #{tpu_custom_call.1} parent=1 // pred_check_branch
      %77 = sbr.rel (0) target = $region41
    $region40: #{tpu_custom_call.1} parent=1 // pred_region
      %78 = dma.done [#allocation5], 256
    $region41: #{tpu_custom_call.1} parent=1 // pred_fallthru
      _
    // Predicated region
    $region42: #{tpu_custom_call.1} parent=1 // pred_check
      _
    $region43: #{tpu_custom_call.1} parent=1 // pred_check_branch
      %80 = sbr.rel (0) target = $region45
    $region44: #{tpu_custom_call.1} parent=1 // pred_region
      %81 = dma.done [#allocation8], 512
    $region45: #{tpu_custom_call.1} parent=1 // pred_fallthru
      _
    // Predicated region
    $region46: #{tpu_custom_call.1} parent=1 // pred_check
      _
    $region47: #{tpu_custom_call.1} parent=1 // pred_check_branch
      %83 = sbr.rel (0) target = $region49
    $region48: #{tpu_custom_call.1} parent=1 // pred_region
      %84 = dma.done [#allocation8], 2048
    $region49: #{tpu_custom_call.1} parent=1 // pred_fallthru
      _
    // Predicated region
    $region50: #{tpu_custom_call.1} parent=1 // pred_check
      _
    $region51: #{tpu_custom_call.1} parent=1 // pred_check_branch
      %86 = sbr.rel (0) target = $region53
    $region52: #{tpu_custom_call.1} parent=1 // pred_region
      %87 = dma.done [#allocation11], 1024
    $region53: #{tpu_custom_call.1} parent=1 // pred_fallthru
      _
    %v88 = vld [vmem:[#allocation4] sm:$0xff]
    %v89 = vld [vmem:[#allocation4 + $0x8] sm:$0xff]
    %v90 = vld [vmem:[#allocation7] sm:$0xff]
    %v91 = vld [vmem:[#allocation7 + $0x8] sm:$0xff]
    %v92 = vld [vmem:[#allocation7 + $0x10] sm:$0xff]
    %v93 = vld [vmem:[#allocation7 + $0x18] sm:$0xff]
    %v94 = vld [vmem:[%s3] sm:$0x3]
    %v96 = vlaneseq
    %v97 = vshrl.u32 %v96, 7
    %v98 = vsub.s32 0, %v97
    %v99 = vrot.slane %v94, %v98
    %v100 = vlaneseq
    %v101 = vshrl.u32 %v100, 7
    %v102 = vsub.s32 1, %v101
    %v103 = vrot.slane %v94, %v102
    %vm106 = vcmask 130048
    %v108 = vsel %vm106, %v88, 0
    %v111 = vsel %vm106, %v89, 0
    %113 = vmatprep.subr.mxu0 0.0
    %114 = vmatpush1.msra.mxu0 0.0
    %115 = vmatprep.subr.mxu0 0.0
    %116 = vmatpush1.msra.mxu0 0.0
    %117 = vmatprep.subr.mxu0 0.0
    %118 = vmatpush1.msra.mxu0 0.0
    %119 = vmatprep.subr.mxu0 0.0
    %120 = vmatpush1.msra.mxu0 0.0
    %121 = vmatprep.subr.mxu0 0.0
    %122 = vmatpush1.msra.mxu0 0.0
    %123 = vmatprep.subr.mxu0 0.0
    %124 = vmatpush1.msra.mxu0 0.0
    %125 = vmatprep.subr.mxu0 0.0
    %126 = vmatpush1.msra.mxu0 0.0
    %127 = vmatprep.subr.mxu0 0.0
    %128 = vmatpush1.msra.mxu0 0.0
    %129 = vmatprep.subr.mxu0 0.0
    %130 = vmatpush1.msra.mxu0 0.0
    %131 = vmatprep.subr.mxu0 0.0
    %132 = vmatpush1.msra.mxu0 0.0
    %133 = vmatprep.subr.mxu0 0.0
    %134 = vmatpush1.msra.mxu0 0.0
    %135 = vmatprep.subr.mxu0 0.0
    %136 = vmatpush1.msra.mxu0 0.0
    %137 = vmatprep.subr.mxu0 0.0
    %138 = vmatpush1.msra.mxu0 0.0
    %139 = vmatprep.subr.mxu0 0.0
    %140 = vmatpush1.msra.mxu0 0.0
    %141 = vmatprep.subr.mxu0 %v93
    %142 = vmatpush1.msra.mxu0 %v92
    %143 = vmatprep.subr.mxu0 %v91
    %144 = vmatpush1.msra.mxu0 %v90
    %145 = vmatprep.subr.mxu0 0.0
    %146 = vmatpush2.msra.mxu0 0.0
    %147 = vmatprep.subr.mxu0 0.0
    %148 = vmatpush2.msra.mxu0 0.0
    %149 = vmatprep.subr.mxu0 0.0
    %150 = vmatpush2.msra.mxu0 0.0
    %151 = vmatprep.subr.mxu0 0.0
    %152 = vmatpush2.msra.mxu0 0.0
    %153 = vmatprep.subr.mxu0 0.0
    %154 = vmatpush2.msra.mxu0 0.0
    %155 = vmatprep.subr.mxu0 0.0
    %156 = vmatpush2.msra.mxu0 0.0
    %157 = vmatprep.subr.mxu0 0.0
    %158 = vmatpush2.msra.mxu0 0.0
    %159 = vmatprep.subr.mxu0 0.0
    %160 = vmatpush2.msra.mxu0 0.0
    %161 = vmatprep.subr.mxu0 0.0
    %162 = vmatpush2.msra.mxu0 0.0
    %163 = vmatprep.subr.mxu0 0.0
    %164 = vmatpush2.msra.mxu0 0.0
    %165 = vmatprep.subr.mxu0 0.0
    %166 = vmatpush2.msra.mxu0 0.0
    %167 = vmatprep.subr.mxu0 0.0
    %168 = vmatpush2.msra.mxu0 0.0
    %169 = vmatprep.subr.mxu0 0.0
    %170 = vmatpush2.msra.mxu0 0.0
    %171 = vmatprep.subr.mxu0 0.0
    %172 = vmatpush2.msra.mxu0 0.0
    %173 = vmatprep.subr.mxu0 0.0
    %174 = vmatpush2.msra.mxu0 0.0
    %175 = vmatprep.subr.mxu0 0.0
    %176 = vmatpush2.msra.mxu0 0.0
    %177 = vmatprep.mubr.f32.mxu0 0.0
    %178 = vmatmul.mubr.f32.gmra.mxu0 %v108
    %v179 = vpop.f32.mrf.mxu0
    %v180 = vadd.f32 %v99, %v179
    %v181 = vpop.f32.mrf.mxu0
    %v182 = vadd.f32 %v103, %v181
    %183 = vmatprep.mubr.f32.mxu0 0.0
    %184 = vmatmul.mubr.f32.gmra.mxu0 %v111
    %v185 = vpop.f32.mrf.mxu0
    %v186 = vadd.f32 %v99, %v185
    %v187 = vpop.f32.mrf.mxu0
    %v188 = vadd.f32 %v103, %v187
    %189 = vdwg.mxu0
    %190 = vst [vmem:[#allocation2] sm:$0xff] %v180
    %191 = vst [vmem:[#allocation2 + $0x8] sm:$0xff] %v182
    %192 = vst [vmem:[#allocation2 + $0x10] sm:$0xff] %v186
    %193 = vst [vmem:[#allocation2 + $0x18] sm:$0xff] %v188
    %v194 = vld [vmem:[%s2] sm:$0xff]
    %v195 = vld [vmem:[%s2 + $0x8] sm:$0xff]
    %v196 = vld [vmem:[%s2 + $0x10] sm:$0xff]
    %v197 = vld [vmem:[%s2 + $0x18] sm:$0xff]
    %v198 = vld [vmem:[%s2 + $0x20] sm:$0xff]
    %v199 = vld [vmem:[%s2 + $0x28] sm:$0xff]
    %v200 = vld [vmem:[%s2 + $0x30] sm:$0xff]
    %v201 = vld [vmem:[%s2 + $0x38] sm:$0xff]
    %vm202 = vcmask 261120
    %v204 = vsel %vm202, 0.0, 0
    %206 = vmatprep.subr.mxu0 0.0
    %207 = vmatpush1.msra.mxu0 0.0
    %208 = vmatprep.subr.mxu0 0.0
    %209 = vmatpush1.msra.mxu0 0.0
    %210 = vmatprep.subr.mxu0 0.0
    %211 = vmatpush1.msra.mxu0 0.0
    %212 = vmatprep.subr.mxu0 0.0
    %213 = vmatpush1.msra.mxu0 0.0
    %214 = vmatprep.subr.mxu0 0.0
    %215 = vmatpush1.msra.mxu0 0.0
    %216 = vmatprep.subr.mxu0 0.0
    %217 = vmatpush1.msra.mxu0 0.0
    %218 = vmatprep.subr.mxu0 0.0
    %219 = vmatpush1.msra.mxu0 0.0
    %220 = vmatprep.subr.mxu0 0.0
    %221 = vmatpush1.msra.mxu0 0.0
    %222 = vmatprep.subr.mxu0 0.0
    %223 = vmatpush1.msra.mxu0 0.0
    %224 = vmatprep.subr.mxu0 0.0
    %225 = vmatpush1.msra.mxu0 0.0
    %226 = vmatprep.subr.mxu0 0.0
    %227 = vmatpush1.msra.mxu0 0.0
    %228 = vmatprep.subr.mxu0 0.0
    %229 = vmatpush1.msra.mxu0 0.0
    %230 = vmatprep.subr.mxu0 0.0
    %231 = vmatpush1.msra.mxu0 %v197
    %232 = vmatprep.subr.mxu0 0.0
    %233 = vmatpush1.msra.mxu0 %v196
    %234 = vmatprep.subr.mxu0 0.0
    %235 = vmatpush1.msra.mxu0 %v195
    %236 = vmatprep.subr.mxu0 0.0
    %237 = vmatpush1.msra.mxu0 %v194
    %238 = vmatprep.subr.mxu0 0.0
    %239 = vmatpush2.msra.mxu0 0.0
    %240 = vmatprep.subr.mxu0 0.0
    %241 = vmatpush2.msra.mxu0 0.0
    %242 = vmatprep.subr.mxu0 0.0
    %243 = vmatpush2.msra.mxu0 0.0
    %244 = vmatprep.subr.mxu0 0.0
    %245 = vmatpush2.msra.mxu0 0.0
    %246 = vmatprep.subr.mxu0 0.0
    %247 = vmatpush2.msra.mxu0 0.0
    %248 = vmatprep.subr.mxu0 0.0
    %249 = vmatpush2.msra.mxu0 0.0
    %250 = vmatprep.subr.mxu0 0.0
    %251 = vmatpush2.msra.mxu0 0.0
    %252 = vmatprep.subr.mxu0 0.0
    %253 = vmatpush2.msra.mxu0 0.0
    %254 = vmatprep.subr.mxu0 0.0
    %255 = vmatpush2.msra.mxu0 0.0
    %256 = vmatprep.subr.mxu0 0.0
    %257 = vmatpush2.msra.mxu0 0.0
    %258 = vmatprep.subr.mxu0 0.0
    %259 = vmatpush2.msra.mxu0 0.0
    %260 = vmatprep.subr.mxu0 0.0
    %261 = vmatpush2.msra.mxu0 0.0
    %262 = vmatprep.subr.mxu0 0.0
    %263 = vmatpush2.msra.mxu0 0.0
    %264 = vmatprep.subr.mxu0 0.0
    %265 = vmatpush2.msra.mxu0 0.0
    %266 = vmatprep.subr.mxu0 0.0
    %267 = vmatpush2.msra.mxu0 0.0
    %268 = vmatprep.subr.mxu0 0.0
    %269 = vmatpush2.msra.mxu0 0.0
    %270 = vmatprep.mubr.f32.mxu0 0.0
    %271 = vmatmul.mubr.f32.gmra.mxu0 %v204
    %v272 = vpop.f32.mrf.mxu0
    %v273 = vadd.f32 0.0, %v272
    %v274 = vpop.f32.mrf.mxu0
    %275 = vdwg.mxu0
    %276 = vmatprep.subr.mxu0 0.0
    %277 = vmatpush1.msra.mxu0 0.0
    %278 = vmatprep.subr.mxu0 0.0
    %279 = vmatpush1.msra.mxu0 0.0
    %280 = vmatprep.subr.mxu0 0.0
    %281 = vmatpush1.msra.mxu0 0.0
    %282 = vmatprep.subr.mxu0 0.0
    %283 = vmatpush1.msra.mxu0 0.0
    %284 = vmatprep.subr.mxu0 0.0
    %285 = vmatpush1.msra.mxu0 0.0
    %286 = vmatprep.subr.mxu0 0.0
    %287 = vmatpush1.msra.mxu0 0.0
    %288 = vmatprep.subr.mxu0 0.0
    %289 = vmatpush1.msra.mxu0 0.0
    %290 = vmatprep.subr.mxu0 0.0
    %291 = vmatpush1.msra.mxu0 0.0
    %292 = vmatprep.subr.mxu0 0.0
    %293 = vmatpush1.msra.mxu0 0.0
    %294 = vmatprep.subr.mxu0 0.0
    %295 = vmatpush1.msra.mxu0 0.0
    %296 = vmatprep.subr.mxu0 0.0
    %297 = vmatpush1.msra.mxu0 0.0
    %298 = vmatprep.subr.mxu0 0.0
    %299 = vmatpush1.msra.mxu0 0.0
    %300 = vmatprep.subr.mxu0 0.0
    %301 = vmatpush1.msra.mxu0 %v201
    %302 = vmatprep.subr.mxu0 0.0
    %303 = vmatpush1.msra.mxu0 %v200
    %304 = vmatprep.subr.mxu0 0.0
    %305 = vmatpush1.msra.mxu0 %v199
    %306 = vmatprep.subr.mxu0 0.0
    %307 = vmatpush1.msra.mxu0 %v198
    %308 = vmatprep.subr.mxu0 0.0
    %309 = vmatpush2.msra.mxu0 0.0
    %310 = vmatprep.subr.mxu0 0.0
    %311 = vmatpush2.msra.mxu0 0.0
    %312 = vmatprep.subr.mxu0 0.0
    %313 = vmatpush2.msra.mxu0 0.0
    %314 = vmatprep.subr.mxu0 0.0
    %315 = vmatpush2.msra.mxu0 0.0
    %316 = vmatprep.subr.mxu0 0.0
    %317 = vmatpush2.msra.mxu0 0.0
    %318 = vmatprep.subr.mxu0 0.0
    %319 = vmatpush2.msra.mxu0 0.0
    %320 = vmatprep.subr.mxu0 0.0
    %321 = vmatpush2.msra.mxu0 0.0
    %322 = vmatprep.subr.mxu0 0.0
    %323 = vmatpush2.msra.mxu0 0.0
    %324 = vmatprep.subr.mxu0 0.0
    %325 = vmatpush2.msra.mxu0 0.0
    %326 = vmatprep.subr.mxu0 0.0
    %327 = vmatpush2.msra.mxu0 0.0
    %328 = vmatprep.subr.mxu0 0.0
    %329 = vmatpush2.msra.mxu0 0.0
    %330 = vmatprep.subr.mxu0 0.0
    %331 = vmatpush2.msra.mxu0 0.0
    %332 = vmatprep.subr.mxu0 0.0
    %333 = vmatpush2.msra.mxu0 0.0
    %334 = vmatprep.subr.mxu0 0.0
    %335 = vmatpush2.msra.mxu0 0.0
    %336 = vmatprep.subr.mxu0 0.0
    %337 = vmatpush2.msra.mxu0 0.0
    %338 = vmatprep.subr.mxu0 0.0
    %339 = vmatpush2.msra.mxu0 0.0
    %340 = vmatprep.mubr.f32.mxu0 0.0
    %341 = vmatmul.mubr.f32.gmra.mxu0 %v204
    %v342 = vpop.f32.mrf.mxu0
    %v343 = vadd.f32 0.0, %v342
    %v344 = vpop.f32.mrf.mxu0
    %345 = vdwg.mxu0
    %v346 = vld [vmem:[#allocation2] sm:$0x3]
    %v347 = vld [vmem:[#allocation2 + $0x18] sm:$0xc0]
    %v348 = vadd.f32 %v346, %v273
    %v349 = vxor.u32 %v348, 2147483648
    %v350 = vmul.f32 %v349, 1.442695
    %v351 = vpow.pop %v350
    %v352 = vadd.f32 %v351, 1.0
    %v353 = vrcp.pop %v352
    %v354 = vmul.f32 1.0, %v353
    %v355 = vtanh.pop %v348
    %v356 = vmul.f32 %v354, 0.0
    %358 = vrot.lane.b32.xlu0 %v355, 32
    %v359 = vpop.permute.xlu0 %358
    %v361 = vmul.f32 %v354, %v359
    %363 = vrot.lane.b32.xlu0 %v361, 32
    %v364 = vpop.permute.xlu0 %363
    %v366 = vadd.f32 %v356, %v364
    %v367 = vtanh.pop %v366
    %369 = vrot.lane.b32.xlu0 %v367, 32
    %v370 = vpop.permute.xlu0 %369
    %v372 = vmul.f32 %v354, %v370
    %v374 = vrot.slane %v343, 2
    %v376 = vadd.f32 %v347, %v374
    %v377 = vxor.u32 %v376, 2147483648
    %v378 = vmul.f32 %v377, 1.442695
    %v379 = vpow.pop %v378
    %v380 = vadd.f32 %v379, 1.0
    %v381 = vrcp.pop %v380
    %v382 = vmul.f32 1.0, %v381
    %v383 = vtanh.pop %v376
    %v384 = vmul.f32 %v382, 0.0
    %386 = vrot.lane.b32.xlu0 %v383, 32
    %v387 = vpop.permute.xlu0 %386
    %v389 = vmul.f32 %v382, %v387
    %391 = vrot.lane.b32.xlu0 %v389, 32
    %v392 = vpop.permute.xlu0 %391
    %v394 = vadd.f32 %v384, %v392
    %v395 = vtanh.pop %v394
    %397 = vrot.lane.b32.xlu0 %v395, 32
    %v398 = vpop.permute.xlu0 %397
    %v400 = vmul.f32 %v382, %v398
    %402 = vrot.lane.b32.xlu0 %v372, 64
    %v403 = vpop.permute.xlu0 %402
    %vm405 = vcmask 254976
    %406 = vst.msk [vmem:[#allocation3] sm:$0x3] %vm405, %v403
    %408 = vrot.lane.b32.xlu0 %v400, 96
    %v409 = vpop.permute.xlu0 %408
    %vm411 = vcmask 523526
    %412 = vst.msk [vmem:[#allocation3 + $0x8] sm:$0xc0] %vm411, %v409
    %v413 = vsel %vm202, %v403, 0
    %415 = vmatprep.subr.mxu0 0.0
    %416 = vmatpush1.msra.mxu0 0.0
    %417 = vmatprep.subr.mxu0 0.0
    %418 = vmatpush1.msra.mxu0 0.0
    %419 = vmatprep.subr.mxu0 0.0
    %420 = vmatpush1.msra.mxu0 0.0
    %421 = vmatprep.subr.mxu0 0.0
    %422 = vmatpush1.msra.mxu0 0.0
    %423 = vmatprep.subr.mxu0 0.0
    %424 = vmatpush1.msra.mxu0 0.0
    %425 = vmatprep.subr.mxu0 0.0
    %426 = vmatpush1.msra.mxu0 0.0
    %427 = vmatprep.subr.mxu0 0.0
    %428 = vmatpush1.msra.mxu0 0.0
    %429 = vmatprep.subr.mxu0 0.0
    %430 = vmatpush1.msra.mxu0 0.0
    %431 = vmatprep.subr.mxu0 0.0
    %432 = vmatpush1.msra.mxu0 0.0
    %433 = vmatprep.subr.mxu0 0.0
    %434 = vmatpush1.msra.mxu0 0.0
    %435 = vmatprep.subr.mxu0 0.0
    %436 = vmatpush1.msra.mxu0 0.0
    %437 = vmatprep.subr.mxu0 0.0
    %438 = vmatpush1.msra.mxu0 0.0
    %439 = vmatprep.subr.mxu0 0.0
    %440 = vmatpush1.msra.mxu0 %v197
    %441 = vmatprep.subr.mxu0 0.0
    %442 = vmatpush1.msra.mxu0 %v196
    %443 = vmatprep.subr.mxu0 0.0
    %444 = vmatpush1.msra.mxu0 %v195
    %445 = vmatprep.subr.mxu0 0.0
    %446 = vmatpush1.msra.mxu0 %v194
    %447 = vmatprep.subr.mxu0 0.0
    %448 = vmatpush2.msra.mxu0 0.0
    %449 = vmatprep.subr.mxu0 0.0
    %450 = vmatpush2.msra.mxu0 0.0
    %451 = vmatprep.subr.mxu0 0.0
    %452 = vmatpush2.msra.mxu0 0.0
    %453 = vmatprep.subr.mxu0 0.0
    %454 = vmatpush2.msra.mxu0 0.0
    %455 = vmatprep.subr.mxu0 0.0
    %456 = vmatpush2.msra.mxu0 0.0
    %457 = vmatprep.subr.mxu0 0.0
    %458 = vmatpush2.msra.mxu0 0.0
    %459 = vmatprep.subr.mxu0 0.0
    %460 = vmatpush2.msra.mxu0 0.0
    %461 = vmatprep.subr.mxu0 0.0
    %462 = vmatpush2.msra.mxu0 0.0
    %463 = vmatprep.subr.mxu0 0.0
    %464 = vmatpush2.msra.mxu0 0.0
    %465 = vmatprep.subr.mxu0 0.0
    %466 = vmatpush2.msra.mxu0 0.0
    %467 = vmatprep.subr.mxu0 0.0
    %468 = vmatpush2.msra.mxu0 0.0
    %469 = vmatprep.subr.mxu0 0.0
    %470 = vmatpush2.msra.mxu0 0.0
    %471 = vmatprep.subr.mxu0 0.0
    %472 = vmatpush2.msra.mxu0 0.0
    %473 = vmatprep.subr.mxu0 0.0
    %474 = vmatpush2.msra.mxu0 0.0
    %475 = vmatprep.subr.mxu0 0.0
    %476 = vmatpush2.msra.mxu0 0.0
    %477 = vmatprep.subr.mxu0 0.0
    %478 = vmatpush2.msra.mxu0 0.0
    %479 = vmatprep.mubr.f32.mxu0 0.0
    %480 = vmatmul.mubr.f32.gmra.mxu0 %v413
    %v481 = vpop.f32.mrf.mxu0
    %v482 = vadd.f32 0.0, %v481
    %v483 = vpop.f32.mrf.mxu0
    %484 = vdwg.mxu0
    %v485 = vrot.slane %v400, 6
    %486 = vrot.lane.b32.xlu0 %v485, 64
    %v487 = vpop.permute.xlu0 %486
    %v488 = vsel %vm202, %v487, 0
    %490 = vmatprep.subr.mxu0 0.0
    %491 = vmatpush1.msra.mxu0 0.0
    %492 = vmatprep.subr.mxu0 0.0
    %493 = vmatpush1.msra.mxu0 0.0
    %494 = vmatprep.subr.mxu0 0.0
    %495 = vmatpush1.msra.mxu0 0.0
    %496 = vmatprep.subr.mxu0 0.0
    %497 = vmatpush1.msra.mxu0 0.0
    %498 = vmatprep.subr.mxu0 0.0
    %499 = vmatpush1.msra.mxu0 0.0
    %500 = vmatprep.subr.mxu0 0.0
    %501 = vmatpush1.msra.mxu0 0.0
    %502 = vmatprep.subr.mxu0 0.0
    %503 = vmatpush1.msra.mxu0 0.0
    %504 = vmatprep.subr.mxu0 0.0
    %505 = vmatpush1.msra.mxu0 0.0
    %506 = vmatprep.subr.mxu0 0.0
    %507 = vmatpush1.msra.mxu0 0.0
    %508 = vmatprep.subr.mxu0 0.0
    %509 = vmatpush1.msra.mxu0 0.0
    %510 = vmatprep.subr.mxu0 0.0
    %511 = vmatpush1.msra.mxu0 0.0
    %512 = vmatprep.subr.mxu0 0.0
    %513 = vmatpush1.msra.mxu0 0.0
    %514 = vmatprep.subr.mxu0 0.0
    %515 = vmatpush1.msra.mxu0 %v201
    %516 = vmatprep.subr.mxu0 0.0
    %517 = vmatpush1.msra.mxu0 %v200
    %518 = vmatprep.subr.mxu0 0.0
    %519 = vmatpush1.msra.mxu0 %v199
    %520 = vmatprep.subr.mxu0 0.0
    %521 = vmatpush1.msra.mxu0 %v198
    %522 = vmatprep.subr.mxu0 0.0
    %523 = vmatpush2.msra.mxu0 0.0
    %524 = vmatprep.subr.mxu0 0.0
    %525 = vmatpush2.msra.mxu0 0.0
    %526 = vmatprep.subr.mxu0 0.0
    %527 = vmatpush2.msra.mxu0 0.0
    %528 = vmatprep.subr.mxu0 0.0
    %529 = vmatpush2.msra.mxu0 0.0
    %530 = vmatprep.subr.mxu0 0.0
    %531 = vmatpush2.msra.mxu0 0.0
    %532 = vmatprep.subr.mxu0 0.0
    %533 = vmatpush2.msra.mxu0 0.0
    %534 = vmatprep.subr.mxu0 0.0
    %535 = vmatpush2.msra.mxu0 0.0
    %536 = vmatprep.subr.mxu0 0.0
    %537 = vmatpush2.msra.mxu0 0.0
    %538 = vmatprep.subr.mxu0 0.0
    %539 = vmatpush2.msra.mxu0 0.0
    %540 = vmatprep.subr.mxu0 0.0
    %541 = vmatpush2.msra.mxu0 0.0
    %542 = vmatprep.subr.mxu0 0.0
    %543 = vmatpush2.msra.mxu0 0.0
    %544 = vmatprep.subr.mxu0 0.0
    %545 = vmatpush2.msra.mxu0 0.0
    %546 = vmatprep.subr.mxu0 0.0
    %547 = vmatpush2.msra.mxu0 0.0
    %548 = vmatprep.subr.mxu0 0.0
    %549 = vmatpush2.msra.mxu0 0.0
    %550 = vmatprep.subr.mxu0 0.0
    %551 = vmatpush2.msra.mxu0 0.0
    %552 = vmatprep.subr.mxu0 0.0
    %553 = vmatpush2.msra.mxu0 0.0
    %554 = vmatprep.mubr.f32.mxu0 0.0
    %555 = vmatmul.mubr.f32.gmra.mxu0 %v488
    %v556 = vpop.f32.mrf.mxu0
    %v557 = vadd.f32 0.0, %v556
    %v558 = vpop.f32.mrf.mxu0
    %559 = vdwg.mxu0
    %v560 = vld [vmem:[#allocation2] sm:$0xc]
    %v561 = vld [vmem:[#allocation2 + $0x18] sm:$0x30]
    %v563 = vrot.slane %v482, 6
    %v565 = vadd.f32 %v560, %v563
    %v566 = vxor.u32 %v565, 2147483648
    %v567 = vmul.f32 %v566, 1.442695
    %v568 = vpow.pop %v567
    %v569 = vadd.f32 %v568, 1.0
    %v570 = vrcp.pop %v569
    %v571 = vmul.f32 1.0, %v570
    %v572 = vtanh.pop %v565
    %v574 = vrot.slane %v366, 6
    %v576 = vmul.f32 %v571, %v574
    %578 = vrot.lane.b32.xlu0 %v572, 32
    %v579 = vpop.permute.xlu0 %578
    %v581 = vmul.f32 %v571, %v579
    %583 = vrot.lane.b32.xlu0 %v581, 32
    %v584 = vpop.permute.xlu0 %583
    %v586 = vadd.f32 %v576, %v584
    %v587 = vtanh.pop %v586
    %589 = vrot.lane.b32.xlu0 %v587, 32
    %v590 = vpop.permute.xlu0 %589
    %v592 = vmul.f32 %v571, %v590
    %v594 = vrot.slane %v557, 4
    %v596 = vadd.f32 %v561, %v594
    %v597 = vxor.u32 %v596, 2147483648
    %v598 = vmul.f32 %v597, 1.442695
    %v599 = vpow.pop %v598
    %v600 = vadd.f32 %v599, 1.0
    %v601 = vrcp.pop %v600
    %v602 = vmul.f32 1.0, %v601
    %v603 = vtanh.pop %v596
    %v605 = vrot.slane %v394, 2
    %v607 = vmul.f32 %v602, %v605
    %609 = vrot.lane.b32.xlu0 %v603, 32
    %v610 = vpop.permute.xlu0 %609
    %v612 = vmul.f32 %v602, %v610
    %614 = vrot.lane.b32.xlu0 %v612, 32
    %v615 = vpop.permute.xlu0 %614
    %v617 = vadd.f32 %v607, %v615
    %v618 = vtanh.pop %v617
    %620 = vrot.lane.b32.xlu0 %v618, 32
    %v621 = vpop.permute.xlu0 %620
    %v623 = vmul.f32 %v602, %v621
    %625 = vrot.lane.b32.xlu0 %v592, 64
    %v626 = vpop.permute.xlu0 %625
    %vm628 = vcmask 257026
    %629 = vst.msk [vmem:[#allocation3] sm:$0xc] %vm628, %v626
    %631 = vrot.lane.b32.xlu0 %v623, 96
    %v632 = vpop.permute.xlu0 %631
    %vm634 = vcmask 521476
    %635 = vst.msk [vmem:[#allocation3 + $0x8] sm:$0x30] %vm634, %v632
    %v636 = vrot.slane %v592, 2
    %637 = vrot.lane.b32.xlu0 %v636, 64
    %v638 = vpop.permute.xlu0 %637
    %v639 = vsel %vm202, %v638, 0
    %641 = vmatprep.subr.mxu0 0.0
    %642 = vmatpush1.msra.mxu0 0.0
    %643 = vmatprep.subr.mxu0 0.0
    %644 = vmatpush1.msra.mxu0 0.0
    %645 = vmatprep.subr.mxu0 0.0
    %646 = vmatpush1.msra.mxu0 0.0
    %647 = vmatprep.subr.mxu0 0.0
    %648 = vmatpush1.msra.mxu0 0.0
    %649 = vmatprep.subr.mxu0 0.0
    %650 = vmatpush1.msra.mxu0 0.0
    %651 = vmatprep.subr.mxu0 0.0
    %652 = vmatpush1.msra.mxu0 0.0
    %653 = vmatprep.subr.mxu0 0.0
    %654 = vmatpush1.msra.mxu0 0.0
    %655 = vmatprep.subr.mxu0 0.0
    %656 = vmatpush1.msra.mxu0 0.0
    %657 = vmatprep.subr.mxu0 0.0
    %658 = vmatpush1.msra.mxu0 0.0
    %659 = vmatprep.subr.mxu0 0.0
    %660 = vmatpush1.msra.mxu0 0.0
    %661 = vmatprep.subr.mxu0 0.0
    %662 = vmatpush1.msra.mxu0 0.0
    %663 = vmatprep.subr.mxu0 0.0
    %664 = vmatpush1.msra.mxu0 0.0
    %665 = vmatprep.subr.mxu0 0.0
    %666 = vmatpush1.msra.mxu0 %v197
    %667 = vmatprep.subr.mxu0 0.0
    %668 = vmatpush1.msra.mxu0 %v196
    %669 = vmatprep.subr.mxu0 0.0
    %670 = vmatpush1.msra.mxu0 %v195
    %671 = vmatprep.subr.mxu0 0.0
    %672 = vmatpush1.msra.mxu0 %v194
    %673 = vmatprep.subr.mxu0 0.0
    %674 = vmatpush2.msra.mxu0 0.0
    %675 = vmatprep.subr.mxu0 0.0
    %676 = vmatpush2.msra.mxu0 0.0
    %677 = vmatprep.subr.mxu0 0.0
    %678 = vmatpush2.msra.mxu0 0.0
    %679 = vmatprep.subr.mxu0 0.0
    %680 = vmatpush2.msra.mxu0 0.0
    %681 = vmatprep.subr.mxu0 0.0
    %682 = vmatpush2.msra.mxu0 0.0
    %683 = vmatprep.subr.mxu0 0.0
    %684 = vmatpush2.msra.mxu0 0.0
    %685 = vmatprep.subr.mxu0 0.0
    %686 = vmatpush2.msra.mxu0 0.0
    %687 = vmatprep.subr.mxu0 0.0
    %688 = vmatpush2.msra.mxu0 0.0
    %689 = vmatprep.subr.mxu0 0.0
    %690 = vmatpush2.msra.mxu0 0.0
    %691 = vmatprep.subr.mxu0 0.0
    %692 = vmatpush2.msra.mxu0 0.0
    %693 = vmatprep.subr.mxu0 0.0
    %694 = vmatpush2.msra.mxu0 0.0
    %695 = vmatprep.subr.mxu0 0.0
    %696 = vmatpush2.msra.mxu0 0.0
    %697 = vmatprep.subr.mxu0 0.0
    %698 = vmatpush2.msra.mxu0 0.0
    %699 = vmatprep.subr.mxu0 0.0
    %700 = vmatpush2.msra.mxu0 0.0
    %701 = vmatprep.subr.mxu0 0.0
    %702 = vmatpush2.msra.mxu0 0.0
    %703 = vmatprep.subr.mxu0 0.0
    %704 = vmatpush2.msra.mxu0 0.0
    %705 = vmatprep.mubr.f32.mxu0 0.0
    %706 = vmatmul.mubr.f32.gmra.mxu0 %v639
    %v707 = vpop.f32.mrf.mxu0
    %v708 = vadd.f32 0.0, %v707
    %v709 = vpop.f32.mrf.mxu0
    %710 = vdwg.mxu0
    %v711 = vrot.slane %v623, 4
    %712 = vrot.lane.b32.xlu0 %v711, 64
    %v713 = vpop.permute.xlu0 %712
    %v714 = vsel %vm202, %v713, 0
    %716 = vmatprep.subr.mxu0 0.0
    %717 = vmatpush1.msra.mxu0 0.0
    %718 = vmatprep.subr.mxu0 0.0
    %719 = vmatpush1.msra.mxu0 0.0
    %720 = vmatprep.subr.mxu0 0.0
    %721 = vmatpush1.msra.mxu0 0.0
    %722 = vmatprep.subr.mxu0 0.0
    %723 = vmatpush1.msra.mxu0 0.0
    %724 = vmatprep.subr.mxu0 0.0
    %725 = vmatpush1.msra.mxu0 0.0
    %726 = vmatprep.subr.mxu0 0.0
    %727 = vmatpush1.msra.mxu0 0.0
    %728 = vmatprep.subr.mxu0 0.0
    %729 = vmatpush1.msra.mxu0 0.0
    %730 = vmatprep.subr.mxu0 0.0
    %731 = vmatpush1.msra.mxu0 0.0
    %732 = vmatprep.subr.mxu0 0.0
    %733 = vmatpush1.msra.mxu0 0.0
    %734 = vmatprep.subr.mxu0 0.0
    %735 = vmatpush1.msra.mxu0 0.0
    %736 = vmatprep.subr.mxu0 0.0
    %737 = vmatpush1.msra.mxu0 0.0
    %738 = vmatprep.subr.mxu0 0.0
    %739 = vmatpush1.msra.mxu0 0.0
    %740 = vmatprep.subr.mxu0 0.0
    %741 = vmatpush1.msra.mxu0 %v201
    %742 = vmatprep.subr.mxu0 0.0
    %743 = vmatpush1.msra.mxu0 %v200
    %744 = vmatprep.subr.mxu0 0.0
    %745 = vmatpush1.msra.mxu0 %v199
    %746 = vmatprep.subr.mxu0 0.0
    %747 = vmatpush1.msra.mxu0 %v198
    %748 = vmatprep.subr.mxu0 0.0
    %749 = vmatpush2.msra.mxu0 0.0
    %750 = vmatprep.subr.mxu0 0.0
    %751 = vmatpush2.msra.mxu0 0.0
    %752 = vmatprep.subr.mxu0 0.0
    %753 = vmatpush2.msra.mxu0 0.0
    %754 = vmatprep.subr.mxu0 0.0
    %755 = vmatpush2.msra.mxu0 0.0
    %756 = vmatprep.subr.mxu0 0.0
    %757 = vmatpush2.msra.mxu0 0.0
    %758 = vmatprep.subr.mxu0 0.0
    %759 = vmatpush2.msra.mxu0 0.0
    %760 = vmatprep.subr.mxu0 0.0
    %761 = vmatpush2.msra.mxu0 0.0
    %762 = vmatprep.subr.mxu0 0.0
    %763 = vmatpush2.msra.mxu0 0.0
    %764 = vmatprep.subr.mxu0 0.0
    %765 = vmatpush2.msra.mxu0 0.0
    %766 = vmatprep.subr.mxu0 0.0
    %767 = vmatpush2.msra.mxu0 0.0
    %768 = vmatprep.subr.mxu0 0.0
    %769 = vmatpush2.msra.mxu0 0.0
    %770 = vmatprep.subr.mxu0 0.0
    %771 = vmatpush2.msra.mxu0 0.0
    %772 = vmatprep.subr.mxu0 0.0
    %773 = vmatpush2.msra.mxu0 0.0
    %774 = vmatprep.subr.mxu0 0.0
    %775 = vmatpush2.msra.mxu0 0.0
    %776 = vmatprep.subr.mxu0 0.0
    %777 = vmatpush2.msra.mxu0 0.0
    %778 = vmatprep.subr.mxu0 0.0
    %779 = vmatpush2.msra.mxu0 0.0
    %780 = vmatprep.mubr.f32.mxu0 0.0
    %781 = vmatmul.mubr.f32.gmra.mxu0 %v714
    %v782 = vpop.f32.mrf.mxu0
    %v783 = vadd.f32 0.0, %v782
    %v784 = vpop.f32.mrf.mxu0
    %785 = vdwg.mxu0
    %v786 = vld [vmem:[#allocation2] sm:$0x30]
    %v787 = vld [vmem:[#allocation2 + $0x18] sm:$0xc]
    %v789 = vrot.slane %v708, 4
    %v791 = vadd.f32 %v786, %v789
    %v792 = vxor.u32 %v791, 2147483648
    %v793 = vmul.f32 %v792, 1.442695
    %v794 = vpow.pop %v793
    %v795 = vadd.f32 %v794, 1.0
    %v796 = vrcp.pop %v795
    %v797 = vmul.f32 1.0, %v796
    %v798 = vtanh.pop %v791
    %v800 = vrot.slane %v586, 6
    %v802 = vmul.f32 %v797, %v800
    %804 = vrot.lane.b32.xlu0 %v798, 32
    %v805 = vpop.permute.xlu0 %804
    %v807 = vmul.f32 %v797, %v805
    %809 = vrot.lane.b32.xlu0 %v807, 32
    %v810 = vpop.permute.xlu0 %809
    %v812 = vadd.f32 %v802, %v810
    %v813 = vtanh.pop %v812
    %815 = vrot.lane.b32.xlu0 %v813, 32
    %v816 = vpop.permute.xlu0 %815
    %v818 = vmul.f32 %v797, %v816
    %v820 = vrot.slane %v783, 6
    %v822 = vadd.f32 %v787, %v820
    %v823 = vxor.u32 %v822, 2147483648
    %v824 = vmul.f32 %v823, 1.442695
    %v825 = vpow.pop %v824
    %v826 = vadd.f32 %v825, 1.0
    %v827 = vrcp.pop %v826
    %v828 = vmul.f32 1.0, %v827
    %v829 = vtanh.pop %v822
    %v831 = vrot.slane %v617, 2
    %v833 = vmul.f32 %v828, %v831
    %835 = vrot.lane.b32.xlu0 %v829, 32
    %v836 = vpop.permute.xlu0 %835
    %v838 = vmul.f32 %v828, %v836
    %840 = vrot.lane.b32.xlu0 %v838, 32
    %v841 = vpop.permute.xlu0 %840
    %v843 = vadd.f32 %v833, %v841
    %v844 = vtanh.pop %v843
    %846 = vrot.lane.b32.xlu0 %v844, 32
    %v847 = vpop.permute.xlu0 %846
    %v849 = vmul.f32 %v828, %v847
    %851 = vrot.lane.b32.xlu0 %v818, 64
    %v852 = vpop.permute.xlu0 %851
    %vm854 = vcmask 259076
    %855 = vst.msk [vmem:[#allocation3] sm:$0x30] %vm854, %v852
    %857 = vrot.lane.b32.xlu0 %v849, 96
    %v858 = vpop.permute.xlu0 %857
    %vm860 = vcmask 519426
    %861 = vst.msk [vmem:[#allocation3 + $0x8] sm:$0xc] %vm860, %v858
    %v862 = vrot.slane %v818, 4
    %863 = vrot.lane.b32.xlu0 %v862, 64
    %v864 = vpop.permute.xlu0 %863
    %v865 = vsel %vm202, %v864, 0
    %867 = vmatprep.subr.mxu0 0.0
    %868 = vmatpush1.msra.mxu0 0.0
    %869 = vmatprep.subr.mxu0 0.0
    %870 = vmatpush1.msra.mxu0 0.0
    %871 = vmatprep.subr.mxu0 0.0
    %872 = vmatpush1.msra.mxu0 0.0
    %873 = vmatprep.subr.mxu0 0.0
    %874 = vmatpush1.msra.mxu0 0.0
    %875 = vmatprep.subr.mxu0 0.0
    %876 = vmatpush1.msra.mxu0 0.0
    %877 = vmatprep.subr.mxu0 0.0
    %878 = vmatpush1.msra.mxu0 0.0
    %879 = vmatprep.subr.mxu0 0.0
    %880 = vmatpush1.msra.mxu0 0.0
    %881 = vmatprep.subr.mxu0 0.0
    %882 = vmatpush1.msra.mxu0 0.0
    %883 = vmatprep.subr.mxu0 0.0
    %884 = vmatpush1.msra.mxu0 0.0
    %885 = vmatprep.subr.mxu0 0.0
    %886 = vmatpush1.msra.mxu0 0.0
    %887 = vmatprep.subr.mxu0 0.0
    %888 = vmatpush1.msra.mxu0 0.0
    %889 = vmatprep.subr.mxu0 0.0
    %890 = vmatpush1.msra.mxu0 0.0
    %891 = vmatprep.subr.mxu0 0.0
    %892 = vmatpush1.msra.mxu0 %v197
    %893 = vmatprep.subr.mxu0 0.0
    %894 = vmatpush1.msra.mxu0 %v196
    %895 = vmatprep.subr.mxu0 0.0
    %896 = vmatpush1.msra.mxu0 %v195
    %897 = vmatprep.subr.mxu0 0.0
    %898 = vmatpush1.msra.mxu0 %v194
    %899 = vmatprep.subr.mxu0 0.0
    %900 = vmatpush2.msra.mxu0 0.0
    %901 = vmatprep.subr.mxu0 0.0
    %902 = vmatpush2.msra.mxu0 0.0
    %903 = vmatprep.subr.mxu0 0.0
    %904 = vmatpush2.msra.mxu0 0.0
    %905 = vmatprep.subr.mxu0 0.0
    %906 = vmatpush2.msra.mxu0 0.0
    %907 = vmatprep.subr.mxu0 0.0
    %908 = vmatpush2.msra.mxu0 0.0
    %909 = vmatprep.subr.mxu0 0.0
    %910 = vmatpush2.msra.mxu0 0.0
    %911 = vmatprep.subr.mxu0 0.0
    %912 = vmatpush2.msra.mxu0 0.0
    %913 = vmatprep.subr.mxu0 0.0
    %914 = vmatpush2.msra.mxu0 0.0
    %915 = vmatprep.subr.mxu0 0.0
    %916 = vmatpush2.msra.mxu0 0.0
    %917 = vmatprep.subr.mxu0 0.0
    %918 = vmatpush2.msra.mxu0 0.0
    %919 = vmatprep.subr.mxu0 0.0
    %920 = vmatpush2.msra.mxu0 0.0
    %921 = vmatprep.subr.mxu0 0.0
    %922 = vmatpush2.msra.mxu0 0.0
    %923 = vmatprep.subr.mxu0 0.0
    %924 = vmatpush2.msra.mxu0 0.0
    %925 = vmatprep.subr.mxu0 0.0
    %926 = vmatpush2.msra.mxu0 0.0
    %927 = vmatprep.subr.mxu0 0.0
    %928 = vmatpush2.msra.mxu0 0.0
    %929 = vmatprep.subr.mxu0 0.0
    %930 = vmatpush2.msra.mxu0 0.0
    %931 = vmatprep.mubr.f32.mxu0 0.0
    %932 = vmatmul.mubr.f32.gmra.mxu0 %v865
    %v933 = vpop.f32.mrf.mxu0
    %v934 = vadd.f32 0.0, %v933
    %v935 = vpop.f32.mrf.mxu0
    %936 = vdwg.mxu0
    %v937 = vrot.slane %v849, 2
    %938 = vrot.lane.b32.xlu0 %v937, 64
    %v939 = vpop.permute.xlu0 %938
    %v940 = vsel %vm202, %v939, 0
    %942 = vmatprep.subr.mxu0 0.0
    %943 = vmatpush1.msra.mxu0 0.0
    %944 = vmatprep.subr.mxu0 0.0
    %945 = vmatpush1.msra.mxu0 0.0
    %946 = vmatprep.subr.mxu0 0.0
    %947 = vmatpush1.msra.mxu0 0.0
    %948 = vmatprep.subr.mxu0 0.0
    %949 = vmatpush1.msra.mxu0 0.0
    %950 = vmatprep.subr.mxu0 0.0
    %951 = vmatpush1.msra.mxu0 0.0
    %952 = vmatprep.subr.mxu0 0.0
    %953 = vmatpush1.msra.mxu0 0.0
    %954 = vmatprep.subr.mxu0 0.0
    %955 = vmatpush1.msra.mxu0 0.0
    %956 = vmatprep.subr.mxu0 0.0
    %957 = vmatpush1.msra.mxu0 0.0
    %958 = vmatprep.subr.mxu0 0.0
    %959 = vmatpush1.msra.mxu0 0.0
    %960 = vmatprep.subr.mxu0 0.0
    %961 = vmatpush1.msra.mxu0 0.0
    %962 = vmatprep.subr.mxu0 0.0
    %963 = vmatpush1.msra.mxu0 0.0
    %964 = vmatprep.subr.mxu0 0.0
    %965 = vmatpush1.msra.mxu0 0.0
    %966 = vmatprep.subr.mxu0 0.0
    %967 = vmatpush1.msra.mxu0 %v201
    %968 = vmatprep.subr.mxu0 0.0
    %969 = vmatpush1.msra.mxu0 %v200
    %970 = vmatprep.subr.mxu0 0.0
    %971 = vmatpush1.msra.mxu0 %v199
    %972 = vmatprep.subr.mxu0 0.0
    %973 = vmatpush1.msra.mxu0 %v198
    %974 = vmatprep.subr.mxu0 0.0
    %975 = vmatpush2.msra.mxu0 0.0
    %976 = vmatprep.subr.mxu0 0.0
    %977 = vmatpush2.msra.mxu0 0.0
    %978 = vmatprep.subr.mxu0 0.0
    %979 = vmatpush2.msra.mxu0 0.0
    %980 = vmatprep.subr.mxu0 0.0
    %981 = vmatpush2.msra.mxu0 0.0
    %982 = vmatprep.subr.mxu0 0.0
    %983 = vmatpush2.msra.mxu0 0.0
    %984 = vmatprep.subr.mxu0 0.0
    %985 = vmatpush2.msra.mxu0 0.0
    %986 = vmatprep.subr.mxu0 0.0
    %987 = vmatpush2.msra.mxu0 0.0
    %988 = vmatprep.subr.mxu0 0.0
    %989 = vmatpush2.msra.mxu0 0.0
    %990 = vmatprep.subr.mxu0 0.0
    %991 = vmatpush2.msra.mxu0 0.0
    %992 = vmatprep.subr.mxu0 0.0
    %993 = vmatpush2.msra.mxu0 0.0
    %994 = vmatprep.subr.mxu0 0.0
    %995 = vmatpush2.msra.mxu0 0.0
    %996 = vmatprep.subr.mxu0 0.0
    %997 = vmatpush2.msra.mxu0 0.0
    %998 = vmatprep.subr.mxu0 0.0
    %999 = vmatpush2.msra.mxu0 0.0
    %1000 = vmatprep.subr.mxu0 0.0
    %1001 = vmatpush2.msra.mxu0 0.0
    %1002 = vmatprep.subr.mxu0 0.0
    %1003 = vmatpush2.msra.mxu0 0.0
    %1004 = vmatprep.subr.mxu0 0.0
    %1005 = vmatpush2.msra.mxu0 0.0
    %1006 = vmatprep.mubr.f32.mxu0 0.0
    %1007 = vmatmul.mubr.f32.gmra.mxu0 %v940
    %v1008 = vpop.f32.mrf.mxu0
    %v1009 = vadd.f32 0.0, %v1008
    %v1010 = vpop.f32.mrf.mxu0
    %1011 = vdwg.mxu0
    %v1012 = vld [vmem:[#allocation2] sm:$0xc0]
    %v1013 = vld [vmem:[#allocation2 + $0x18] sm:$0x3]
    %v1015 = vrot.slane %v934, 2
    %v1017 = vadd.f32 %v1012, %v1015
    %v1018 = vxor.u32 %v1017, 2147483648
    %v1019 = vmul.f32 %v1018, 1.442695
    %v1020 = vpow.pop %v1019
    %v1021 = vadd.f32 %v1020, 1.0
    %v1022 = vrcp.pop %v1021
    %v1023 = vmul.f32 1.0, %v1022
    %v1024 = vtanh.pop %v1017
    %v1026 = vrot.slane %v812, 6
    %v1028 = vmul.f32 %v1023, %v1026
    %1030 = vrot.lane.b32.xlu0 %v1024, 32
    %v1031 = vpop.permute.xlu0 %1030
    %v1033 = vmul.f32 %v1023, %v1031
    %1035 = vrot.lane.b32.xlu0 %v1033, 32
    %v1036 = vpop.permute.xlu0 %1035
    %v1038 = vadd.f32 %v1028, %v1036
    %v1039 = vtanh.pop %v1038
    %1041 = vrot.lane.b32.xlu0 %v1039, 32
    %v1042 = vpop.permute.xlu0 %1041
    %v1044 = vmul.f32 %v1023, %v1042
    %v1045 = vadd.f32 %v1013, %v1009
    %v1046 = vxor.u32 %v1045, 2147483648
    %v1047 = vmul.f32 %v1046, 1.442695
    %v1048 = vpow.pop %v1047
    %v1049 = vadd.f32 %v1048, 1.0
    %v1050 = vrcp.pop %v1049
    %v1051 = vmul.f32 1.0, %v1050
    %v1052 = vtanh.pop %v1045
    %v1054 = vrot.slane %v843, 2
    %v1056 = vmul.f32 %v1051, %v1054
    %1058 = vrot.lane.b32.xlu0 %v1052, 32
    %v1059 = vpop.permute.xlu0 %1058
    %v1061 = vmul.f32 %v1051, %v1059
    %1063 = vrot.lane.b32.xlu0 %v1061, 32
    %v1064 = vpop.permute.xlu0 %1063
    %v1066 = vadd.f32 %v1056, %v1064
    %v1067 = vtanh.pop %v1066
    %1069 = vrot.lane.b32.xlu0 %v1067, 32
    %v1070 = vpop.permute.xlu0 %1069
    %v1072 = vmul.f32 %v1051, %v1070
    %1074 = vrot.lane.b32.xlu0 %v1044, 64
    %v1075 = vpop.permute.xlu0 %1074
    %vm1077 = vcmask 261126
    %1078 = vst.msk [vmem:[#allocation3] sm:$0xc0] %vm1077, %v1075
    %1080 = vrot.lane.b32.xlu0 %v1072, 96
    %v1081 = vpop.permute.xlu0 %1080
    %vm1083 = vcmask 517376
    %1084 = vst.msk [vmem:[#allocation3 + $0x8] sm:$0x3] %vm1083, %v1081
    %v1085 = vrot.slane %v1044, 6
    %1086 = vrot.lane.b32.xlu0 %v1085, 64
    %v1087 = vpop.permute.xlu0 %1086
    %v1088 = vsel %vm202, %v1087, 0
    %1090 = vmatprep.subr.mxu0 0.0
    %1091 = vmatpush1.msra.mxu0 0.0
    %1092 = vmatprep.subr.mxu0 0.0
    %1093 = vmatpush1.msra.mxu0 0.0
    %1094 = vmatprep.subr.mxu0 0.0
    %1095 = vmatpush1.msra.mxu0 0.0
    %1096 = vmatprep.subr.mxu0 0.0
    %1097 = vmatpush1.msra.mxu0 0.0
    %1098 = vmatprep.subr.mxu0 0.0
    %1099 = vmatpush1.msra.mxu0 0.0
    %1100 = vmatprep.subr.mxu0 0.0
    %1101 = vmatpush1.msra.mxu0 0.0
    %1102 = vmatprep.subr.mxu0 0.0
    %1103 = vmatpush1.msra.mxu0 0.0
    %1104 = vmatprep.subr.mxu0 0.0
    %1105 = vmatpush1.msra.mxu0 0.0
    %1106 = vmatprep.subr.mxu0 0.0
    %1107 = vmatpush1.msra.mxu0 0.0
    %1108 = vmatprep.subr.mxu0 0.0
    %1109 = vmatpush1.msra.mxu0 0.0
    %1110 = vmatprep.subr.mxu0 0.0
    %1111 = vmatpush1.msra.mxu0 0.0
    %1112 = vmatprep.subr.mxu0 0.0
    %1113 = vmatpush1.msra.mxu0 0.0
    %1114 = vmatprep.subr.mxu0 0.0
    %1115 = vmatpush1.msra.mxu0 %v197
    %1116 = vmatprep.subr.mxu0 0.0
    %1117 = vmatpush1.msra.mxu0 %v196
    %1118 = vmatprep.subr.mxu0 0.0
    %1119 = vmatpush1.msra.mxu0 %v195
    %1120 = vmatprep.subr.mxu0 0.0
    %1121 = vmatpush1.msra.mxu0 %v194
    %1122 = vmatprep.subr.mxu0 0.0
    %1123 = vmatpush2.msra.mxu0 0.0
    %1124 = vmatprep.subr.mxu0 0.0
    %1125 = vmatpush2.msra.mxu0 0.0
    %1126 = vmatprep.subr.mxu0 0.0
    %1127 = vmatpush2.msra.mxu0 0.0
    %1128 = vmatprep.subr.mxu0 0.0
    %1129 = vmatpush2.msra.mxu0 0.0
    %1130 = vmatprep.subr.mxu0 0.0
    %1131 = vmatpush2.msra.mxu0 0.0
    %1132 = vmatprep.subr.mxu0 0.0
    %1133 = vmatpush2.msra.mxu0 0.0
    %1134 = vmatprep.subr.mxu0 0.0
    %1135 = vmatpush2.msra.mxu0 0.0
    %1136 = vmatprep.subr.mxu0 0.0
    %1137 = vmatpush2.msra.mxu0 0.0
    %1138 = vmatprep.subr.mxu0 0.0
    %1139 = vmatpush2.msra.mxu0 0.0
    %1140 = vmatprep.subr.mxu0 0.0
    %1141 = vmatpush2.msra.mxu0 0.0
    %1142 = vmatprep.subr.mxu0 0.0
    %1143 = vmatpush2.msra.mxu0 0.0
    %1144 = vmatprep.subr.mxu0 0.0
    %1145 = vmatpush2.msra.mxu0 0.0
    %1146 = vmatprep.subr.mxu0 0.0
    %1147 = vmatpush2.msra.mxu0 0.0
    %1148 = vmatprep.subr.mxu0 0.0
    %1149 = vmatpush2.msra.mxu0 0.0
    %1150 = vmatprep.subr.mxu0 0.0
    %1151 = vmatpush2.msra.mxu0 0.0
    %1152 = vmatprep.subr.mxu0 0.0
    %1153 = vmatpush2.msra.mxu0 0.0
    %1154 = vmatprep.mubr.f32.mxu0 0.0
    %1155 = vmatmul.mubr.f32.gmra.mxu0 %v1088
    %v1156 = vpop.f32.mrf.mxu0
    %v1157 = vadd.f32 0.0, %v1156
    %v1158 = vpop.f32.mrf.mxu0
    %1159 = vdwg.mxu0
    %1160 = vrot.lane.b32.xlu0 %v1072, 64
    %v1161 = vpop.permute.xlu0 %1160
    %v1162 = vsel %vm202, %v1161, 0
    %1164 = vmatprep.subr.mxu0 0.0
    %1165 = vmatpush1.msra.mxu0 0.0
    %1166 = vmatprep.subr.mxu0 0.0
    %1167 = vmatpush1.msra.mxu0 0.0
    %1168 = vmatprep.subr.mxu0 0.0
    %1169 = vmatpush1.msra.mxu0 0.0
    %1170 = vmatprep.subr.mxu0 0.0
    %1171 = vmatpush1.msra.mxu0 0.0
    %1172 = vmatprep.subr.mxu0 0.0
    %1173 = vmatpush1.msra.mxu0 0.0
    %1174 = vmatprep.subr.mxu0 0.0
    %1175 = vmatpush1.msra.mxu0 0.0
    %1176 = vmatprep.subr.mxu0 0.0
    %1177 = vmatpush1.msra.mxu0 0.0
    %1178 = vmatprep.subr.mxu0 0.0
    %1179 = vmatpush1.msra.mxu0 0.0
    %1180 = vmatprep.subr.mxu0 0.0
    %1181 = vmatpush1.msra.mxu0 0.0
    %1182 = vmatprep.subr.mxu0 0.0
    %1183 = vmatpush1.msra.mxu0 0.0
    %1184 = vmatprep.subr.mxu0 0.0
    %1185 = vmatpush1.msra.mxu0 0.0
    %1186 = vmatprep.subr.mxu0 0.0
    %1187 = vmatpush1.msra.mxu0 0.0
    %1188 = vmatprep.subr.mxu0 0.0
    %1189 = vmatpush1.msra.mxu0 %v201
    %1190 = vmatprep.subr.mxu0 0.0
    %1191 = vmatpush1.msra.mxu0 %v200
    %1192 = vmatprep.subr.mxu0 0.0
    %1193 = vmatpush1.msra.mxu0 %v199
    %1194 = vmatprep.subr.mxu0 0.0
    %1195 = vmatpush1.msra.mxu0 %v198
    %1196 = vmatprep.subr.mxu0 0.0
    %1197 = vmatpush2.msra.mxu0 0.0
    %1198 = vmatprep.subr.mxu0 0.0
    %1199 = vmatpush2.msra.mxu0 0.0
    %1200 = vmatprep.subr.mxu0 0.0
    %1201 = vmatpush2.msra.mxu0 0.0
    %1202 = vmatprep.subr.mxu0 0.0
    %1203 = vmatpush2.msra.mxu0 0.0
    %1204 = vmatprep.subr.mxu0 0.0
    %1205 = vmatpush2.msra.mxu0 0.0
    %1206 = vmatprep.subr.mxu0 0.0
    %1207 = vmatpush2.msra.mxu0 0.0
    %1208 = vmatprep.subr.mxu0 0.0
    %1209 = vmatpush2.msra.mxu0 0.0
    %1210 = vmatprep.subr.mxu0 0.0
    %1211 = vmatpush2.msra.mxu0 0.0
    %1212 = vmatprep.subr.mxu0 0.0
    %1213 = vmatpush2.msra.mxu0 0.0
    %1214 = vmatprep.subr.mxu0 0.0
    %1215 = vmatpush2.msra.mxu0 0.0
    %1216 = vmatprep.subr.mxu0 0.0
    %1217 = vmatpush2.msra.mxu0 0.0
    %1218 = vmatprep.subr.mxu0 0.0
    %1219 = vmatpush2.msra.mxu0 0.0
    %1220 = vmatprep.subr.mxu0 0.0
    %1221 = vmatpush2.msra.mxu0 0.0
    %1222 = vmatprep.subr.mxu0 0.0
    %1223 = vmatpush2.msra.mxu0 0.0
    %1224 = vmatprep.subr.mxu0 0.0
    %1225 = vmatpush2.msra.mxu0 0.0
    %1226 = vmatprep.subr.mxu0 0.0
    %1227 = vmatpush2.msra.mxu0 0.0
    %1228 = vmatprep.mubr.f32.mxu0 0.0
    %1229 = vmatmul.mubr.f32.gmra.mxu0 %v1162
    %v1230 = vpop.f32.mrf.mxu0
    %v1231 = vadd.f32 0.0, %v1230
    %v1232 = vpop.f32.mrf.mxu0
    %1233 = vdwg.mxu0
    %v1234 = vld [vmem:[#allocation2 + $0x10] sm:$0x3]
    %v1235 = vld [vmem:[#allocation2 + $0x8] sm:$0xc0]
    %v1236 = vadd.f32 %v1234, %v1157
    %v1237 = vxor.u32 %v1236, 2147483648
    %v1238 = vmul.f32 %v1237, 1.442695
    %v1239 = vpow.pop %v1238
    %v1240 = vadd.f32 %v1239, 1.0
    %v1241 = vrcp.pop %v1240
    %v1242 = vmul.f32 1.0, %v1241
    %v1243 = vtanh.pop %v1236
    %v1245 = vrot.slane %v1038, 6
    %v1247 = vmul.f32 %v1242, %v1245
    %1249 = vrot.lane.b32.xlu0 %v1243, 32
    %v1250 = vpop.permute.xlu0 %1249
    %v1252 = vmul.f32 %v1242, %v1250
    %1254 = vrot.lane.b32.xlu0 %v1252, 32
    %v1255 = vpop.permute.xlu0 %1254
    %v1257 = vadd.f32 %v1247, %v1255
    %v1258 = vtanh.pop %v1257
    %1260 = vrot.lane.b32.xlu0 %v1258, 32
    %v1261 = vpop.permute.xlu0 %1260
    %v1263 = vmul.f32 %v1242, %v1261
    %v1265 = vrot.slane %v1231, 2
    %v1267 = vadd.f32 %v1235, %v1265
    %v1268 = vxor.u32 %v1267, 2147483648
    %v1269 = vmul.f32 %v1268, 1.442695
    %v1270 = vpow.pop %v1269
    %v1271 = vadd.f32 %v1270, 1.0
    %v1272 = vrcp.pop %v1271
    %v1273 = vmul.f32 1.0, %v1272
    %v1274 = vtanh.pop %v1267
    %v1276 = vrot.slane %v1066, 2
    %v1278 = vmul.f32 %v1273, %v1276
    %1280 = vrot.lane.b32.xlu0 %v1274, 32
    %v1281 = vpop.permute.xlu0 %1280
    %v1283 = vmul.f32 %v1273, %v1281
    %1285 = vrot.lane.b32.xlu0 %v1283, 32
    %v1286 = vpop.permute.xlu0 %1285
    %v1288 = vadd.f32 %v1278, %v1286
    %v1289 = vtanh.pop %v1288
    %1291 = vrot.lane.b32.xlu0 %v1289, 32
    %v1292 = vpop.permute.xlu0 %1291
    %v1294 = vmul.f32 %v1273, %v1292
    %1296 = vrot.lane.b32.xlu0 %v1263, 64
    %v1297 = vpop.permute.xlu0 %1296
    %1299 = vst.msk [vmem:[#allocation3 + $0x8] sm:$0x3] %vm405, %v1297
    %1301 = vrot.lane.b32.xlu0 %v1294, 96
    %v1302 = vpop.permute.xlu0 %1301
    %1304 = vst.msk [vmem:[#allocation3] sm:$0xc0] %vm411, %v1302
    %v1305 = vsel %vm202, %v1297, 0
    %1307 = vmatprep.subr.mxu0 0.0
    %1308 = vmatpush1.msra.mxu0 0.0
    %1309 = vmatprep.subr.mxu0 0.0
    %1310 = vmatpush1.msra.mxu0 0.0
    %1311 = vmatprep.subr.mxu0 0.0
    %1312 = vmatpush1.msra.mxu0 0.0
    %1313 = vmatprep.subr.mxu0 0.0
    %1314 = vmatpush1.msra.mxu0 0.0
    %1315 = vmatprep.subr.mxu0 0.0
    %1316 = vmatpush1.msra.mxu0 0.0
    %1317 = vmatprep.subr.mxu0 0.0
    %1318 = vmatpush1.msra.mxu0 0.0
    %1319 = vmatprep.subr.mxu0 0.0
    %1320 = vmatpush1.msra.mxu0 0.0
    %1321 = vmatprep.subr.mxu0 0.0
    %1322 = vmatpush1.msra.mxu0 0.0
    %1323 = vmatprep.subr.mxu0 0.0
    %1324 = vmatpush1.msra.mxu0 0.0
    %1325 = vmatprep.subr.mxu0 0.0
    %1326 = vmatpush1.msra.mxu0 0.0
    %1327 = vmatprep.subr.mxu0 0.0
    %1328 = vmatpush1.msra.mxu0 0.0
    %1329 = vmatprep.subr.mxu0 0.0
    %1330 = vmatpush1.msra.mxu0 0.0
    %1331 = vmatprep.subr.mxu0 0.0
    %1332 = vmatpush1.msra.mxu0 %v197
    %1333 = vmatprep.subr.mxu0 0.0
    %1334 = vmatpush1.msra.mxu0 %v196
    %1335 = vmatprep.subr.mxu0 0.0
    %1336 = vmatpush1.msra.mxu0 %v195
    %1337 = vmatprep.subr.mxu0 0.0
    %1338 = vmatpush1.msra.mxu0 %v194
    %1339 = vmatprep.subr.mxu0 0.0
    %1340 = vmatpush2.msra.mxu0 0.0
    %1341 = vmatprep.subr.mxu0 0.0
    %1342 = vmatpush2.msra.mxu0 0.0
    %1343 = vmatprep.subr.mxu0 0.0
    %1344 = vmatpush2.msra.mxu0 0.0
    %1345 = vmatprep.subr.mxu0 0.0
    %1346 = vmatpush2.msra.mxu0 0.0
    %1347 = vmatprep.subr.mxu0 0.0
    %1348 = vmatpush2.msra.mxu0 0.0
    %1349 = vmatprep.subr.mxu0 0.0
    %1350 = vmatpush2.msra.mxu0 0.0
    %1351 = vmatprep.subr.mxu0 0.0
    %1352 = vmatpush2.msra.mxu0 0.0
    %1353 = vmatprep.subr.mxu0 0.0
    %1354 = vmatpush2.msra.mxu0 0.0
    %1355 = vmatprep.subr.mxu0 0.0
    %1356 = vmatpush2.msra.mxu0 0.0
    %1357 = vmatprep.subr.mxu0 0.0
    %1358 = vmatpush2.msra.mxu0 0.0
    %1359 = vmatprep.subr.mxu0 0.0
    %1360 = vmatpush2.msra.mxu0 0.0
    %1361 = vmatprep.subr.mxu0 0.0
    %1362 = vmatpush2.msra.mxu0 0.0
    %1363 = vmatprep.subr.mxu0 0.0
    %1364 = vmatpush2.msra.mxu0 0.0
    %1365 = vmatprep.subr.mxu0 0.0
    %1366 = vmatpush2.msra.mxu0 0.0
    %1367 = vmatprep.subr.mxu0 0.0
    %1368 = vmatpush2.msra.mxu0 0.0
    %1369 = vmatprep.subr.mxu0 0.0
    %1370 = vmatpush2.msra.mxu0 0.0
    %1371 = vmatprep.mubr.f32.mxu0 0.0
    %1372 = vmatmul.mubr.f32.gmra.mxu0 %v1305
    %v1373 = vpop.f32.mrf.mxu0
    %v1374 = vadd.f32 0.0, %v1373
    %v1375 = vpop.f32.mrf.mxu0
    %1376 = vdwg.mxu0
    %v1377 = vrot.slane %v1294, 6
    %1378 = vrot.lane.b32.xlu0 %v1377, 64
    %v1379 = vpop.permute.xlu0 %1378
    %v1380 = vsel %vm202, %v1379, 0
    %1382 = vmatprep.subr.mxu0 0.0
    %1383 = vmatpush1.msra.mxu0 0.0
    %1384 = vmatprep.subr.mxu0 0.0
    %1385 = vmatpush1.msra.mxu0 0.0
    %1386 = vmatprep.subr.mxu0 0.0
    %1387 = vmatpush1.msra.mxu0 0.0
    %1388 = vmatprep.subr.mxu0 0.0
    %1389 = vmatpush1.msra.mxu0 0.0
    %1390 = vmatprep.subr.mxu0 0.0
    %1391 = vmatpush1.msra.mxu0 0.0
    %1392 = vmatprep.subr.mxu0 0.0
    %1393 = vmatpush1.msra.mxu0 0.0
    %1394 = vmatprep.subr.mxu0 0.0
    %1395 = vmatpush1.msra.mxu0 0.0
    %1396 = vmatprep.subr.mxu0 0.0
    %1397 = vmatpush1.msra.mxu0 0.0
    %1398 = vmatprep.subr.mxu0 0.0
    %1399 = vmatpush1.msra.mxu0 0.0
    %1400 = vmatprep.subr.mxu0 0.0
    %1401 = vmatpush1.msra.mxu0 0.0
    %1402 = vmatprep.subr.mxu0 0.0
    %1403 = vmatpush1.msra.mxu0 0.0
    %1404 = vmatprep.subr.mxu0 0.0
    %1405 = vmatpush1.msra.mxu0 0.0
    %1406 = vmatprep.subr.mxu0 0.0
    %1407 = vmatpush1.msra.mxu0 %v201
    %1408 = vmatprep.subr.mxu0 0.0
    %1409 = vmatpush1.msra.mxu0 %v200
    %1410 = vmatprep.subr.mxu0 0.0
    %1411 = vmatpush1.msra.mxu0 %v199
    %1412 = vmatprep.subr.mxu0 0.0
    %1413 = vmatpush1.msra.mxu0 %v198
    %1414 = vmatprep.subr.mxu0 0.0
    %1415 = vmatpush2.msra.mxu0 0.0
    %1416 = vmatprep.subr.mxu0 0.0
    %1417 = vmatpush2.msra.mxu0 0.0
    %1418 = vmatprep.subr.mxu0 0.0
    %1419 = vmatpush2.msra.mxu0 0.0
    %1420 = vmatprep.subr.mxu0 0.0
    %1421 = vmatpush2.msra.mxu0 0.0
    %1422 = vmatprep.subr.mxu0 0.0
    %1423 = vmatpush2.msra.mxu0 0.0
    %1424 = vmatprep.subr.mxu0 0.0
    %1425 = vmatpush2.msra.mxu0 0.0
    %1426 = vmatprep.subr.mxu0 0.0
    %1427 = vmatpush2.msra.mxu0 0.0
    %1428 = vmatprep.subr.mxu0 0.0
    %1429 = vmatpush2.msra.mxu0 0.0
    %1430 = vmatprep.subr.mxu0 0.0
    %1431 = vmatpush2.msra.mxu0 0.0
    %1432 = vmatprep.subr.mxu0 0.0
    %1433 = vmatpush2.msra.mxu0 0.0
    %1434 = vmatprep.subr.mxu0 0.0
    %1435 = vmatpush2.msra.mxu0 0.0
    %1436 = vmatprep.subr.mxu0 0.0
    %1437 = vmatpush2.msra.mxu0 0.0
    %1438 = vmatprep.subr.mxu0 0.0
    %1439 = vmatpush2.msra.mxu0 0.0
    %1440 = vmatprep.subr.mxu0 0.0
    %1441 = vmatpush2.msra.mxu0 0.0
    %1442 = vmatprep.subr.mxu0 0.0
    %1443 = vmatpush2.msra.mxu0 0.0
    %1444 = vmatprep.subr.mxu0 0.0
    %1445 = vmatpush2.msra.mxu0 0.0
    %1446 = vmatprep.mubr.f32.mxu0 0.0
    %1447 = vmatmul.mubr.f32.gmra.mxu0 %v1380
    %v1448 = vpop.f32.mrf.mxu0
    %v1449 = vadd.f32 0.0, %v1448
    %v1450 = vpop.f32.mrf.mxu0
    %1451 = vdwg.mxu0
    %v1452 = vld [vmem:[#allocation2 + $0x10] sm:$0xc]
    %v1453 = vld [vmem:[#allocation2 + $0x8] sm:$0x30]
    %v1455 = vrot.slane %v1374, 6
    %v1457 = vadd.f32 %v1452, %v1455
    %v1458 = vxor.u32 %v1457, 2147483648
    %v1459 = vmul.f32 %v1458, 1.442695
    %v1460 = vpow.pop %v1459
    %v1461 = vadd.f32 %v1460, 1.0
    %v1462 = vrcp.pop %v1461
    %v1463 = vmul.f32 1.0, %v1462
    %v1464 = vtanh.pop %v1457
    %v1466 = vrot.slane %v1257, 6
    %v1468 = vmul.f32 %v1463, %v1466
    %1470 = vrot.lane.b32.xlu0 %v1464, 32
    %v1471 = vpop.permute.xlu0 %1470
    %v1473 = vmul.f32 %v1463, %v1471
    %1475 = vrot.lane.b32.xlu0 %v1473, 32
    %v1476 = vpop.permute.xlu0 %1475
    %v1478 = vadd.f32 %v1468, %v1476
    %v1479 = vtanh.pop %v1478
    %1481 = vrot.lane.b32.xlu0 %v1479, 32
    %v1482 = vpop.permute.xlu0 %1481
    %v1484 = vmul.f32 %v1463, %v1482
    %v1486 = vrot.slane %v1449, 4
    %v1488 = vadd.f32 %v1453, %v1486
    %v1489 = vxor.u32 %v1488, 2147483648
    %v1490 = vmul.f32 %v1489, 1.442695
    %v1491 = vpow.pop %v1490
    %v1492 = vadd.f32 %v1491, 1.0
    %v1493 = vrcp.pop %v1492
    %v1494 = vmul.f32 1.0, %v1493
    %v1495 = vtanh.pop %v1488
    %v1497 = vrot.slane %v1288, 2
    %v1499 = vmul.f32 %v1494, %v1497
    %1501 = vrot.lane.b32.xlu0 %v1495, 32
    %v1502 = vpop.permute.xlu0 %1501
    %v1504 = vmul.f32 %v1494, %v1502
    %1506 = vrot.lane.b32.xlu0 %v1504, 32
    %v1507 = vpop.permute.xlu0 %1506
    %v1509 = vadd.f32 %v1499, %v1507
    %v1510 = vtanh.pop %v1509
    %1512 = vrot.lane.b32.xlu0 %v1510, 32
    %v1513 = vpop.permute.xlu0 %1512
    %v1515 = vmul.f32 %v1494, %v1513
    %1517 = vrot.lane.b32.xlu0 %v1484, 64
    %v1518 = vpop.permute.xlu0 %1517
    %1520 = vst.msk [vmem:[#allocation3 + $0x8] sm:$0xc] %vm628, %v1518
    %1522 = vrot.lane.b32.xlu0 %v1515, 96
    %v1523 = vpop.permute.xlu0 %1522
    %1525 = vst.msk [vmem:[#allocation3] sm:$0x30] %vm634, %v1523
    %v1526 = vrot.slane %v1484, 2
    %1527 = vrot.lane.b32.xlu0 %v1526, 64
    %v1528 = vpop.permute.xlu0 %1527
    %v1529 = vsel %vm202, %v1528, 0
    %1531 = vmatprep.subr.mxu0 0.0
    %1532 = vmatpush1.msra.mxu0 0.0
    %1533 = vmatprep.subr.mxu0 0.0
    %1534 = vmatpush1.msra.mxu0 0.0
    %1535 = vmatprep.subr.mxu0 0.0
    %1536 = vmatpush1.msra.mxu0 0.0
    %1537 = vmatprep.subr.mxu0 0.0
    %1538 = vmatpush1.msra.mxu0 0.0
    %1539 = vmatprep.subr.mxu0 0.0
    %1540 = vmatpush1.msra.mxu0 0.0
    %1541 = vmatprep.subr.mxu0 0.0
    %1542 = vmatpush1.msra.mxu0 0.0
    %1543 = vmatprep.subr.mxu0 0.0
    %1544 = vmatpush1.msra.mxu0 0.0
    %1545 = vmatprep.subr.mxu0 0.0
    %1546 = vmatpush1.msra.mxu0 0.0
    %1547 = vmatprep.subr.mxu0 0.0
    %1548 = vmatpush1.msra.mxu0 0.0
    %1549 = vmatprep.subr.mxu0 0.0
    %1550 = vmatpush1.msra.mxu0 0.0
    %1551 = vmatprep.subr.mxu0 0.0
    %1552 = vmatpush1.msra.mxu0 0.0
    %1553 = vmatprep.subr.mxu0 0.0
    %1554 = vmatpush1.msra.mxu0 0.0
    %1555 = vmatprep.subr.mxu0 0.0
    %1556 = vmatpush1.msra.mxu0 %v197
    %1557 = vmatprep.subr.mxu0 0.0
    %1558 = vmatpush1.msra.mxu0 %v196
    %1559 = vmatprep.subr.mxu0 0.0
    %1560 = vmatpush1.msra.mxu0 %v195
    %1561 = vmatprep.subr.mxu0 0.0
    %1562 = vmatpush1.msra.mxu0 %v194
    %1563 = vmatprep.subr.mxu0 0.0
    %1564 = vmatpush2.msra.mxu0 0.0
    %1565 = vmatprep.subr.mxu0 0.0
    %1566 = vmatpush2.msra.mxu0 0.0
    %1567 = vmatprep.subr.mxu0 0.0
    %1568 = vmatpush2.msra.mxu0 0.0
    %1569 = vmatprep.subr.mxu0 0.0
    %1570 = vmatpush2.msra.mxu0 0.0
    %1571 = vmatprep.subr.mxu0 0.0
    %1572 = vmatpush2.msra.mxu0 0.0
    %1573 = vmatprep.subr.mxu0 0.0
    %1574 = vmatpush2.msra.mxu0 0.0
    %1575 = vmatprep.subr.mxu0 0.0
    %1576 = vmatpush2.msra.mxu0 0.0
    %1577 = vmatprep.subr.mxu0 0.0
    %1578 = vmatpush2.msra.mxu0 0.0
    %1579 = vmatprep.subr.mxu0 0.0
    %1580 = vmatpush2.msra.mxu0 0.0
    %1581 = vmatprep.subr.mxu0 0.0
    %1582 = vmatpush2.msra.mxu0 0.0
    %1583 = vmatprep.subr.mxu0 0.0
    %1584 = vmatpush2.msra.mxu0 0.0
    %1585 = vmatprep.subr.mxu0 0.0
    %1586 = vmatpush2.msra.mxu0 0.0
    %1587 = vmatprep.subr.mxu0 0.0
    %1588 = vmatpush2.msra.mxu0 0.0
    %1589 = vmatprep.subr.mxu0 0.0
    %1590 = vmatpush2.msra.mxu0 0.0
    %1591 = vmatprep.subr.mxu0 0.0
    %1592 = vmatpush2.msra.mxu0 0.0
    %1593 = vmatprep.subr.mxu0 0.0
    %1594 = vmatpush2.msra.mxu0 0.0
    %1595 = vmatprep.mubr.f32.mxu0 0.0
    %1596 = vmatmul.mubr.f32.gmra.mxu0 %v1529
    %v1597 = vpop.f32.mrf.mxu0
    %v1598 = vadd.f32 0.0, %v1597
    %v1599 = vpop.f32.mrf.mxu0
    %1600 = vdwg.mxu0
    %v1601 = vrot.slane %v1515, 4
    %1602 = vrot.lane.b32.xlu0 %v1601, 64
    %v1603 = vpop.permute.xlu0 %1602
    %v1604 = vsel %vm202, %v1603, 0
    %1606 = vmatprep.subr.mxu0 0.0
    %1607 = vmatpush1.msra.mxu0 0.0
    %1608 = vmatprep.subr.mxu0 0.0
    %1609 = vmatpush1.msra.mxu0 0.0
    %1610 = vmatprep.subr.mxu0 0.0
    %1611 = vmatpush1.msra.mxu0 0.0
    %1612 = vmatprep.subr.mxu0 0.0
    %1613 = vmatpush1.msra.mxu0 0.0
    %1614 = vmatprep.subr.mxu0 0.0
    %1615 = vmatpush1.msra.mxu0 0.0
    %1616 = vmatprep.subr.mxu0 0.0
    %1617 = vmatpush1.msra.mxu0 0.0
    %1618 = vmatprep.subr.mxu0 0.0
    %1619 = vmatpush1.msra.mxu0 0.0
    %1620 = vmatprep.subr.mxu0 0.0
    %1621 = vmatpush1.msra.mxu0 0.0
    %1622 = vmatprep.subr.mxu0 0.0
    %1623 = vmatpush1.msra.mxu0 0.0
    %1624 = vmatprep.subr.mxu0 0.0
    %1625 = vmatpush1.msra.mxu0 0.0
    %1626 = vmatprep.subr.mxu0 0.0
    %1627 = vmatpush1.msra.mxu0 0.0
    %1628 = vmatprep.subr.mxu0 0.0
    %1629 = vmatpush1.msra.mxu0 0.0
    %1630 = vmatprep.subr.mxu0 0.0
    %1631 = vmatpush1.msra.mxu0 %v201
    %1632 = vmatprep.subr.mxu0 0.0
    %1633 = vmatpush1.msra.mxu0 %v200
    %1634 = vmatprep.subr.mxu0 0.0
    %1635 = vmatpush1.msra.mxu0 %v199
    %1636 = vmatprep.subr.mxu0 0.0
    %1637 = vmatpush1.msra.mxu0 %v198
    %1638 = vmatprep.subr.mxu0 0.0
    %1639 = vmatpush2.msra.mxu0 0.0
    %1640 = vmatprep.subr.mxu0 0.0
    %1641 = vmatpush2.msra.mxu0 0.0
    %1642 = vmatprep.subr.mxu0 0.0
    %1643 = vmatpush2.msra.mxu0 0.0
    %1644 = vmatprep.subr.mxu0 0.0
    %1645 = vmatpush2.msra.mxu0 0.0
    %1646 = vmatprep.subr.mxu0 0.0
    %1647 = vmatpush2.msra.mxu0 0.0
    %1648 = vmatprep.subr.mxu0 0.0
    %1649 = vmatpush2.msra.mxu0 0.0
    %1650 = vmatprep.subr.mxu0 0.0
    %1651 = vmatpush2.msra.mxu0 0.0
    %1652 = vmatprep.subr.mxu0 0.0
    %1653 = vmatpush2.msra.mxu0 0.0
    %1654 = vmatprep.subr.mxu0 0.0
    %1655 = vmatpush2.msra.mxu0 0.0
    %1656 = vmatprep.subr.mxu0 0.0
    %1657 = vmatpush2.msra.mxu0 0.0
    %1658 = vmatprep.subr.mxu0 0.0
    %1659 = vmatpush2.msra.mxu0 0.0
    %1660 = vmatprep.subr.mxu0 0.0
    %1661 = vmatpush2.msra.mxu0 0.0
    %1662 = vmatprep.subr.mxu0 0.0
    %1663 = vmatpush2.msra.mxu0 0.0
    %1664 = vmatprep.subr.mxu0 0.0
    %1665 = vmatpush2.msra.mxu0 0.0
    %1666 = vmatprep.subr.mxu0 0.0
    %1667 = vmatpush2.msra.mxu0 0.0
    %1668 = vmatprep.subr.mxu0 0.0
    %1669 = vmatpush2.msra.mxu0 0.0
    %1670 = vmatprep.mubr.f32.mxu0 0.0
    %1671 = vmatmul.mubr.f32.gmra.mxu0 %v1604
    %v1672 = vpop.f32.mrf.mxu0
    %v1673 = vadd.f32 0.0, %v1672
    %v1674 = vpop.f32.mrf.mxu0
    %1675 = vdwg.mxu0
    %v1676 = vld [vmem:[#allocation2 + $0x10] sm:$0x30]
    %v1677 = vld [vmem:[#allocation2 + $0x8] sm:$0xc]
    %v1679 = vrot.slane %v1598, 4
    %v1681 = vadd.f32 %v1676, %v1679
    %v1682 = vxor.u32 %v1681, 2147483648
    %v1683 = vmul.f32 %v1682, 1.442695
    %v1684 = vpow.pop %v1683
    %v1685 = vadd.f32 %v1684, 1.0
    %v1686 = vrcp.pop %v1685
    %v1687 = vmul.f32 1.0, %v1686
    %v1688 = vtanh.pop %v1681
    %v1690 = vrot.slane %v1478, 6
    %v1692 = vmul.f32 %v1687, %v1690
    %1694 = vrot.lane.b32.xlu0 %v1688, 32
    %v1695 = vpop.permute.xlu0 %1694
    %v1697 = vmul.f32 %v1687, %v1695
    %1699 = vrot.lane.b32.xlu0 %v1697, 32
    %v1700 = vpop.permute.xlu0 %1699
    %v1702 = vadd.f32 %v1692, %v1700
    %v1703 = vtanh.pop %v1702
    %1705 = vrot.lane.b32.xlu0 %v1703, 32
    %v1706 = vpop.permute.xlu0 %1705
    %v1708 = vmul.f32 %v1687, %v1706
    %v1710 = vrot.slane %v1673, 6
    %v1712 = vadd.f32 %v1677, %v1710
    %v1713 = vxor.u32 %v1712, 2147483648
    %v1714 = vmul.f32 %v1713, 1.442695
    %v1715 = vpow.pop %v1714
    %v1716 = vadd.f32 %v1715, 1.0
    %v1717 = vrcp.pop %v1716
    %v1718 = vmul.f32 1.0, %v1717
    %v1719 = vtanh.pop %v1712
    %v1721 = vrot.slane %v1509, 2
    %v1723 = vmul.f32 %v1718, %v1721
    %1725 = vrot.lane.b32.xlu0 %v1719, 32
    %v1726 = vpop.permute.xlu0 %1725
    %v1728 = vmul.f32 %v1718, %v1726
    %1730 = vrot.lane.b32.xlu0 %v1728, 32
    %v1731 = vpop.permute.xlu0 %1730
    %v1733 = vadd.f32 %v1723, %v1731
    %v1734 = vtanh.pop %v1733
    %1736 = vrot.lane.b32.xlu0 %v1734, 32
    %v1737 = vpop.permute.xlu0 %1736
    %v1739 = vmul.f32 %v1718, %v1737
    %1741 = vrot.lane.b32.xlu0 %v1708, 64
    %v1742 = vpop.permute.xlu0 %1741
    %1744 = vst.msk [vmem:[#allocation3 + $0x8] sm:$0x30] %vm854, %v1742
    %1746 = vrot.lane.b32.xlu0 %v1739, 96
    %v1747 = vpop.permute.xlu0 %1746
    %1749 = vst.msk [vmem:[#allocation3] sm:$0xc] %vm860, %v1747
    %v1750 = vrot.slane %v1708, 4
    %1751 = vrot.lane.b32.xlu0 %v1750, 64
    %v1752 = vpop.permute.xlu0 %1751
    %v1753 = vsel %vm202, %v1752, 0
    %1755 = vmatprep.subr.mxu0 0.0
    %1756 = vmatpush1.msra.mxu0 0.0
    %1757 = vmatprep.subr.mxu0 0.0
    %1758 = vmatpush1.msra.mxu0 0.0
    %1759 = vmatprep.subr.mxu0 0.0
    %1760 = vmatpush1.msra.mxu0 0.0
    %1761 = vmatprep.subr.mxu0 0.0
    %1762 = vmatpush1.msra.mxu0 0.0
    %1763 = vmatprep.subr.mxu0 0.0
    %1764 = vmatpush1.msra.mxu0 0.0
    %1765 = vmatprep.subr.mxu0 0.0
    %1766 = vmatpush1.msra.mxu0 0.0
    %1767 = vmatprep.subr.mxu0 0.0
    %1768 = vmatpush1.msra.mxu0 0.0
    %1769 = vmatprep.subr.mxu0 0.0
    %1770 = vmatpush1.msra.mxu0 0.0
    %1771 = vmatprep.subr.mxu0 0.0
    %1772 = vmatpush1.msra.mxu0 0.0
    %1773 = vmatprep.subr.mxu0 0.0
    %1774 = vmatpush1.msra.mxu0 0.0
    %1775 = vmatprep.subr.mxu0 0.0
    %1776 = vmatpush1.msra.mxu0 0.0
    %1777 = vmatprep.subr.mxu0 0.0
    %1778 = vmatpush1.msra.mxu0 0.0
    %1779 = vmatprep.subr.mxu0 0.0
    %1780 = vmatpush1.msra.mxu0 %v197
    %1781 = vmatprep.subr.mxu0 0.0
    %1782 = vmatpush1.msra.mxu0 %v196
    %1783 = vmatprep.subr.mxu0 0.0
    %1784 = vmatpush1.msra.mxu0 %v195
    %1785 = vmatprep.subr.mxu0 0.0
    %1786 = vmatpush1.msra.mxu0 %v194
    %1787 = vmatprep.subr.mxu0 0.0
    %1788 = vmatpush2.msra.mxu0 0.0
    %1789 = vmatprep.subr.mxu0 0.0
    %1790 = vmatpush2.msra.mxu0 0.0
    %1791 = vmatprep.subr.mxu0 0.0
    %1792 = vmatpush2.msra.mxu0 0.0
    %1793 = vmatprep.subr.mxu0 0.0
    %1794 = vmatpush2.msra.mxu0 0.0
    %1795 = vmatprep.subr.mxu0 0.0
    %1796 = vmatpush2.msra.mxu0 0.0
    %1797 = vmatprep.subr.mxu0 0.0
    %1798 = vmatpush2.msra.mxu0 0.0
    %1799 = vmatprep.subr.mxu0 0.0
    %1800 = vmatpush2.msra.mxu0 0.0
    %1801 = vmatprep.subr.mxu0 0.0
    %1802 = vmatpush2.msra.mxu0 0.0
    %1803 = vmatprep.subr.mxu0 0.0
    %1804 = vmatpush2.msra.mxu0 0.0
    %1805 = vmatprep.subr.mxu0 0.0
    %1806 = vmatpush2.msra.mxu0 0.0
    %1807 = vmatprep.subr.mxu0 0.0
    %1808 = vmatpush2.msra.mxu0 0.0
    %1809 = vmatprep.subr.mxu0 0.0
    %1810 = vmatpush2.msra.mxu0 0.0
    %1811 = vmatprep.subr.mxu0 0.0
    %1812 = vmatpush2.msra.mxu0 0.0
    %1813 = vmatprep.subr.mxu0 0.0
    %1814 = vmatpush2.msra.mxu0 0.0
    %1815 = vmatprep.subr.mxu0 0.0
    %1816 = vmatpush2.msra.mxu0 0.0
    %1817 = vmatprep.subr.mxu0 0.0
    %1818 = vmatpush2.msra.mxu0 0.0
    %1819 = vmatprep.mubr.f32.mxu0 0.0
    %1820 = vmatmul.mubr.f32.gmra.mxu0 %v1753
    %v1821 = vpop.f32.mrf.mxu0
    %v1822 = vadd.f32 0.0, %v1821
    %v1823 = vpop.f32.mrf.mxu0
    %1824 = vdwg.mxu0
    %v1825 = vrot.slane %v1739, 2
    %1826 = vrot.lane.b32.xlu0 %v1825, 64
    %v1827 = vpop.permute.xlu0 %1826
    %v1828 = vsel %vm202, %v1827, 0
    %1830 = vmatprep.subr.mxu0 0.0
    %1831 = vmatpush1.msra.mxu0 0.0
    %1832 = vmatprep.subr.mxu0 0.0
    %1833 = vmatpush1.msra.mxu0 0.0
    %1834 = vmatprep.subr.mxu0 0.0
    %1835 = vmatpush1.msra.mxu0 0.0
    %1836 = vmatprep.subr.mxu0 0.0
    %1837 = vmatpush1.msra.mxu0 0.0
    %1838 = vmatprep.subr.mxu0 0.0
    %1839 = vmatpush1.msra.mxu0 0.0
    %1840 = vmatprep.subr.mxu0 0.0
    %1841 = vmatpush1.msra.mxu0 0.0
    %1842 = vmatprep.subr.mxu0 0.0
    %1843 = vmatpush1.msra.mxu0 0.0
    %1844 = vmatprep.subr.mxu0 0.0
    %1845 = vmatpush1.msra.mxu0 0.0
    %1846 = vmatprep.subr.mxu0 0.0
    %1847 = vmatpush1.msra.mxu0 0.0
    %1848 = vmatprep.subr.mxu0 0.0
    %1849 = vmatpush1.msra.mxu0 0.0
    %1850 = vmatprep.subr.mxu0 0.0
    %1851 = vmatpush1.msra.mxu0 0.0
    %1852 = vmatprep.subr.mxu0 0.0
    %1853 = vmatpush1.msra.mxu0 0.0
    %1854 = vmatprep.subr.mxu0 0.0
    %1855 = vmatpush1.msra.mxu0 %v201
    %1856 = vmatprep.subr.mxu0 0.0
    %1857 = vmatpush1.msra.mxu0 %v200
    %1858 = vmatprep.subr.mxu0 0.0
    %1859 = vmatpush1.msra.mxu0 %v199
    %1860 = vmatprep.subr.mxu0 0.0
    %1861 = vmatpush1.msra.mxu0 %v198
    %1862 = vmatprep.subr.mxu0 0.0
    %1863 = vmatpush2.msra.mxu0 0.0
    %1864 = vmatprep.subr.mxu0 0.0
    %1865 = vmatpush2.msra.mxu0 0.0
    %1866 = vmatprep.subr.mxu0 0.0
    %1867 = vmatpush2.msra.mxu0 0.0
    %1868 = vmatprep.subr.mxu0 0.0
    %1869 = vmatpush2.msra.mxu0 0.0
    %1870 = vmatprep.subr.mxu0 0.0
    %1871 = vmatpush2.msra.mxu0 0.0
    %1872 = vmatprep.subr.mxu0 0.0
    %1873 = vmatpush2.msra.mxu0 0.0
    %1874 = vmatprep.subr.mxu0 0.0
    %1875 = vmatpush2.msra.mxu0 0.0
    %1876 = vmatprep.subr.mxu0 0.0
    %1877 = vmatpush2.msra.mxu0 0.0
    %1878 = vmatprep.subr.mxu0 0.0
    %1879 = vmatpush2.msra.mxu0 0.0
    %1880 = vmatprep.subr.mxu0 0.0
    %1881 = vmatpush2.msra.mxu0 0.0
    %1882 = vmatprep.subr.mxu0 0.0
    %1883 = vmatpush2.msra.mxu0 0.0
    %1884 = vmatprep.subr.mxu0 0.0
    %1885 = vmatpush2.msra.mxu0 0.0
    %1886 = vmatprep.subr.mxu0 0.0
    %1887 = vmatpush2.msra.mxu0 0.0
    %1888 = vmatprep.subr.mxu0 0.0
    %1889 = vmatpush2.msra.mxu0 0.0
    %1890 = vmatprep.subr.mxu0 0.0
    %1891 = vmatpush2.msra.mxu0 0.0
    %1892 = vmatprep.subr.mxu0 0.0
    %1893 = vmatpush2.msra.mxu0 0.0
    %1894 = vmatprep.mubr.f32.mxu0 0.0
    %1895 = vmatmul.mubr.f32.gmra.mxu0 %v1828
    %v1896 = vpop.f32.mrf.mxu0
    %v1897 = vadd.f32 0.0, %v1896
    %v1898 = vpop.f32.mrf.mxu0
    %1899 = vdwg.mxu0
    %v1900 = vld [vmem:[#allocation2 + $0x10] sm:$0xc0]
    %v1901 = vld [vmem:[#allocation2 + $0x8] sm:$0x3]
    %v1903 = vrot.slane %v1822, 2
    %v1905 = vadd.f32 %v1900, %v1903
    %v1906 = vxor.u32 %v1905, 2147483648
    %v1907 = vmul.f32 %v1906, 1.442695
    %v1908 = vpow.pop %v1907
    %v1909 = vadd.f32 %v1908, 1.0
    %v1910 = vrcp.pop %v1909
    %v1911 = vmul.f32 1.0, %v1910
    %v1912 = vtanh.pop %v1905
    %v1914 = vrot.slane %v1702, 6
    %v1916 = vmul.f32 %v1911, %v1914
    %1918 = vrot.lane.b32.xlu0 %v1912, 32
    %v1919 = vpop.permute.xlu0 %1918
    %v1921 = vmul.f32 %v1911, %v1919
    %1923 = vrot.lane.b32.xlu0 %v1921, 32
    %v1924 = vpop.permute.xlu0 %1923
    %v1926 = vadd.f32 %v1916, %v1924
    %v1927 = vtanh.pop %v1926
    %1929 = vrot.lane.b32.xlu0 %v1927, 32
    %v1930 = vpop.permute.xlu0 %1929
    %v1932 = vmul.f32 %v1911, %v1930
    %v1933 = vadd.f32 %v1901, %v1897
    %v1934 = vxor.u32 %v1933, 2147483648
    %v1935 = vmul.f32 %v1934, 1.442695
    %v1936 = vpow.pop %v1935
    %v1937 = vadd.f32 %v1936, 1.0
    %v1938 = vrcp.pop %v1937
    %v1939 = vmul.f32 1.0, %v1938
    %v1940 = vtanh.pop %v1933
    %v1942 = vrot.slane %v1733, 2
    %v1944 = vmul.f32 %v1939, %v1942
    %1946 = vrot.lane.b32.xlu0 %v1940, 32
    %v1947 = vpop.permute.xlu0 %1946
    %v1949 = vmul.f32 %v1939, %v1947
    %1951 = vrot.lane.b32.xlu0 %v1949, 32
    %v1952 = vpop.permute.xlu0 %1951
    %v1954 = vadd.f32 %v1944, %v1952
    %v1955 = vtanh.pop %v1954
    %1957 = vrot.lane.b32.xlu0 %v1955, 32
    %v1958 = vpop.permute.xlu0 %1957
    %v1960 = vmul.f32 %v1939, %v1958
    %1962 = vrot.lane.b32.xlu0 %v1932, 64
    %v1963 = vpop.permute.xlu0 %1962
    %1965 = vst.msk [vmem:[#allocation3 + $0x8] sm:$0xc0] %vm1077, %v1963
    %1967 = vrot.lane.b32.xlu0 %v1960, 96
    %v1968 = vpop.permute.xlu0 %1967
    %1970 = vst.msk [vmem:[#allocation3] sm:$0x3] %vm1083, %v1968
    %v1971 = vld [vmem:[#allocation3] sm:$0xff]
    %v1972 = vld [vmem:[#allocation3 + $0x8] sm:$0xff]
    %v1973 = vld [vmem:[#allocation9] sm:$0xff]
    %v1974 = vld [vmem:[#allocation9 + $0x8] sm:$0xff]
    %v1975 = vld [vmem:[#allocation9 + $0x10] sm:$0xff]
    %v1976 = vld [vmem:[#allocation9 + $0x18] sm:$0xff]
    %v1977 = vld [vmem:[#allocation9 + $0x20] sm:$0xff]
    %v1978 = vld [vmem:[#allocation9 + $0x28] sm:$0xff]
    %v1979 = vld [vmem:[#allocation9 + $0x30] sm:$0xff]
    %v1980 = vld [vmem:[#allocation9 + $0x38] sm:$0xff]
    %v1981 = vld [vmem:[#allocation9 + $0x40] sm:$0xff]
    %v1982 = vld [vmem:[#allocation9 + $0x48] sm:$0xff]
    %v1983 = vld [vmem:[#allocation9 + $0x50] sm:$0xff]
    %v1984 = vld [vmem:[#allocation9 + $0x58] sm:$0xff]
    %v1985 = vld [vmem:[#allocation9 + $0x60] sm:$0xff]
    %v1986 = vld [vmem:[#allocation9 + $0x68] sm:$0xff]
    %v1987 = vld [vmem:[#allocation9 + $0x70] sm:$0xff]
    %v1988 = vld [vmem:[#allocation9 + $0x78] sm:$0xff]
    %v1989 = vld [vmem:[%s6] sm:$0x3]
    %v1991 = vlaneseq
    %v1992 = vshrl.u32 %v1991, 7
    %v1993 = vsub.s32 0, %v1992
    %v1994 = vrot.slane %v1989, %v1993
    %v1995 = vlaneseq
    %v1996 = vshrl.u32 %v1995, 7
    %v1997 = vsub.s32 1, %v1996
    %v1998 = vrot.slane %v1989, %v1997
    %vm2001 = vcmask 523264
    %v2003 = vsel %vm2001, %v1971, 0
    %v2006 = vsel %vm2001, %v1972, 0
    %2008 = vmatprep.subr.mxu0 0.0
    %2009 = vmatpush1.msra.mxu0 0.0
    %2010 = vmatprep.subr.mxu0 0.0
    %2011 = vmatpush1.msra.mxu0 0.0
    %2012 = vmatprep.subr.mxu0 0.0
    %2013 = vmatpush1.msra.mxu0 0.0
    %2014 = vmatprep.subr.mxu0 0.0
    %2015 = vmatpush1.msra.mxu0 0.0
    %2016 = vmatprep.subr.mxu0 0.0
    %2017 = vmatpush1.msra.mxu0 0.0
    %2018 = vmatprep.subr.mxu0 0.0
    %2019 = vmatpush1.msra.mxu0 0.0
    %2020 = vmatprep.subr.mxu0 0.0
    %2021 = vmatpush1.msra.mxu0 0.0
    %2022 = vmatprep.subr.mxu0 0.0
    %2023 = vmatpush1.msra.mxu0 0.0
    %2024 = vmatprep.subr.mxu0 %v1988
    %2025 = vmatpush1.msra.mxu0 %v1987
    %2026 = vmatprep.subr.mxu0 %v1986
    %2027 = vmatpush1.msra.mxu0 %v1985
    %2028 = vmatprep.subr.mxu0 %v1984
    %2029 = vmatpush1.msra.mxu0 %v1983
    %2030 = vmatprep.subr.mxu0 %v1982
    %2031 = vmatpush1.msra.mxu0 %v1981
    %2032 = vmatprep.subr.mxu0 %v1980
    %2033 = vmatpush1.msra.mxu0 %v1979
    %2034 = vmatprep.subr.mxu0 %v1978
    %2035 = vmatpush1.msra.mxu0 %v1977
    %2036 = vmatprep.subr.mxu0 %v1976
    %2037 = vmatpush1.msra.mxu0 %v1975
    %2038 = vmatprep.subr.mxu0 %v1974
    %2039 = vmatpush1.msra.mxu0 %v1973
    %2040 = vmatprep.subr.mxu0 0.0
    %2041 = vmatpush2.msra.mxu0 0.0
    %2042 = vmatprep.subr.mxu0 0.0
    %2043 = vmatpush2.msra.mxu0 0.0
    %2044 = vmatprep.subr.mxu0 0.0
    %2045 = vmatpush2.msra.mxu0 0.0
    %2046 = vmatprep.subr.mxu0 0.0
    %2047 = vmatpush2.msra.mxu0 0.0
    %2048 = vmatprep.subr.mxu0 0.0
    %2049 = vmatpush2.msra.mxu0 0.0
    %2050 = vmatprep.subr.mxu0 0.0
    %2051 = vmatpush2.msra.mxu0 0.0
    %2052 = vmatprep.subr.mxu0 0.0
    %2053 = vmatpush2.msra.mxu0 0.0
    %2054 = vmatprep.subr.mxu0 0.0
    %2055 = vmatpush2.msra.mxu0 0.0
    %2056 = vmatprep.subr.mxu0 0.0
    %2057 = vmatpush2.msra.mxu0 0.0
    %2058 = vmatprep.subr.mxu0 0.0
    %2059 = vmatpush2.msra.mxu0 0.0
    %2060 = vmatprep.subr.mxu0 0.0
    %2061 = vmatpush2.msra.mxu0 0.0
    %2062 = vmatprep.subr.mxu0 0.0
    %2063 = vmatpush2.msra.mxu0 0.0
    %2064 = vmatprep.subr.mxu0 0.0
    %2065 = vmatpush2.msra.mxu0 0.0
    %2066 = vmatprep.subr.mxu0 0.0
    %2067 = vmatpush2.msra.mxu0 0.0
    %2068 = vmatprep.subr.mxu0 0.0
    %2069 = vmatpush2.msra.mxu0 0.0
    %2070 = vmatprep.subr.mxu0 0.0
    %2071 = vmatpush2.msra.mxu0 0.0
    %2072 = vmatprep.mubr.f32.mxu0 0.0
    %2073 = vmatmul.mubr.f32.gmra.mxu0 %v2003
    %v2074 = vpop.f32.mrf.mxu0
    %v2075 = vadd.f32 %v1994, %v2074
    %v2076 = vpop.f32.mrf.mxu0
    %v2077 = vadd.f32 %v1998, %v2076
    %2078 = vmatprep.mubr.f32.mxu0 0.0
    %2079 = vmatmul.mubr.f32.gmra.mxu0 %v2006
    %v2080 = vpop.f32.mrf.mxu0
    %v2081 = vadd.f32 %v1994, %v2080
    %v2082 = vpop.f32.mrf.mxu0
    %v2083 = vadd.f32 %v1998, %v2082
    %2084 = vdwg.mxu0
    %2085 = vst [vmem:[#allocation2] sm:$0xff] %v2075
    %2086 = vst [vmem:[#allocation2 + $0x8] sm:$0xff] %v2077
    %2087 = vst [vmem:[#allocation2 + $0x10] sm:$0xff] %v2081
    %2088 = vst [vmem:[#allocation2 + $0x18] sm:$0xff] %v2083
    %v2089 = vld [vmem:[#allocation10] sm:$0xff]
    %v2090 = vld [vmem:[#allocation10 + $0x8] sm:$0xff]
    %v2091 = vld [vmem:[#allocation10 + $0x10] sm:$0xff]
    %v2092 = vld [vmem:[#allocation10 + $0x18] sm:$0xff]
    %2093 = vmatprep.subr.mxu0 0.0
    %2094 = vmatpush1.msra.mxu0 0.0
    %2095 = vmatprep.subr.mxu0 0.0
    %2096 = vmatpush1.msra.mxu0 0.0
    %2097 = vmatprep.subr.mxu0 0.0
    %2098 = vmatpush1.msra.mxu0 0.0
    %2099 = vmatprep.subr.mxu0 0.0
    %2100 = vmatpush1.msra.mxu0 0.0
    %2101 = vmatprep.subr.mxu0 0.0
    %2102 = vmatpush1.msra.mxu0 0.0
    %2103 = vmatprep.subr.mxu0 0.0
    %2104 = vmatpush1.msra.mxu0 0.0
    %2105 = vmatprep.subr.mxu0 0.0
    %2106 = vmatpush1.msra.mxu0 0.0
    %2107 = vmatprep.subr.mxu0 0.0
    %2108 = vmatpush1.msra.mxu0 0.0
    %2109 = vmatprep.subr.mxu0 0.0
    %2110 = vmatpush1.msra.mxu0 0.0
    %2111 = vmatprep.subr.mxu0 0.0
    %2112 = vmatpush1.msra.mxu0 0.0
    %2113 = vmatprep.subr.mxu0 0.0
    %2114 = vmatpush1.msra.mxu0 0.0
    %2115 = vmatprep.subr.mxu0 0.0
    %2116 = vmatpush1.msra.mxu0 0.0
    %2117 = vmatprep.subr.mxu0 0.0
    %2118 = vmatpush1.msra.mxu0 %v2092
    %2119 = vmatprep.subr.mxu0 0.0
    %2120 = vmatpush1.msra.mxu0 %v2091
    %2121 = vmatprep.subr.mxu0 0.0
    %2122 = vmatpush1.msra.mxu0 %v2090
    %2123 = vmatprep.subr.mxu0 0.0
    %2124 = vmatpush1.msra.mxu0 %v2089
    %2125 = vmatprep.subr.mxu0 0.0
    %2126 = vmatpush2.msra.mxu0 0.0
    %2127 = vmatprep.subr.mxu0 0.0
    %2128 = vmatpush2.msra.mxu0 0.0
    %2129 = vmatprep.subr.mxu0 0.0
    %2130 = vmatpush2.msra.mxu0 0.0
    %2131 = vmatprep.subr.mxu0 0.0
    %2132 = vmatpush2.msra.mxu0 0.0
    %2133 = vmatprep.subr.mxu0 0.0
    %2134 = vmatpush2.msra.mxu0 0.0
    %2135 = vmatprep.subr.mxu0 0.0
    %2136 = vmatpush2.msra.mxu0 0.0
    %2137 = vmatprep.subr.mxu0 0.0
    %2138 = vmatpush2.msra.mxu0 0.0
    %2139 = vmatprep.subr.mxu0 0.0
    %2140 = vmatpush2.msra.mxu0 0.0
    %2141 = vmatprep.subr.mxu0 0.0
    %2142 = vmatpush2.msra.mxu0 0.0
    %2143 = vmatprep.subr.mxu0 0.0
    %2144 = vmatpush2.msra.mxu0 0.0
    %2145 = vmatprep.subr.mxu0 0.0
    %2146 = vmatpush2.msra.mxu0 0.0
    %2147 = vmatprep.subr.mxu0 0.0
    %2148 = vmatpush2.msra.mxu0 0.0
    %2149 = vmatprep.subr.mxu0 0.0
    %2150 = vmatpush2.msra.mxu0 0.0
    %2151 = vmatprep.subr.mxu0 0.0
    %2152 = vmatpush2.msra.mxu0 0.0
    %2153 = vmatprep.subr.mxu0 0.0
    %2154 = vmatpush2.msra.mxu0 0.0
    %2155 = vmatprep.subr.mxu0 0.0
    %2156 = vmatpush2.msra.mxu0 0.0
    %2157 = vmatprep.mubr.f32.mxu0 0.0
    %2158 = vmatmul.mubr.f32.gmra.mxu0 %v204
    %v2159 = vpop.f32.mrf.mxu0
    %v2160 = vadd.f32 0.0, %v2159
    %v2161 = vpop.f32.mrf.mxu0
    %2162 = vdwg.mxu0
    %v2163 = vld [vmem:[#allocation2] sm:$0x3]
    %v2164 = vadd.f32 %v2163, %v2160
    %v2165 = vxor.u32 %v2164, 2147483648
    %v2166 = vmul.f32 %v2165, 1.442695
    %v2167 = vpow.pop %v2166
    %v2168 = vadd.f32 %v2167, 1.0
    %v2169 = vrcp.pop %v2168
    %v2170 = vmul.f32 1.0, %v2169
    %v2171 = vtanh.pop %v2164
    %v2172 = vmul.f32 %v2170, 0.0
    %2174 = vrot.lane.b32.xlu0 %v2171, 32
    %v2175 = vpop.permute.xlu0 %2174
    %v2177 = vmul.f32 %v2170, %v2175
    %2179 = vrot.lane.b32.xlu0 %v2177, 32
    %v2180 = vpop.permute.xlu0 %2179
    %v2182 = vadd.f32 %v2172, %v2180
    %v2183 = vtanh.pop %v2182
    %2185 = vrot.lane.b32.xlu0 %v2183, 32
    %v2186 = vpop.permute.xlu0 %2185
    %v2188 = vmul.f32 %v2170, %v2186
    %2190 = vrot.lane.b32.xlu0 %v2188, 64
    %v2191 = vpop.permute.xlu0 %2190
    %v2192 = vsel %vm202, %v2191, 0
    %2194 = vmatprep.subr.mxu0 0.0
    %2195 = vmatpush1.msra.mxu0 0.0
    %2196 = vmatprep.subr.mxu0 0.0
    %2197 = vmatpush1.msra.mxu0 0.0
    %2198 = vmatprep.subr.mxu0 0.0
    %2199 = vmatpush1.msra.mxu0 0.0
    %2200 = vmatprep.subr.mxu0 0.0
    %2201 = vmatpush1.msra.mxu0 0.0
    %2202 = vmatprep.subr.mxu0 0.0
    %2203 = vmatpush1.msra.mxu0 0.0
    %2204 = vmatprep.subr.mxu0 0.0
    %2205 = vmatpush1.msra.mxu0 0.0
    %2206 = vmatprep.subr.mxu0 0.0
    %2207 = vmatpush1.msra.mxu0 0.0
    %2208 = vmatprep.subr.mxu0 0.0
    %2209 = vmatpush1.msra.mxu0 0.0
    %2210 = vmatprep.subr.mxu0 0.0
    %2211 = vmatpush1.msra.mxu0 0.0
    %2212 = vmatprep.subr.mxu0 0.0
    %2213 = vmatpush1.msra.mxu0 0.0
    %2214 = vmatprep.subr.mxu0 0.0
    %2215 = vmatpush1.msra.mxu0 0.0
    %2216 = vmatprep.subr.mxu0 0.0
    %2217 = vmatpush1.msra.mxu0 0.0
    %2218 = vmatprep.subr.mxu0 0.0
    %2219 = vmatpush1.msra.mxu0 %v2092
    %2220 = vmatprep.subr.mxu0 0.0
    %2221 = vmatpush1.msra.mxu0 %v2091
    %2222 = vmatprep.subr.mxu0 0.0
    %2223 = vmatpush1.msra.mxu0 %v2090
    %2224 = vmatprep.subr.mxu0 0.0
    %2225 = vmatpush1.msra.mxu0 %v2089
    %2226 = vmatprep.subr.mxu0 0.0
    %2227 = vmatpush2.msra.mxu0 0.0
    %2228 = vmatprep.subr.mxu0 0.0
    %2229 = vmatpush2.msra.mxu0 0.0
    %2230 = vmatprep.subr.mxu0 0.0
    %2231 = vmatpush2.msra.mxu0 0.0
    %2232 = vmatprep.subr.mxu0 0.0
    %2233 = vmatpush2.msra.mxu0 0.0
    %2234 = vmatprep.subr.mxu0 0.0
    %2235 = vmatpush2.msra.mxu0 0.0
    %2236 = vmatprep.subr.mxu0 0.0
    %2237 = vmatpush2.msra.mxu0 0.0
    %2238 = vmatprep.subr.mxu0 0.0
    %2239 = vmatpush2.msra.mxu0 0.0
    %2240 = vmatprep.subr.mxu0 0.0
    %2241 = vmatpush2.msra.mxu0 0.0
    %2242 = vmatprep.subr.mxu0 0.0
    %2243 = vmatpush2.msra.mxu0 0.0
    %2244 = vmatprep.subr.mxu0 0.0
    %2245 = vmatpush2.msra.mxu0 0.0
    %2246 = vmatprep.subr.mxu0 0.0
    %2247 = vmatpush2.msra.mxu0 0.0
    %2248 = vmatprep.subr.mxu0 0.0
    %2249 = vmatpush2.msra.mxu0 0.0
    %2250 = vmatprep.subr.mxu0 0.0
    %2251 = vmatpush2.msra.mxu0 0.0
    %2252 = vmatprep.subr.mxu0 0.0
    %2253 = vmatpush2.msra.mxu0 0.0
    %2254 = vmatprep.subr.mxu0 0.0
    %2255 = vmatpush2.msra.mxu0 0.0
    %2256 = vmatprep.subr.mxu0 0.0
    %2257 = vmatpush2.msra.mxu0 0.0
    %2258 = vmatprep.mubr.f32.mxu0 0.0
    %2259 = vmatmul.mubr.f32.gmra.mxu0 %v2192
    %v2260 = vpop.f32.mrf.mxu0
    %v2261 = vadd.f32 0.0, %v2260
    %v2262 = vpop.f32.mrf.mxu0
    %2263 = vdwg.mxu0
    %v2264 = vld [vmem:[#allocation2] sm:$0xc]
    %v2266 = vrot.slane %v2261, 6
    %v2268 = vadd.f32 %v2264, %v2266
    %v2269 = vxor.u32 %v2268, 2147483648
    %v2270 = vmul.f32 %v2269, 1.442695
    %v2271 = vpow.pop %v2270
    %v2272 = vadd.f32 %v2271, 1.0
    %v2273 = vrcp.pop %v2272
    %v2274 = vmul.f32 1.0, %v2273
    %v2275 = vtanh.pop %v2268
    %v2277 = vrot.slane %v2182, 6
    %v2279 = vmul.f32 %v2274, %v2277
    %2281 = vrot.lane.b32.xlu0 %v2275, 32
    %v2282 = vpop.permute.xlu0 %2281
    %v2284 = vmul.f32 %v2274, %v2282
    %2286 = vrot.lane.b32.xlu0 %v2284, 32
    %v2287 = vpop.permute.xlu0 %2286
    %v2289 = vadd.f32 %v2279, %v2287
    %v2290 = vtanh.pop %v2289
    %2292 = vrot.lane.b32.xlu0 %v2290, 32
    %v2293 = vpop.permute.xlu0 %2292
    %v2295 = vmul.f32 %v2274, %v2293
    %v2297 = vrot.slane %v2295, 2
    %2298 = vrot.lane.b32.xlu0 %v2297, 64
    %v2299 = vpop.permute.xlu0 %2298
    %v2300 = vsel %vm202, %v2299, 0
    %2302 = vmatprep.subr.mxu0 0.0
    %2303 = vmatpush1.msra.mxu0 0.0
    %2304 = vmatprep.subr.mxu0 0.0
    %2305 = vmatpush1.msra.mxu0 0.0
    %2306 = vmatprep.subr.mxu0 0.0
    %2307 = vmatpush1.msra.mxu0 0.0
    %2308 = vmatprep.subr.mxu0 0.0
    %2309 = vmatpush1.msra.mxu0 0.0
    %2310 = vmatprep.subr.mxu0 0.0
    %2311 = vmatpush1.msra.mxu0 0.0
    %2312 = vmatprep.subr.mxu0 0.0
    %2313 = vmatpush1.msra.mxu0 0.0
    %2314 = vmatprep.subr.mxu0 0.0
    %2315 = vmatpush1.msra.mxu0 0.0
    %2316 = vmatprep.subr.mxu0 0.0
    %2317 = vmatpush1.msra.mxu0 0.0
    %2318 = vmatprep.subr.mxu0 0.0
    %2319 = vmatpush1.msra.mxu0 0.0
    %2320 = vmatprep.subr.mxu0 0.0
    %2321 = vmatpush1.msra.mxu0 0.0
    %2322 = vmatprep.subr.mxu0 0.0
    %2323 = vmatpush1.msra.mxu0 0.0
    %2324 = vmatprep.subr.mxu0 0.0
    %2325 = vmatpush1.msra.mxu0 0.0
    %2326 = vmatprep.subr.mxu0 0.0
    %2327 = vmatpush1.msra.mxu0 %v2092
    %2328 = vmatprep.subr.mxu0 0.0
    %2329 = vmatpush1.msra.mxu0 %v2091
    %2330 = vmatprep.subr.mxu0 0.0
    %2331 = vmatpush1.msra.mxu0 %v2090
    %2332 = vmatprep.subr.mxu0 0.0
    %2333 = vmatpush1.msra.mxu0 %v2089
    %2334 = vmatprep.subr.mxu0 0.0
    %2335 = vmatpush2.msra.mxu0 0.0
    %2336 = vmatprep.subr.mxu0 0.0
    %2337 = vmatpush2.msra.mxu0 0.0
    %2338 = vmatprep.subr.mxu0 0.0
    %2339 = vmatpush2.msra.mxu0 0.0
    %2340 = vmatprep.subr.mxu0 0.0
    %2341 = vmatpush2.msra.mxu0 0.0
    %2342 = vmatprep.subr.mxu0 0.0
    %2343 = vmatpush2.msra.mxu0 0.0
    %2344 = vmatprep.subr.mxu0 0.0
    %2345 = vmatpush2.msra.mxu0 0.0
    %2346 = vmatprep.subr.mxu0 0.0
    %2347 = vmatpush2.msra.mxu0 0.0
    %2348 = vmatprep.subr.mxu0 0.0
    %2349 = vmatpush2.msra.mxu0 0.0
    %2350 = vmatprep.subr.mxu0 0.0
    %2351 = vmatpush2.msra.mxu0 0.0
    %2352 = vmatprep.subr.mxu0 0.0
    %2353 = vmatpush2.msra.mxu0 0.0
    %2354 = vmatprep.subr.mxu0 0.0
    %2355 = vmatpush2.msra.mxu0 0.0
    %2356 = vmatprep.subr.mxu0 0.0
    %2357 = vmatpush2.msra.mxu0 0.0
    %2358 = vmatprep.subr.mxu0 0.0
    %2359 = vmatpush2.msra.mxu0 0.0
    %2360 = vmatprep.subr.mxu0 0.0
    %2361 = vmatpush2.msra.mxu0 0.0
    %2362 = vmatprep.subr.mxu0 0.0
    %2363 = vmatpush2.msra.mxu0 0.0
    %2364 = vmatprep.subr.mxu0 0.0
    %2365 = vmatpush2.msra.mxu0 0.0
    %2366 = vmatprep.mubr.f32.mxu0 0.0
    %2367 = vmatmul.mubr.f32.gmra.mxu0 %v2300
    %v2368 = vpop.f32.mrf.mxu0
    %v2369 = vadd.f32 0.0, %v2368
    %v2370 = vpop.f32.mrf.mxu0
    %2371 = vdwg.mxu0
    %v2372 = vld [vmem:[#allocation2] sm:$0x30]
    %v2374 = vrot.slane %v2369, 4
    %v2376 = vadd.f32 %v2372, %v2374
    %v2377 = vxor.u32 %v2376, 2147483648
    %v2378 = vmul.f32 %v2377, 1.442695
    %v2379 = vpow.pop %v2378
    %v2380 = vadd.f32 %v2379, 1.0
    %v2381 = vrcp.pop %v2380
    %v2382 = vmul.f32 1.0, %v2381
    %v2383 = vtanh.pop %v2376
    %v2385 = vrot.slane %v2289, 6
    %v2387 = vmul.f32 %v2382, %v2385
    %2389 = vrot.lane.b32.xlu0 %v2383, 32
    %v2390 = vpop.permute.xlu0 %2389
    %v2392 = vmul.f32 %v2382, %v2390
    %2394 = vrot.lane.b32.xlu0 %v2392, 32
    %v2395 = vpop.permute.xlu0 %2394
    %v2397 = vadd.f32 %v2387, %v2395
    %v2398 = vtanh.pop %v2397
    %2400 = vrot.lane.b32.xlu0 %v2398, 32
    %v2401 = vpop.permute.xlu0 %2400
    %v2403 = vmul.f32 %v2382, %v2401
    %v2405 = vrot.slane %v2403, 4
    %2406 = vrot.lane.b32.xlu0 %v2405, 64
    %v2407 = vpop.permute.xlu0 %2406
    %v2408 = vsel %vm202, %v2407, 0
    %2410 = vmatprep.subr.mxu0 0.0
    %2411 = vmatpush1.msra.mxu0 0.0
    %2412 = vmatprep.subr.mxu0 0.0
    %2413 = vmatpush1.msra.mxu0 0.0
    %2414 = vmatprep.subr.mxu0 0.0
    %2415 = vmatpush1.msra.mxu0 0.0
    %2416 = vmatprep.subr.mxu0 0.0
    %2417 = vmatpush1.msra.mxu0 0.0
    %2418 = vmatprep.subr.mxu0 0.0
    %2419 = vmatpush1.msra.mxu0 0.0
    %2420 = vmatprep.subr.mxu0 0.0
    %2421 = vmatpush1.msra.mxu0 0.0
    %2422 = vmatprep.subr.mxu0 0.0
    %2423 = vmatpush1.msra.mxu0 0.0
    %2424 = vmatprep.subr.mxu0 0.0
    %2425 = vmatpush1.msra.mxu0 0.0
    %2426 = vmatprep.subr.mxu0 0.0
    %2427 = vmatpush1.msra.mxu0 0.0
    %2428 = vmatprep.subr.mxu0 0.0
    %2429 = vmatpush1.msra.mxu0 0.0
    %2430 = vmatprep.subr.mxu0 0.0
    %2431 = vmatpush1.msra.mxu0 0.0
    %2432 = vmatprep.subr.mxu0 0.0
    %2433 = vmatpush1.msra.mxu0 0.0
    %2434 = vmatprep.subr.mxu0 0.0
    %2435 = vmatpush1.msra.mxu0 %v2092
    %2436 = vmatprep.subr.mxu0 0.0
    %2437 = vmatpush1.msra.mxu0 %v2091
    %2438 = vmatprep.subr.mxu0 0.0
    %2439 = vmatpush1.msra.mxu0 %v2090
    %2440 = vmatprep.subr.mxu0 0.0
    %2441 = vmatpush1.msra.mxu0 %v2089
    %2442 = vmatprep.subr.mxu0 0.0
    %2443 = vmatpush2.msra.mxu0 0.0
    %2444 = vmatprep.subr.mxu0 0.0
    %2445 = vmatpush2.msra.mxu0 0.0
    %2446 = vmatprep.subr.mxu0 0.0
    %2447 = vmatpush2.msra.mxu0 0.0
    %2448 = vmatprep.subr.mxu0 0.0
    %2449 = vmatpush2.msra.mxu0 0.0
    %2450 = vmatprep.subr.mxu0 0.0
    %2451 = vmatpush2.msra.mxu0 0.0
    %2452 = vmatprep.subr.mxu0 0.0
    %2453 = vmatpush2.msra.mxu0 0.0
    %2454 = vmatprep.subr.mxu0 0.0
    %2455 = vmatpush2.msra.mxu0 0.0
    %2456 = vmatprep.subr.mxu0 0.0
    %2457 = vmatpush2.msra.mxu0 0.0
    %2458 = vmatprep.subr.mxu0 0.0
    %2459 = vmatpush2.msra.mxu0 0.0
    %2460 = vmatprep.subr.mxu0 0.0
    %2461 = vmatpush2.msra.mxu0 0.0
    %2462 = vmatprep.subr.mxu0 0.0
    %2463 = vmatpush2.msra.mxu0 0.0
    %2464 = vmatprep.subr.mxu0 0.0
    %2465 = vmatpush2.msra.mxu0 0.0
    %2466 = vmatprep.subr.mxu0 0.0
    %2467 = vmatpush2.msra.mxu0 0.0
    %2468 = vmatprep.subr.mxu0 0.0
    %2469 = vmatpush2.msra.mxu0 0.0
    %2470 = vmatprep.subr.mxu0 0.0
    %2471 = vmatpush2.msra.mxu0 0.0
    %2472 = vmatprep.subr.mxu0 0.0
    %2473 = vmatpush2.msra.mxu0 0.0
    %2474 = vmatprep.mubr.f32.mxu0 0.0
    %2475 = vmatmul.mubr.f32.gmra.mxu0 %v2408
    %v2476 = vpop.f32.mrf.mxu0
    %v2477 = vadd.f32 0.0, %v2476
    %v2478 = vpop.f32.mrf.mxu0
    %2479 = vdwg.mxu0
    %v2480 = vld [vmem:[#allocation2] sm:$0xc0]
    %v2482 = vrot.slane %v2477, 2
    %v2484 = vadd.f32 %v2480, %v2482
    %v2485 = vxor.u32 %v2484, 2147483648
    %v2486 = vmul.f32 %v2485, 1.442695
    %v2487 = vpow.pop %v2486
    %v2488 = vadd.f32 %v2487, 1.0
    %v2489 = vrcp.pop %v2488
    %v2490 = vmul.f32 1.0, %v2489
    %v2491 = vtanh.pop %v2484
    %v2493 = vrot.slane %v2397, 6
    %v2495 = vmul.f32 %v2490, %v2493
    %2497 = vrot.lane.b32.xlu0 %v2491, 32
    %v2498 = vpop.permute.xlu0 %2497
    %v2500 = vmul.f32 %v2490, %v2498
    %2502 = vrot.lane.b32.xlu0 %v2500, 32
    %v2503 = vpop.permute.xlu0 %2502
    %v2505 = vadd.f32 %v2495, %v2503
    %v2506 = vtanh.pop %v2505
    %2508 = vrot.lane.b32.xlu0 %v2506, 32
    %v2509 = vpop.permute.xlu0 %2508
    %v2511 = vmul.f32 %v2490, %v2509
    %v2513 = vrot.slane %v2511, 6
    %2514 = vrot.lane.b32.xlu0 %v2513, 64
    %v2515 = vpop.permute.xlu0 %2514
    %v2516 = vsel %vm202, %v2515, 0
    %2518 = vmatprep.subr.mxu0 0.0
    %2519 = vmatpush1.msra.mxu0 0.0
    %2520 = vmatprep.subr.mxu0 0.0
    %2521 = vmatpush1.msra.mxu0 0.0
    %2522 = vmatprep.subr.mxu0 0.0
    %2523 = vmatpush1.msra.mxu0 0.0
    %2524 = vmatprep.subr.mxu0 0.0
    %2525 = vmatpush1.msra.mxu0 0.0
    %2526 = vmatprep.subr.mxu0 0.0
    %2527 = vmatpush1.msra.mxu0 0.0
    %2528 = vmatprep.subr.mxu0 0.0
    %2529 = vmatpush1.msra.mxu0 0.0
    %2530 = vmatprep.subr.mxu0 0.0
    %2531 = vmatpush1.msra.mxu0 0.0
    %2532 = vmatprep.subr.mxu0 0.0
    %2533 = vmatpush1.msra.mxu0 0.0
    %2534 = vmatprep.subr.mxu0 0.0
    %2535 = vmatpush1.msra.mxu0 0.0
    %2536 = vmatprep.subr.mxu0 0.0
    %2537 = vmatpush1.msra.mxu0 0.0
    %2538 = vmatprep.subr.mxu0 0.0
    %2539 = vmatpush1.msra.mxu0 0.0
    %2540 = vmatprep.subr.mxu0 0.0
    %2541 = vmatpush1.msra.mxu0 0.0
    %2542 = vmatprep.subr.mxu0 0.0
    %2543 = vmatpush1.msra.mxu0 %v2092
    %2544 = vmatprep.subr.mxu0 0.0
    %2545 = vmatpush1.msra.mxu0 %v2091
    %2546 = vmatprep.subr.mxu0 0.0
    %2547 = vmatpush1.msra.mxu0 %v2090
    %2548 = vmatprep.subr.mxu0 0.0
    %2549 = vmatpush1.msra.mxu0 %v2089
    %2550 = vmatprep.subr.mxu0 0.0
    %2551 = vmatpush2.msra.mxu0 0.0
    %2552 = vmatprep.subr.mxu0 0.0
    %2553 = vmatpush2.msra.mxu0 0.0
    %2554 = vmatprep.subr.mxu0 0.0
    %2555 = vmatpush2.msra.mxu0 0.0
    %2556 = vmatprep.subr.mxu0 0.0
    %2557 = vmatpush2.msra.mxu0 0.0
    %2558 = vmatprep.subr.mxu0 0.0
    %2559 = vmatpush2.msra.mxu0 0.0
    %2560 = vmatprep.subr.mxu0 0.0
    %2561 = vmatpush2.msra.mxu0 0.0
    %2562 = vmatprep.subr.mxu0 0.0
    %2563 = vmatpush2.msra.mxu0 0.0
    %2564 = vmatprep.subr.mxu0 0.0
    %2565 = vmatpush2.msra.mxu0 0.0
    %2566 = vmatprep.subr.mxu0 0.0
    %2567 = vmatpush2.msra.mxu0 0.0
    %2568 = vmatprep.subr.mxu0 0.0
    %2569 = vmatpush2.msra.mxu0 0.0
    %2570 = vmatprep.subr.mxu0 0.0
    %2571 = vmatpush2.msra.mxu0 0.0
    %2572 = vmatprep.subr.mxu0 0.0
    %2573 = vmatpush2.msra.mxu0 0.0
    %2574 = vmatprep.subr.mxu0 0.0
    %2575 = vmatpush2.msra.mxu0 0.0
    %2576 = vmatprep.subr.mxu0 0.0
    %2577 = vmatpush2.msra.mxu0 0.0
    %2578 = vmatprep.subr.mxu0 0.0
    %2579 = vmatpush2.msra.mxu0 0.0
    %2580 = vmatprep.subr.mxu0 0.0
    %2581 = vmatpush2.msra.mxu0 0.0
    %2582 = vmatprep.mubr.f32.mxu0 0.0
    %2583 = vmatmul.mubr.f32.gmra.mxu0 %v2516
    %v2584 = vpop.f32.mrf.mxu0
    %v2585 = vadd.f32 0.0, %v2584
    %v2586 = vpop.f32.mrf.mxu0
    %2587 = vdwg.mxu0
    %v2588 = vld [vmem:[#allocation2 + $0x10] sm:$0x3]
    %v2589 = vadd.f32 %v2588, %v2585
    %v2590 = vxor.u32 %v2589, 2147483648
    %v2591 = vmul.f32 %v2590, 1.442695
    %v2592 = vpow.pop %v2591
    %v2593 = vadd.f32 %v2592, 1.0
    %v2594 = vrcp.pop %v2593
    %v2595 = vmul.f32 1.0, %v2594
    %v2596 = vtanh.pop %v2589
    %v2598 = vrot.slane %v2505, 6
    %v2600 = vmul.f32 %v2595, %v2598
    %2602 = vrot.lane.b32.xlu0 %v2596, 32
    %v2603 = vpop.permute.xlu0 %2602
    %v2605 = vmul.f32 %v2595, %v2603
    %2607 = vrot.lane.b32.xlu0 %v2605, 32
    %v2608 = vpop.permute.xlu0 %2607
    %v2610 = vadd.f32 %v2600, %v2608
    %v2611 = vtanh.pop %v2610
    %2613 = vrot.lane.b32.xlu0 %v2611, 32
    %v2614 = vpop.permute.xlu0 %2613
    %v2616 = vmul.f32 %v2595, %v2614
    %2618 = vrot.lane.b32.xlu0 %v2616, 64
    %v2619 = vpop.permute.xlu0 %2618
    %v2620 = vsel %vm202, %v2619, 0
    %2622 = vmatprep.subr.mxu0 0.0
    %2623 = vmatpush1.msra.mxu0 0.0
    %2624 = vmatprep.subr.mxu0 0.0
    %2625 = vmatpush1.msra.mxu0 0.0
    %2626 = vmatprep.subr.mxu0 0.0
    %2627 = vmatpush1.msra.mxu0 0.0
    %2628 = vmatprep.subr.mxu0 0.0
    %2629 = vmatpush1.msra.mxu0 0.0
    %2630 = vmatprep.subr.mxu0 0.0
    %2631 = vmatpush1.msra.mxu0 0.0
    %2632 = vmatprep.subr.mxu0 0.0
    %2633 = vmatpush1.msra.mxu0 0.0
    %2634 = vmatprep.subr.mxu0 0.0
    %2635 = vmatpush1.msra.mxu0 0.0
    %2636 = vmatprep.subr.mxu0 0.0
    %2637 = vmatpush1.msra.mxu0 0.0
    %2638 = vmatprep.subr.mxu0 0.0
    %2639 = vmatpush1.msra.mxu0 0.0
    %2640 = vmatprep.subr.mxu0 0.0
    %2641 = vmatpush1.msra.mxu0 0.0
    %2642 = vmatprep.subr.mxu0 0.0
    %2643 = vmatpush1.msra.mxu0 0.0
    %2644 = vmatprep.subr.mxu0 0.0
    %2645 = vmatpush1.msra.mxu0 0.0
    %2646 = vmatprep.subr.mxu0 0.0
    %2647 = vmatpush1.msra.mxu0 %v2092
    %2648 = vmatprep.subr.mxu0 0.0
    %2649 = vmatpush1.msra.mxu0 %v2091
    %2650 = vmatprep.subr.mxu0 0.0
    %2651 = vmatpush1.msra.mxu0 %v2090
    %2652 = vmatprep.subr.mxu0 0.0
    %2653 = vmatpush1.msra.mxu0 %v2089
    %2654 = vmatprep.subr.mxu0 0.0
    %2655 = vmatpush2.msra.mxu0 0.0
    %2656 = vmatprep.subr.mxu0 0.0
    %2657 = vmatpush2.msra.mxu0 0.0
    %2658 = vmatprep.subr.mxu0 0.0
    %2659 = vmatpush2.msra.mxu0 0.0
    %2660 = vmatprep.subr.mxu0 0.0
    %2661 = vmatpush2.msra.mxu0 0.0
    %2662 = vmatprep.subr.mxu0 0.0
    %2663 = vmatpush2.msra.mxu0 0.0
    %2664 = vmatprep.subr.mxu0 0.0
    %2665 = vmatpush2.msra.mxu0 0.0
    %2666 = vmatprep.subr.mxu0 0.0
    %2667 = vmatpush2.msra.mxu0 0.0
    %2668 = vmatprep.subr.mxu0 0.0
    %2669 = vmatpush2.msra.mxu0 0.0
    %2670 = vmatprep.subr.mxu0 0.0
    %2671 = vmatpush2.msra.mxu0 0.0
    %2672 = vmatprep.subr.mxu0 0.0
    %2673 = vmatpush2.msra.mxu0 0.0
    %2674 = vmatprep.subr.mxu0 0.0
    %2675 = vmatpush2.msra.mxu0 0.0
    %2676 = vmatprep.subr.mxu0 0.0
    %2677 = vmatpush2.msra.mxu0 0.0
    %2678 = vmatprep.subr.mxu0 0.0
    %2679 = vmatpush2.msra.mxu0 0.0
    %2680 = vmatprep.subr.mxu0 0.0
    %2681 = vmatpush2.msra.mxu0 0.0
    %2682 = vmatprep.subr.mxu0 0.0
    %2683 = vmatpush2.msra.mxu0 0.0
    %2684 = vmatprep.subr.mxu0 0.0
    %2685 = vmatpush2.msra.mxu0 0.0
    %2686 = vmatprep.mubr.f32.mxu0 0.0
    %2687 = vmatmul.mubr.f32.gmra.mxu0 %v2620
    %v2688 = vpop.f32.mrf.mxu0
    %v2689 = vadd.f32 0.0, %v2688
    %v2690 = vpop.f32.mrf.mxu0
    %2691 = vdwg.mxu0
    %v2692 = vld [vmem:[#allocation2 + $0x10] sm:$0xc]
    %v2694 = vrot.slane %v2689, 6
    %v2696 = vadd.f32 %v2692, %v2694
    %v2697 = vxor.u32 %v2696, 2147483648
    %v2698 = vmul.f32 %v2697, 1.442695
    %v2699 = vpow.pop %v2698
    %v2700 = vadd.f32 %v2699, 1.0
    %v2701 = vrcp.pop %v2700
    %v2702 = vmul.f32 1.0, %v2701
    %v2703 = vtanh.pop %v2696
    %v2705 = vrot.slane %v2610, 6
    %v2707 = vmul.f32 %v2702, %v2705
    %2709 = vrot.lane.b32.xlu0 %v2703, 32
    %v2710 = vpop.permute.xlu0 %2709
    %v2712 = vmul.f32 %v2702, %v2710
    %2714 = vrot.lane.b32.xlu0 %v2712, 32
    %v2715 = vpop.permute.xlu0 %2714
    %v2717 = vadd.f32 %v2707, %v2715
    %v2718 = vtanh.pop %v2717
    %2720 = vrot.lane.b32.xlu0 %v2718, 32
    %v2721 = vpop.permute.xlu0 %2720
    %v2723 = vmul.f32 %v2702, %v2721
    %v2725 = vrot.slane %v2723, 2
    %2726 = vrot.lane.b32.xlu0 %v2725, 64
    %v2727 = vpop.permute.xlu0 %2726
    %v2728 = vsel %vm202, %v2727, 0
    %2730 = vmatprep.subr.mxu0 0.0
    %2731 = vmatpush1.msra.mxu0 0.0
    %2732 = vmatprep.subr.mxu0 0.0
    %2733 = vmatpush1.msra.mxu0 0.0
    %2734 = vmatprep.subr.mxu0 0.0
    %2735 = vmatpush1.msra.mxu0 0.0
    %2736 = vmatprep.subr.mxu0 0.0
    %2737 = vmatpush1.msra.mxu0 0.0
    %2738 = vmatprep.subr.mxu0 0.0
    %2739 = vmatpush1.msra.mxu0 0.0
    %2740 = vmatprep.subr.mxu0 0.0
    %2741 = vmatpush1.msra.mxu0 0.0
    %2742 = vmatprep.subr.mxu0 0.0
    %2743 = vmatpush1.msra.mxu0 0.0
    %2744 = vmatprep.subr.mxu0 0.0
    %2745 = vmatpush1.msra.mxu0 0.0
    %2746 = vmatprep.subr.mxu0 0.0
    %2747 = vmatpush1.msra.mxu0 0.0
    %2748 = vmatprep.subr.mxu0 0.0
    %2749 = vmatpush1.msra.mxu0 0.0
    %2750 = vmatprep.subr.mxu0 0.0
    %2751 = vmatpush1.msra.mxu0 0.0
    %2752 = vmatprep.subr.mxu0 0.0
    %2753 = vmatpush1.msra.mxu0 0.0
    %2754 = vmatprep.subr.mxu0 0.0
    %2755 = vmatpush1.msra.mxu0 %v2092
    %2756 = vmatprep.subr.mxu0 0.0
    %2757 = vmatpush1.msra.mxu0 %v2091
    %2758 = vmatprep.subr.mxu0 0.0
    %2759 = vmatpush1.msra.mxu0 %v2090
    %2760 = vmatprep.subr.mxu0 0.0
    %2761 = vmatpush1.msra.mxu0 %v2089
    %2762 = vmatprep.subr.mxu0 0.0
    %2763 = vmatpush2.msra.mxu0 0.0
    %2764 = vmatprep.subr.mxu0 0.0
    %2765 = vmatpush2.msra.mxu0 0.0
    %2766 = vmatprep.subr.mxu0 0.0
    %2767 = vmatpush2.msra.mxu0 0.0
    %2768 = vmatprep.subr.mxu0 0.0
    %2769 = vmatpush2.msra.mxu0 0.0
    %2770 = vmatprep.subr.mxu0 0.0
    %2771 = vmatpush2.msra.mxu0 0.0
    %2772 = vmatprep.subr.mxu0 0.0
    %2773 = vmatpush2.msra.mxu0 0.0
    %2774 = vmatprep.subr.mxu0 0.0
    %2775 = vmatpush2.msra.mxu0 0.0
    %2776 = vmatprep.subr.mxu0 0.0
    %2777 = vmatpush2.msra.mxu0 0.0
    %2778 = vmatprep.subr.mxu0 0.0
    %2779 = vmatpush2.msra.mxu0 0.0
    %2780 = vmatprep.subr.mxu0 0.0
    %2781 = vmatpush2.msra.mxu0 0.0
    %2782 = vmatprep.subr.mxu0 0.0
    %2783 = vmatpush2.msra.mxu0 0.0
    %2784 = vmatprep.subr.mxu0 0.0
    %2785 = vmatpush2.msra.mxu0 0.0
    %2786 = vmatprep.subr.mxu0 0.0
    %2787 = vmatpush2.msra.mxu0 0.0
    %2788 = vmatprep.subr.mxu0 0.0
    %2789 = vmatpush2.msra.mxu0 0.0
    %2790 = vmatprep.subr.mxu0 0.0
    %2791 = vmatpush2.msra.mxu0 0.0
    %2792 = vmatprep.subr.mxu0 0.0
    %2793 = vmatpush2.msra.mxu0 0.0
    %2794 = vmatprep.mubr.f32.mxu0 0.0
    %2795 = vmatmul.mubr.f32.gmra.mxu0 %v2728
    %v2796 = vpop.f32.mrf.mxu0
    %v2797 = vadd.f32 0.0, %v2796
    %v2798 = vpop.f32.mrf.mxu0
    %2799 = vdwg.mxu0
    %v2800 = vld [vmem:[#allocation2 + $0x10] sm:$0x30]
    %v2802 = vrot.slane %v2797, 4
    %v2804 = vadd.f32 %v2800, %v2802
    %v2805 = vxor.u32 %v2804, 2147483648
    %v2806 = vmul.f32 %v2805, 1.442695
    %v2807 = vpow.pop %v2806
    %v2808 = vadd.f32 %v2807, 1.0
    %v2809 = vrcp.pop %v2808
    %v2810 = vmul.f32 1.0, %v2809
    %v2811 = vtanh.pop %v2804
    %v2813 = vrot.slane %v2717, 6
    %v2815 = vmul.f32 %v2810, %v2813
    %2817 = vrot.lane.b32.xlu0 %v2811, 32
    %v2818 = vpop.permute.xlu0 %2817
    %v2820 = vmul.f32 %v2810, %v2818
    %2822 = vrot.lane.b32.xlu0 %v2820, 32
    %v2823 = vpop.permute.xlu0 %2822
    %v2825 = vadd.f32 %v2815, %v2823
    %v2826 = vtanh.pop %v2825
    %2828 = vrot.lane.b32.xlu0 %v2826, 32
    %v2829 = vpop.permute.xlu0 %2828
    %v2831 = vmul.f32 %v2810, %v2829
    %v2833 = vrot.slane %v2831, 4
    %2834 = vrot.lane.b32.xlu0 %v2833, 64
    %v2835 = vpop.permute.xlu0 %2834
    %v2836 = vsel %vm202, %v2835, 0
    %2838 = vmatprep.subr.mxu0 0.0
    %2839 = vmatpush1.msra.mxu0 0.0
    %2840 = vmatprep.subr.mxu0 0.0
    %2841 = vmatpush1.msra.mxu0 0.0
    %2842 = vmatprep.subr.mxu0 0.0
    %2843 = vmatpush1.msra.mxu0 0.0
    %2844 = vmatprep.subr.mxu0 0.0
    %2845 = vmatpush1.msra.mxu0 0.0
    %2846 = vmatprep.subr.mxu0 0.0
    %2847 = vmatpush1.msra.mxu0 0.0
    %2848 = vmatprep.subr.mxu0 0.0
    %2849 = vmatpush1.msra.mxu0 0.0
    %2850 = vmatprep.subr.mxu0 0.0
    %2851 = vmatpush1.msra.mxu0 0.0
    %2852 = vmatprep.subr.mxu0 0.0
    %2853 = vmatpush1.msra.mxu0 0.0
    %2854 = vmatprep.subr.mxu0 0.0
    %2855 = vmatpush1.msra.mxu0 0.0
    %2856 = vmatprep.subr.mxu0 0.0
    %2857 = vmatpush1.msra.mxu0 0.0
    %2858 = vmatprep.subr.mxu0 0.0
    %2859 = vmatpush1.msra.mxu0 0.0
    %2860 = vmatprep.subr.mxu0 0.0
    %2861 = vmatpush1.msra.mxu0 0.0
    %2862 = vmatprep.subr.mxu0 0.0
    %2863 = vmatpush1.msra.mxu0 %v2092
    %2864 = vmatprep.subr.mxu0 0.0
    %2865 = vmatpush1.msra.mxu0 %v2091
    %2866 = vmatprep.subr.mxu0 0.0
    %2867 = vmatpush1.msra.mxu0 %v2090
    %2868 = vmatprep.subr.mxu0 0.0
    %2869 = vmatpush1.msra.mxu0 %v2089
    %2870 = vmatprep.subr.mxu0 0.0
    %2871 = vmatpush2.msra.mxu0 0.0
    %2872 = vmatprep.subr.mxu0 0.0
    %2873 = vmatpush2.msra.mxu0 0.0
    %2874 = vmatprep.subr.mxu0 0.0
    %2875 = vmatpush2.msra.mxu0 0.0
    %2876 = vmatprep.subr.mxu0 0.0
    %2877 = vmatpush2.msra.mxu0 0.0
    %2878 = vmatprep.subr.mxu0 0.0
    %2879 = vmatpush2.msra.mxu0 0.0
    %2880 = vmatprep.subr.mxu0 0.0
    %2881 = vmatpush2.msra.mxu0 0.0
    %2882 = vmatprep.subr.mxu0 0.0
    %2883 = vmatpush2.msra.mxu0 0.0
    %2884 = vmatprep.subr.mxu0 0.0
    %2885 = vmatpush2.msra.mxu0 0.0
    %2886 = vmatprep.subr.mxu0 0.0
    %2887 = vmatpush2.msra.mxu0 0.0
    %2888 = vmatprep.subr.mxu0 0.0
    %2889 = vmatpush2.msra.mxu0 0.0
    %2890 = vmatprep.subr.mxu0 0.0
    %2891 = vmatpush2.msra.mxu0 0.0
    %2892 = vmatprep.subr.mxu0 0.0
    %2893 = vmatpush2.msra.mxu0 0.0
    %2894 = vmatprep.subr.mxu0 0.0
    %2895 = vmatpush2.msra.mxu0 0.0
    %2896 = vmatprep.subr.mxu0 0.0
    %2897 = vmatpush2.msra.mxu0 0.0
    %2898 = vmatprep.subr.mxu0 0.0
    %2899 = vmatpush2.msra.mxu0 0.0
    %2900 = vmatprep.subr.mxu0 0.0
    %2901 = vmatpush2.msra.mxu0 0.0
    %2902 = vmatprep.mubr.f32.mxu0 0.0
    %2903 = vmatmul.mubr.f32.gmra.mxu0 %v2836
    %v2904 = vpop.f32.mrf.mxu0
    %v2905 = vadd.f32 0.0, %v2904
    %v2906 = vpop.f32.mrf.mxu0
    %2907 = vdwg.mxu0
    %v2908 = vld [vmem:[#allocation2 + $0x10] sm:$0xc0]
    %v2909 = vld [vmem:[#allocation2 + $0x18] sm:$0xc0]
    %v2911 = vrot.slane %v2905, 2
    %v2913 = vadd.f32 %v2908, %v2911
    %v2914 = vxor.u32 %v2913, 2147483648
    %v2915 = vmul.f32 %v2914, 1.442695
    %v2916 = vpow.pop %v2915
    %v2917 = vadd.f32 %v2916, 1.0
    %v2918 = vrcp.pop %v2917
    %v2919 = vmul.f32 1.0, %v2918
    %v2920 = vtanh.pop %v2913
    %v2922 = vrot.slane %v2825, 6
    %v2924 = vmul.f32 %v2919, %v2922
    %2926 = vrot.lane.b32.xlu0 %v2920, 32
    %v2927 = vpop.permute.xlu0 %2926
    %v2929 = vmul.f32 %v2919, %v2927
    %2931 = vrot.lane.b32.xlu0 %v2929, 32
    %v2932 = vpop.permute.xlu0 %2931
    %v2934 = vadd.f32 %v2924, %v2932
    %v2935 = vtanh.pop %v2934
    %2937 = vrot.lane.b32.xlu0 %v2935, 32
    %v2938 = vpop.permute.xlu0 %2937
    %v2940 = vmul.f32 %v2919, %v2938
    %v2941 = vxor.u32 %v2909, 2147483648
    %v2942 = vmul.f32 %v2941, 1.442695
    %v2943 = vpow.pop %v2942
    %v2944 = vadd.f32 %v2943, 1.0
    %v2945 = vrcp.pop %v2944
    %v2946 = vmul.f32 1.0, %v2945
    %v2947 = vtanh.pop %v2909
    %v2948 = vmul.f32 %v2946, 0.0
    %2950 = vrot.lane.b32.xlu0 %v2947, 32
    %v2951 = vpop.permute.xlu0 %2950
    %v2953 = vmul.f32 %v2946, %v2951
    %2955 = vrot.lane.b32.xlu0 %v2953, 32
    %v2956 = vpop.permute.xlu0 %2955
    %v2958 = vadd.f32 %v2948, %v2956
    %v2959 = vtanh.pop %v2958
    %2961 = vrot.lane.b32.xlu0 %v2959, 32
    %v2962 = vpop.permute.xlu0 %2961
    %v2964 = vmul.f32 %v2946, %v2962
    %2966 = vrot.lane.b32.xlu0 %v2940, 64
    %v2967 = vpop.permute.xlu0 %2966
    %2970 = vrot.lane.b32.xlu0 %v2964, 96
    %v2971 = vpop.permute.xlu0 %2970
    %v2973 = vsel %vm202, %v2967, %v2971
    %v2974 = vld [vmem:[%s7] sm:$0xff]
    %v2975 = vld [vmem:[%s7 + $0x8] sm:$0xff]
    %v2976 = vld [vmem:[%s7 + $0x10] sm:$0xff]
    %v2977 = vld [vmem:[%s7 + $0x18] sm:$0xff]
    %v2978 = vld [vmem:[%s7 + $0x20] sm:$0xff]
    %v2979 = vld [vmem:[%s7 + $0x28] sm:$0xff]
    %v2980 = vld [vmem:[%s7 + $0x30] sm:$0xff]
    %v2981 = vld [vmem:[%s7 + $0x38] sm:$0xff]
    %v2982 = vld [vmem:[%s8] sm:$0x1]
    %v2984 = vlaneseq
    %v2985 = vshrl.u32 %v2984, 7
    %v2986 = vsub.s32 0, %v2985
    %v2987 = vrot.slane %v2982, %v2986
    %v2990 = vrot.slane %v2973, 6
    %v2991 = vsel %vm2001, %v2990, 0
    %2993 = vmatprep.subr.mxu0 0.0
    %2994 = vmatpush1.msra.mxu0 0.0
    %2995 = vmatprep.subr.mxu0 0.0
    %2996 = vmatpush1.msra.mxu0 0.0
    %2997 = vmatprep.subr.mxu0 0.0
    %2998 = vmatpush1.msra.mxu0 0.0
    %2999 = vmatprep.subr.mxu0 0.0
    %3000 = vmatpush1.msra.mxu0 0.0
    %3001 = vmatprep.subr.mxu0 0.0
    %3002 = vmatpush1.msra.mxu0 0.0
    %3003 = vmatprep.subr.mxu0 0.0
    %3004 = vmatpush1.msra.mxu0 0.0
    %3005 = vmatprep.subr.mxu0 0.0
    %3006 = vmatpush1.msra.mxu0 0.0
    %3007 = vmatprep.subr.mxu0 0.0
    %3008 = vmatpush1.msra.mxu0 0.0
    %3009 = vmatprep.subr.mxu0 0.0
    %3010 = vmatpush1.msra.mxu0 %v2981
    %3011 = vmatprep.subr.mxu0 0.0
    %3012 = vmatpush1.msra.mxu0 %v2980
    %3013 = vmatprep.subr.mxu0 0.0
    %3014 = vmatpush1.msra.mxu0 %v2979
    %3015 = vmatprep.subr.mxu0 0.0
    %3016 = vmatpush1.msra.mxu0 %v2978
    %3017 = vmatprep.subr.mxu0 0.0
    %3018 = vmatpush1.msra.mxu0 %v2977
    %3019 = vmatprep.subr.mxu0 0.0
    %3020 = vmatpush1.msra.mxu0 %v2976
    %3021 = vmatprep.subr.mxu0 0.0
    %3022 = vmatpush1.msra.mxu0 %v2975
    %3023 = vmatprep.subr.mxu0 0.0
    %3024 = vmatpush1.msra.mxu0 %v2974
    %3025 = vmatprep.subr.mxu0 0.0
    %3026 = vmatpush2.msra.mxu0 0.0
    %3027 = vmatprep.subr.mxu0 0.0
    %3028 = vmatpush2.msra.mxu0 0.0
    %3029 = vmatprep.subr.mxu0 0.0
    %3030 = vmatpush2.msra.mxu0 0.0
    %3031 = vmatprep.subr.mxu0 0.0
    %3032 = vmatpush2.msra.mxu0 0.0
    %3033 = vmatprep.subr.mxu0 0.0
    %3034 = vmatpush2.msra.mxu0 0.0
    %3035 = vmatprep.subr.mxu0 0.0
    %3036 = vmatpush2.msra.mxu0 0.0
    %3037 = vmatprep.subr.mxu0 0.0
    %3038 = vmatpush2.msra.mxu0 0.0
    %3039 = vmatprep.subr.mxu0 0.0
    %3040 = vmatpush2.msra.mxu0 0.0
    %3041 = vmatprep.subr.mxu0 0.0
    %3042 = vmatpush2.msra.mxu0 0.0
    %3043 = vmatprep.subr.mxu0 0.0
    %3044 = vmatpush2.msra.mxu0 0.0
    %3045 = vmatprep.subr.mxu0 0.0
    %3046 = vmatpush2.msra.mxu0 0.0
    %3047 = vmatprep.subr.mxu0 0.0
    %3048 = vmatpush2.msra.mxu0 0.0
    %3049 = vmatprep.subr.mxu0 0.0
    %3050 = vmatpush2.msra.mxu0 0.0
    %3051 = vmatprep.subr.mxu0 0.0
    %3052 = vmatpush2.msra.mxu0 0.0
    %3053 = vmatprep.subr.mxu0 0.0
    %3054 = vmatpush2.msra.mxu0 0.0
    %3055 = vmatprep.subr.mxu0 0.0
    %3056 = vmatpush2.msra.mxu0 0.0
    %3057 = vmatprep.mubr.f32.mxu0 0.0
    %3058 = vmatmul.mubr.f32.gmra.mxu0 %v2991
    %v3059 = vpop.f32.mrf.mxu0
    %v3060 = vadd.f32 %v2987, %v3059
    %v3061 = vpop.f32.mrf.mxu0
    %3062 = vdwg.mxu0
    %vm3063 = vcmask 33792
    %3064 = vst.msk [vmem:[#allocation12] sm:$0x3] %vm3063, %v3060
    // Predicated region
    $region54: #{tpu_custom_call.1} parent=1 // pred_check
      _
    $region55: #{tpu_custom_call.1} parent=1 // pred_check_branch
      %3066 = sbr.rel (0) target = $region57
    $region56: #{tpu_custom_call.1} parent=1 // pred_region
      %s3068 = ssub.s32 32, 32
      %3069 = vsyncadd [#allocation6], %s3068
      %s3071 = sshll.u32 [#allocation12], 4
      %s3072 = int_to_ptr.vmem [resolvable:$true] %s3071
      %3074 = dma.vmem_to_hbm [thread:$0]  %s3072, 32, %s9, [#allocation6]
    $region57: #{tpu_custom_call.1} parent=1 // pred_fallthru
      _
    // Predicated region
    $region58: #{tpu_custom_call.1} parent=1 // pred_check
      _
    $region59: #{tpu_custom_call.1} parent=1 // pred_check_branch
      %3076 = sbr.rel (0) target = $region61
    $region60: #{tpu_custom_call.1} parent=1 // pred_region
      %3077 = dma.done [#allocation6], 32
    $region61: #{tpu_custom_call.1} parent=1 // pred_fallthru
      _
    %3078 = vsyncpa [#allocation5], 1
    %3079 = vsyncpa [#allocation8], 1
    %3080 = vsyncpa [#allocation11], 1
    %3081 = vsyncpa [#allocation6], 1

</llo_original>
